<compile_context>
chip_gen: v6e
topology: v6e:2x2x1
jax: 0.10.0
libtpu: 0.0.40
codegen_flags: <defaults>
</compile_context>

<pallas_src>
import functools

import jax
import jax.numpy as jnp
from jax import lax
from jax.experimental import pallas as pl
from jax.experimental.pallas import tpu as pltpu

# Finite large-negative bias for masked keys. NOTE: if *every* key of a batch row is
# masked this yields a uniform attention row where PyTorch would produce NaN
# (intentional, documented divergence).  Must stay f32 (overflows to -inf in bf16).
NEG_INF = -1e30


def _fusion_kernel(*refs, nbatch, nhead, has_vpos, compute_dtype):
    """One query tile: multi-head cross-attention + gating multiply for all batches.

    Ref layout (inputs ..., output):
      vis [vpos]  k  v  mask  wqT bq  woT bo   out
      vis/vpos/out : (TQ, B*C)          k/v : (Lkp, B*C)   (pre-projected)
      mask         : (B, Lkp) additive f32 bias
      wqT/woT      : (C, C) pre-transposed (scale folded into wqT/bq)
      bq/bo        : (1, C) f32
    """
    it = iter(refs)
    vis_ref = next(it)
    vpos_ref = next(it) if has_vpos else None
    k_ref = next(it)
    v_ref = next(it)
    mask_ref = next(it)
    wq_ref, bq_ref = next(it), next(it)
    wo_ref, bo_ref = next(it), next(it)
    out_ref = next(it)

    f32 = jnp.float32
    cdt = compute_dtype
    exact = jnp.dtype(cdt) == jnp.dtype(f32)
    C = wq_ref.shape[-1]
    dh = C // nhead
    tq = vis_ref.shape[0]

    # Hoist weight/bias VMEM loads above the unrolled batch loop (no per-batch reloads).
    wq = wq_ref[...]
    bq = bq_ref[...]
    wo = wo_ref[...]
    bo = bo_ref[...]

    # ---- Q projection with batch-merged M dimension: one MXU issue, M = B*TQ. ----
    vis_parts, qin_parts = [], []
    for b in range(nbatch):                       # B is small & static -> unrolled
        lanes = slice(b * C, (b + 1) * C)         # 128-aligned lane slice for batch b
        vb = vis_ref[:, lanes]                    # (TQ, C) stream dtype
        vis_parts.append(vb)
        if has_vpos:
            qin_parts.append((vb + vpos_ref[:, lanes]).astype(cdt))
        else:
            qin_parts.append(vb.astype(cdt))
    q_in = jnp.concatenate(qin_parts, axis=0) if nbatch > 1 else qin_parts[0]
    # 1/sqrt(dh) already folded into wq / bq by the wrapper.
    q_all = jnp.dot(q_in, wq, preferred_element_type=f32) + bq          # (B*TQ, C) f32

    # ---- Per-batch attention (K/V were projected once, wrapper-side). ----
    for b in range(nbatch):
        lanes = slice(b * C, (b + 1) * C)
        qb = q_all[b * tq:(b + 1) * tq].astype(cdt)                      # (TQ, C)
        kb = k_ref[:, lanes]                                             # (Lkp, C)
        vb = v_ref[:, lanes]                                             # (Lkp, C)
        mask = mask_ref[b:b + 1, :]                                      # (1, Lkp) f32

        head_outs = []
        for h in range(nhead):
            hs = slice(h * dh, (h + 1) * dh)
            s = lax.dot_general(qb[:, hs], kb[:, hs],
                                (((1,), (1,)), ((), ())),                # Q @ K^T, no .T node
                                preferred_element_type=f32)              # (TQ, Lkp) f32
            s = s + mask                                                 # additive key mask (f32)
            s = s - jnp.max(s, axis=-1, keepdims=True)
            p = jnp.exp(s)
            denom = jnp.sum(p, axis=-1, keepdims=True)
            if exact:
                p = p / denom                                            # exact reference mode
            else:
                p = p * pl.reciprocal(denom, approx=True)                # EUP slot (~free)
            head_outs.append(jnp.dot(p.astype(cdt), vb[:, hs],
                                     preferred_element_type=f32))        # (TQ, dh)

        # Single full-depth (K = C) output projection instead of nhead K=dh matmuls.
        attn = jnp.concatenate(head_outs, axis=-1) if nhead > 1 else head_outs[0]
        o = jnp.dot(attn.astype(cdt), wo, preferred_element_type=f32) + bo   # (TQ, C)

        out_ref[:, lanes] = (vis_parts[b].astype(f32) * o).astype(out_ref.dtype)


def vision_language_fusion(visual_thwbc, text, params, *, nhead,
                           text_key_padding_mask=None, text_pos=None,
                           visual_pos=None, compute_dtype=jnp.bfloat16,
                           tq=None, min_grid=2, budget_bytes=28 << 20):
    t, h, w, B, C = visual_thwbc.shape
    Lq = t * h * w
    Lk = text.shape[0]
    assert C % nhead == 0
    dh = C // nhead

    Lkp = pl.cdiv(Lk, 128) * 128              # lane-dense key length
    pad_k = Lkp - Lk

    has_vpos = visual_pos is not None
    has_tpos = text_pos is not None

    cdt = compute_dtype
    exact = jnp.dtype(cdt) == jnp.dtype(jnp.float32)
    stream_dt = jnp.float32 if exact else cdt     # HBM stream dtype for big operands
    out_dt = visual_thwbc.dtype

    # -------- weight prep (once): pre-transpose, fold the softmax scale into Q. --------
    scale = 1.0 / (dh ** 0.5)
    wqT = (params["wq"].T * scale).astype(cdt)
    bq = (params["bq"] * scale).reshape(1, C).astype(jnp.float32)
    woT = params["wo"].T.astype(cdt)
    bo = params["bo"].reshape(1, C).astype(jnp.float32)

    # -------- K/V projections hoisted out of the query grid (computed once by XLA). ----
    k_in = (text + text_pos) if has_tpos else text
    k_proj = (jnp.einsum("lbc,cd->lbd", k_in.astype(cdt), params["wk"].T.astype(cdt),
                         preferred_element_type=jnp.float32)
              + params["bk"].astype(jnp.float32))                     # (Lk, B, C) f32
    v_proj = (jnp.einsum("lbc,cd->lbd", text.astype(cdt), params["wv"].T.astype(cdt),
                         preferred_element_type=jnp.float32)
              + params["bv"].astype(jnp.float32))                     # (Lk, B, C) f32
    k2d = jnp.pad(k_proj.astype(stream_dt), ((0, pad_k), (0, 0), (0, 0))).reshape(Lkp, B * C)
    v2d = jnp.pad(v_proj.astype(stream_dt), ((0, pad_k), (0, 0), (0, 0))).reshape(Lkp, B * C)

    # seq-first (L, B, C) -> (L, B*C): contiguous collapse, no HBM transpose.
    vis2d = visual_thwbc.reshape(Lq, B * C).astype(stream_dt)
    vpos2d = visual_pos.reshape(Lq, B * C).astype(stream_dt) if has_vpos else None

    if text_key_padding_mask is None:
        key_bias = jnp.zeros((B, Lk), jnp.float32)
    else:
        key_bias = jnp.where(text_key_padding_mask, NEG_INF, 0.0).astype(jnp.float32)
    key_bias = jnp.pad(key_bias, ((0, 0), (0, pad_k)), constant_values=NEG_INF)  # (B, Lkp)

    # -------- tile sizing: explicit VMEM accounting (blocks + f32 intermediates). ------
    st = jnp.dtype(stream_dt).itemsize
    ot = jnp.dtype(out_dt).itemsize
    wt = jnp.dtype(cdt).itemsize

    def vmem_estimate(tq_):
        n_q_streams = 1 + (1 if has_vpos else 0)
        vis_blocks = n_q_streams * 2 * tq_ * B * C * st          # double-buffered query streams
        out_blocks = 2 * tq_ * B * C * ot
        const_blocks = 2 * (2 * Lkp * B * C * st                 # K, V (double-buffered)
                            + B * Lkp * 4                        # mask
                            + 2 * C * C * wt                     # wq, wo
                            + 2 * 8 * 128 * 4)                   # bq, bo (padded)
        interm = 4 * (B * tq_ * C                                # q_all (f32)
                      + 2 * tq_ * Lkp                            # score / prob live
                      + 2 * tq_ * C                              # head outputs + attn
                      + tq_ * C)                                 # projected output
        return vis_blocks + out_blocks + const_blocks + interm + (1 << 20)

    if tq is None:
        tq = 512
    tq = min(tq, Lq)
    if tq < Lq:
        tq = max(8, (tq // 8) * 8)
    # Keep >= min_grid tiles so both of v7x's TensorCores get work (harmless on 1-TC chips).
    if min_grid > 1 and Lq >= 16 * min_grid:
        cap = max(8, (pl.cdiv(Lq, min_grid) // 8) * 8)
        tq = min(tq, cap)
    # Shrink until the real working set fits the budget.
    while tq > 8 and vmem_estimate(tq) > budget_bytes:
        tq = max(8, ((tq // 2) // 8) * 8)
    # Prefer a tile size dividing Lq (avoids exp() over garbage rows in the last tile).
    if tq < Lq and Lq % tq != 0 and Lq % 8 == 0:
        for cand in range(tq, 7, -8):
            if Lq % cand == 0:
                tq = cand
                break
    grid_q = pl.cdiv(Lq, tq)

    vmem_limit = int(min(max(vmem_estimate(tq) * 3 // 2, 32 << 20), 64 << 20))

    # -------- BlockSpecs --------
    vis_spec = pl.BlockSpec((tq, B * C), lambda i: (i, 0))
    kv_spec = pl.BlockSpec((Lkp, B * C), lambda i: (0, 0))
    mask_spec = pl.BlockSpec((B, Lkp), lambda i: (0, 0))
    mat_spec = pl.BlockSpec((C, C), lambda i: (0, 0))
    vec_spec = pl.BlockSpec((1, C), lambda i: (0, 0))

    inputs, in_specs = [vis2d], [vis_spec]
    if has_vpos:
        inputs.append(vpos2d)
        in_specs.append(vis_spec)
    inputs += [k2d, v2d, key_bias, wqT, bq, woT, bo]
    in_specs += [kv_spec, kv_spec, mask_spec, mat_spec, vec_spec, mat_spec, vec_spec]

    out2d = pl.pallas_call(
        functools.partial(_fusion_kernel, nbatch=B, nhead=nhead,
                          has_vpos=has_vpos, compute_dtype=cdt),
        out_shape=jax.ShapeDtypeStruct((Lq, B * C), out_dt),
        grid=(grid_q,),
        in_specs=in_specs,
        out_specs=vis_spec,
        compiler_params=pltpu.CompilerParams(
            dimension_semantics=("parallel",),
            vmem_limit_bytes=vmem_limit),
    )(*inputs)

    return out2d.reshape(Lq, B, C)


def init_params(key, d_model):
    """Deterministic synthetic weights matching nn.MultiheadAttention shapes."""
    k0, k1, k2 = jax.random.split(key, 3)
    bound = 1.0 / (d_model ** 0.5)
    in_proj_w = jax.random.uniform(k0, (3 * d_model, d_model), jnp.float32, -bound, bound)
    in_proj_b = jax.random.uniform(k1, (3 * d_model,), jnp.float32, -bound, bound)
    out_w = jax.random.uniform(k2, (d_model, d_model), jnp.float32, -bound, bound)
    out_b = jnp.zeros((d_model,), jnp.float32)  # PyTorch inits out_proj.bias to 0
    return {
        "wq": in_proj_w[:d_model], "wk": in_proj_w[d_model:2 * d_model],
        "wv": in_proj_w[2 * d_model:],
        "bq": in_proj_b[:d_model], "bk": in_proj_b[d_model:2 * d_model],
        "bv": in_proj_b[2 * d_model:],
        "wo": out_w, "bo": out_b,
    }


def _reference(visual_thwbc, text, params, nhead, mask, text_pos, visual_pos):
    """Pure-JAX f32 reference of the PyTorch forward (for verification)."""
    t, h, w, B, C = visual_thwbc.shape
    Lq = t * h * w
    Lk = text.shape[0]
    dh = C // nhead
    visual = visual_thwbc.reshape(Lq, B, C)
    q_in = visual + visual_pos
    k_in = text + text_pos
    q = jnp.einsum("lbc,dc->lbd", q_in, params["wq"]) + params["bq"]
    k = jnp.einsum("lbc,dc->lbd", k_in, params["wk"]) + params["bk"]
    v = jnp.einsum("lbc,dc->lbd", text, params["wv"]) + params["bv"]
    qh = q.reshape(Lq, B, nhead, dh)
    kh = k.reshape(Lk, B, nhead, dh)
    vh = v.reshape(Lk, B, nhead, dh)
    s = jnp.einsum("qbhd,kbhd->bhqk", qh, kh) / jnp.sqrt(dh)
    s = s + jnp.where(mask, NEG_INF, 0.0)[:, None, None, :]
    p = jax.nn.softmax(s, axis=-1)
    o = jnp.einsum("bhqk,kbhd->qbhd", p, vh).reshape(Lq, B, C)
    attn = jnp.einsum("qbc,dc->qbd", o, params["wo"]) + params["bo"]
    return visual * attn


if __name__ == "__main__":
    # Small shapes consistent with the module's forward.
    t, hh, ww, B, C = 2, 8, 8, 2, 128     # L_q = t*hh*ww = 128
    Lk, nhead = 10, 4                     # L_k padded to 128 inside the wrapper

    root = jax.random.PRNGKey(0)
    k_vis, k_txt, k_tpos, k_vpos, k_par = jax.random.split(root, 5)

    visual = jax.random.normal(k_vis, (t, hh, ww, B, C), jnp.float32)
    text = jax.random.normal(k_txt, (Lk, B, C), jnp.float32)
    text_pos = jax.random.normal(k_tpos, (Lk, B, C), jnp.float32)
    visual_pos = jax.random.normal(k_vpos, (t * hh * ww, B, C), jnp.float32)
    # key_padding_mask: True = padded. Pad the last three text tokens of batch 1.
    text_key_padding_mask = jnp.zeros((B, Lk), jnp.bool_).at[1, -3:].set(True)

    params = init_params(k_par, C)

    ref = _reference(visual, text, params, nhead,
                     text_key_padding_mask, text_pos, visual_pos)

    # 1) Default bf16-MXU path, tq=32 -> 4 query tiles in the grid.
    out_bf16 = vision_language_fusion(
        visual, text, params, nhead=nhead,
        text_key_padding_mask=text_key_padding_mask,
        text_pos=text_pos, visual_pos=visual_pos, tq=32)
    out_bf16 = jax.block_until_ready(out_bf16)
    assert out_bf16.shape == (t * hh * ww, B, C)
    assert jnp.allclose(out_bf16, ref, atol=5e-2, rtol=5e-2), "bf16 path mismatch vs reference"

    # 2) f32 reference-mode path (tight tolerance), default tile derivation (grid >= 2).
    out_f32 = vision_language_fusion(
        visual, text, params, nhead=nhead,
        text_key_padding_mask=text_key_padding_mask,
        text_pos=text_pos, visual_pos=visual_pos,
        compute_dtype=jnp.float32)
    out_f32 = jax.block_until_ready(out_f32)
    assert jnp.allclose(out_f32, ref, atol=1e-4, rtol=1e-4), "f32 path mismatch vs reference"

    # 3) Specialized path with no positional embeddings (no pos DMAs / adds).
    ref_nopos = _reference(visual, text, params, nhead, text_key_padding_mask,
                           jnp.zeros_like(text), jnp.zeros_like(visual_pos))
    out_nopos = vision_language_fusion(
        visual, text, params, nhead=nhead,
        text_key_padding_mask=text_key_padding_mask,
        compute_dtype=jnp.float32, tq=64)
    out_nopos = jax.block_until_ready(out_nopos)
    assert jnp.allclose(out_nopos, ref_nopos, atol=1e-4, rtol=1e-4), "no-pos path mismatch"

    print("KERNEL_OK")
</pallas_src>

<mosaic_0001>
module attributes {stable_mosaic.version = 11 : i64} {
  func.func @_fusion_kernel(%arg0: i32, %arg1: memref<32x256xbf16, #tpu.memory_space<vmem>>, %arg2: memref<32x256xbf16, #tpu.memory_space<vmem>>, %arg3: memref<128x256xbf16, #tpu.memory_space<vmem>>, %arg4: memref<128x256xbf16, #tpu.memory_space<vmem>>, %arg5: memref<2x128xf32, #tpu.memory_space<vmem>>, %arg6: memref<128x128xbf16, #tpu.memory_space<vmem>>, %arg7: memref<1x128xf32, #tpu.memory_space<vmem>>, %arg8: memref<128x128xbf16, #tpu.memory_space<vmem>>, %arg9: memref<1x128xf32, #tpu.memory_space<vmem>>, %arg10: memref<32x256xf32, #tpu.memory_space<vmem>>) attributes {dimension_semantics = [#tpu.dimension_semantics<parallel>], iteration_bounds = array<i64: 4>, scalar_prefetch = 0 : i64, scratch_operands = 0 : i64, tpu.core_type = #tpu.core_type<tc>, window_params = [{transform_indices = @transform_0, window_bounds = array<i64: 32, 256>}, {transform_indices = @transform_1, window_bounds = array<i64: 32, 256>}, {pipeline_mode = #tpu.pipeline_mode<synchronous>, transform_indices = @transform_2, window_bounds = array<i64: 128, 256>}, {pipeline_mode = #tpu.pipeline_mode<synchronous>, transform_indices = @transform_3, window_bounds = array<i64: 128, 256>}, {pipeline_mode = #tpu.pipeline_mode<synchronous>, transform_indices = @transform_4, window_bounds = array<i64: 2, 128>}, {pipeline_mode = #tpu.pipeline_mode<synchronous>, transform_indices = @transform_5, window_bounds = array<i64: 128, 128>}, {pipeline_mode = #tpu.pipeline_mode<synchronous>, transform_indices = @transform_6, window_bounds = array<i64: 1, 128>}, {pipeline_mode = #tpu.pipeline_mode<synchronous>, transform_indices = @transform_7, window_bounds = array<i64: 128, 128>}, {pipeline_mode = #tpu.pipeline_mode<synchronous>, transform_indices = @transform_8, window_bounds = array<i64: 1, 128>}, {transform_indices = @transform_9, window_bounds = array<i64: 32, 256>}]} {
    %c0 = arith.constant 0 : index
    %c0_0 = arith.constant 0 : index
    %0 = vector.load %arg6[%c0, %c0_0] : memref<128x128xbf16, #tpu.memory_space<vmem>>, vector<128x128xbf16>
    %c0_1 = arith.constant 0 : index
    %c0_2 = arith.constant 0 : index
    %1 = vector.load %arg7[%c0_1, %c0_2] : memref<1x128xf32, #tpu.memory_space<vmem>>, vector<1x128xf32>
    %c0_3 = arith.constant 0 : index
    %c0_4 = arith.constant 0 : index
    %2 = vector.load %arg8[%c0_3, %c0_4] : memref<128x128xbf16, #tpu.memory_space<vmem>>, vector<128x128xbf16>
    %c0_5 = arith.constant 0 : index
    %c0_6 = arith.constant 0 : index
    %3 = vector.load %arg9[%c0_5, %c0_6] : memref<1x128xf32, #tpu.memory_space<vmem>>, vector<1x128xf32>
    %c0_7 = arith.constant 0 : index
    %c0_8 = arith.constant 0 : index
    %4 = vector.load %arg1[%c0_7, %c0_8] : memref<32x256xbf16, #tpu.memory_space<vmem>>, vector<32x128xbf16>
    %c0_9 = arith.constant 0 : index
    %c0_10 = arith.constant 0 : index
    %5 = vector.load %arg2[%c0_9, %c0_10] : memref<32x256xbf16, #tpu.memory_space<vmem>>, vector<32x128xbf16>
    %6 = arith.addf %4, %5 : vector<32x128xbf16>
    %c0_11 = arith.constant 0 : index
    %c128 = arith.constant 128 : index
    %7 = vector.load %arg1[%c0_11, %c128] : memref<32x256xbf16, #tpu.memory_space<vmem>>, vector<32x128xbf16>
    %c0_12 = arith.constant 0 : index
    %c128_13 = arith.constant 128 : index
    %8 = vector.load %arg2[%c0_12, %c128_13] : memref<32x256xbf16, #tpu.memory_space<vmem>>, vector<32x128xbf16>
    %9 = arith.addf %7, %8 : vector<32x128xbf16>
    %10 = tpu.concatenate %6, %9 in 0 : vector<32x128xbf16>, vector<32x128xbf16> -> vector<64x128xbf16>
    %cst = arith.constant dense<0.000000e+00> : vector<64x128xf32>
    %11 = tpu.matmul %10, %0, %cst {dimension_numbers = #tpu.dot_dimension_numbers<[1], [0], [0], [1], [0, 0, 1, 1], [], []>} : vector<64x128xbf16>, vector<128x128xbf16>, vector<64x128xf32> -> vector<64x128xf32>
    %12 = vector.broadcast %1 : vector<1x128xf32> to vector<64x128xf32>
    %13 = arith.addf %11, %12 : vector<64x128xf32>
    %14 = vector.extract_strided_slice %13 {offsets = [0, 0], sizes = [32, 128], strides = [1, 1]} : vector<64x128xf32> to vector<32x128xf32>
    %15 = arith.truncf %14 : vector<32x128xf32> to vector<32x128xbf16>
    %c0_14 = arith.constant 0 : index
    %c0_15 = arith.constant 0 : index
    %16 = vector.load %arg3[%c0_14, %c0_15] : memref<128x256xbf16, #tpu.memory_space<vmem>>, vector<128x128xbf16>
    %c0_16 = arith.constant 0 : index
    %c0_17 = arith.constant 0 : index
    %17 = vector.load %arg4[%c0_16, %c0_17] : memref<128x256xbf16, #tpu.memory_space<vmem>>, vector<128x128xbf16>
    %c0_18 = arith.constant 0 : index
    %c0_19 = arith.constant 0 : index
    %18 = vector.load %arg5[%c0_18, %c0_19] : memref<2x128xf32, #tpu.memory_space<vmem>>, vector<1x128xf32>
    %19 = vector.extract_strided_slice %15 {offsets = [0, 0], sizes = [32, 32], strides = [1, 1]} : vector<32x128xbf16> to vector<32x32xbf16>
    %20 = vector.extract_strided_slice %16 {offsets = [0, 0], sizes = [128, 32], strides = [1, 1]} : vector<128x128xbf16> to vector<128x32xbf16>
    %cst_20 = arith.constant dense<0.000000e+00> : vector<32x128xf32>
    %21 = tpu.matmul %19, %20, %cst_20 {dimension_numbers = #tpu.dot_dimension_numbers<[1], [1], [0], [0], [0, 0, 1, 0], [], []>} : vector<32x32xbf16>, vector<128x32xbf16>, vector<32x128xf32> -> vector<32x128xf32>
    %22 = vector.broadcast %18 : vector<1x128xf32> to vector<32x128xf32>
    %23 = arith.addf %21, %22 : vector<32x128xf32>
    %cst_21 = arith.constant dense<0xFF800000> : vector<32xf32>
    %24 = vector.multi_reduction <maximumf>, %23, %cst_21 [1] : vector<32x128xf32> to vector<32xf32>
    %25 = vector.shape_cast %24 : vector<32xf32> to vector<32x1xf32>
    %26 = vector.broadcast %25 : vector<32x1xf32> to vector<32x128xf32>
    %27 = arith.subf %23, %26 : vector<32x128xf32>
    %28 = math.exp %27 : vector<32x128xf32>
    %cst_22 = arith.constant dense<0.000000e+00> : vector<32xf32>
    %29 = vector.multi_reduction <add>, %28, %cst_22 [1] : vector<32x128xf32> to vector<32xf32>
    %30 = vector.shape_cast %29 : vector<32xf32> to vector<32x1xf32>
    %31 = tpu.reciprocal %30 {approx = true} : vector<32x1xf32> -> vector<32x1xf32>
    %32 = vector.broadcast %31 : vector<32x1xf32> to vector<32x128xf32>
    %33 = arith.mulf %28, %32 : vector<32x128xf32>
    %34 = arith.truncf %33 : vector<32x128xf32> to vector<32x128xbf16>
    %35 = vector.extract_strided_slice %17 {offsets = [0, 0], sizes = [128, 32], strides = [1, 1]} : vector<128x128xbf16> to vector<128x32xbf16>
    %cst_23 = arith.constant dense<0.000000e+00> : vector<32x32xf32>
    %36 = tpu.matmul %34, %35, %cst_23 {dimension_numbers = #tpu.dot_dimension_numbers<[1], [0], [0], [1], [0, 0, 1, 1], [], []>} : vector<32x128xbf16>, vector<128x32xbf16>, vector<32x32xf32> -> vector<32x32xf32>
    %37 = vector.extract_strided_slice %15 {offsets = [0, 32], sizes = [32, 32], strides = [1, 1]} : vector<32x128xbf16> to vector<32x32xbf16>
    %38 = vector.extract_strided_slice %16 {offsets = [0, 32], sizes = [128, 32], strides = [1, 1]} : vector<128x128xbf16> to vector<128x32xbf16>
    %cst_24 = arith.constant dense<0.000000e+00> : vector<32x128xf32>
    %39 = tpu.matmul %37, %38, %cst_24 {dimension_numbers = #tpu.dot_dimension_numbers<[1], [1], [0], [0], [0, 0, 1, 0], [], []>} : vector<32x32xbf16>, vector<128x32xbf16>, vector<32x128xf32> -> vector<32x128xf32>
    %40 = vector.broadcast %18 : vector<1x128xf32> to vector<32x128xf32>
    %41 = arith.addf %39, %40 : vector<32x128xf32>
    %cst_25 = arith.constant dense<0xFF800000> : vector<32xf32>
    %42 = vector.multi_reduction <maximumf>, %41, %cst_25 [1] : vector<32x128xf32> to vector<32xf32>
    %43 = vector.shape_cast %42 : vector<32xf32> to vector<32x1xf32>
    %44 = vector.broadcast %43 : vector<32x1xf32> to vector<32x128xf32>
    %45 = arith.subf %41, %44 : vector<32x128xf32>
    %46 = math.exp %45 : vector<32x128xf32>
    %cst_26 = arith.constant dense<0.000000e+00> : vector<32xf32>
    %47 = vector.multi_reduction <add>, %46, %cst_26 [1] : vector<32x128xf32> to vector<32xf32>
    %48 = vector.shape_cast %47 : vector<32xf32> to vector<32x1xf32>
    %49 = tpu.reciprocal %48 {approx = true} : vector<32x1xf32> -> vector<32x1xf32>
    %50 = vector.broadcast %49 : vector<32x1xf32> to vector<32x128xf32>
    %51 = arith.mulf %46, %50 : vector<32x128xf32>
    %52 = arith.truncf %51 : vector<32x128xf32> to vector<32x128xbf16>
    %53 = vector.extract_strided_slice %17 {offsets = [0, 32], sizes = [128, 32], strides = [1, 1]} : vector<128x128xbf16> to vector<128x32xbf16>
    %cst_27 = arith.constant dense<0.000000e+00> : vector<32x32xf32>
    %54 = tpu.matmul %52, %53, %cst_27 {dimension_numbers = #tpu.dot_dimension_numbers<[1], [0], [0], [1], [0, 0, 1, 1], [], []>} : vector<32x128xbf16>, vector<128x32xbf16>, vector<32x32xf32> -> vector<32x32xf32>
    %55 = vector.extract_strided_slice %15 {offsets = [0, 64], sizes = [32, 32], strides = [1, 1]} : vector<32x128xbf16> to vector<32x32xbf16>
    %56 = vector.extract_strided_slice %16 {offsets = [0, 64], sizes = [128, 32], strides = [1, 1]} : vector<128x128xbf16> to vector<128x32xbf16>
    %cst_28 = arith.constant dense<0.000000e+00> : vector<32x128xf32>
    %57 = tpu.matmul %55, %56, %cst_28 {dimension_numbers = #tpu.dot_dimension_numbers<[1], [1], [0], [0], [0, 0, 1, 0], [], []>} : vector<32x32xbf16>, vector<128x32xbf16>, vector<32x128xf32> -> vector<32x128xf32>
    %58 = vector.broadcast %18 : vector<1x128xf32> to vector<32x128xf32>
    %59 = arith.addf %57, %58 : vector<32x128xf32>
    %cst_29 = arith.constant dense<0xFF800000> : vector<32xf32>
    %60 = vector.multi_reduction <maximumf>, %59, %cst_29 [1] : vector<32x128xf32> to vector<32xf32>
    %61 = vector.shape_cast %60 : vector<32xf32> to vector<32x1xf32>
    %62 = vector.broadcast %61 : vector<32x1xf32> to vector<32x128xf32>
    %63 = arith.subf %59, %62 : vector<32x128xf32>
    %64 = math.exp %63 : vector<32x128xf32>
    %cst_30 = arith.constant dense<0.000000e+00> : vector<32xf32>
    %65 = vector.multi_reduction <add>, %64, %cst_30 [1] : vector<32x128xf32> to vector<32xf32>
    %66 = vector.shape_cast %65 : vector<32xf32> to vector<32x1xf32>
    %67 = tpu.reciprocal %66 {approx = true} : vector<32x1xf32> -> vector<32x1xf32>
    %68 = vector.broadcast %67 : vector<32x1xf32> to vector<32x128xf32>
    %69 = arith.mulf %64, %68 : vector<32x128xf32>
    %70 = arith.truncf %69 : vector<32x128xf32> to vector<32x128xbf16>
    %71 = vector.extract_strided_slice %17 {offsets = [0, 64], sizes = [128, 32], strides = [1, 1]} : vector<128x128xbf16> to vector<128x32xbf16>
    %cst_31 = arith.constant dense<0.000000e+00> : vector<32x32xf32>
    %72 = tpu.matmul %70, %71, %cst_31 {dimension_numbers = #tpu.dot_dimension_numbers<[1], [0], [0], [1], [0, 0, 1, 1], [], []>} : vector<32x128xbf16>, vector<128x32xbf16>, vector<32x32xf32> -> vector<32x32xf32>
    %73 = vector.extract_strided_slice %15 {offsets = [0, 96], sizes = [32, 32], strides = [1, 1]} : vector<32x128xbf16> to vector<32x32xbf16>
    %74 = vector.extract_strided_slice %16 {offsets = [0, 96], sizes = [128, 32], strides = [1, 1]} : vector<128x128xbf16> to vector<128x32xbf16>
    %cst_32 = arith.constant dense<0.000000e+00> : vector<32x128xf32>
    %75 = tpu.matmul %73, %74, %cst_32 {dimension_numbers = #tpu.dot_dimension_numbers<[1], [1], [0], [0], [0, 0, 1, 0], [], []>} : vector<32x32xbf16>, vector<128x32xbf16>, vector<32x128xf32> -> vector<32x128xf32>
    %76 = vector.broadcast %18 : vector<1x128xf32> to vector<32x128xf32>
    %77 = arith.addf %75, %76 : vector<32x128xf32>
    %cst_33 = arith.constant dense<0xFF800000> : vector<32xf32>
    %78 = vector.multi_reduction <maximumf>, %77, %cst_33 [1] : vector<32x128xf32> to vector<32xf32>
    %79 = vector.shape_cast %78 : vector<32xf32> to vector<32x1xf32>
    %80 = vector.broadcast %79 : vector<32x1xf32> to vector<32x128xf32>
    %81 = arith.subf %77, %80 : vector<32x128xf32>
    %82 = math.exp %81 : vector<32x128xf32>
    %cst_34 = arith.constant dense<0.000000e+00> : vector<32xf32>
    %83 = vector.multi_reduction <add>, %82, %cst_34 [1] : vector<32x128xf32> to vector<32xf32>
    %84 = vector.shape_cast %83 : vector<32xf32> to vector<32x1xf32>
    %85 = tpu.reciprocal %84 {approx = true} : vector<32x1xf32> -> vector<32x1xf32>
    %86 = vector.broadcast %85 : vector<32x1xf32> to vector<32x128xf32>
    %87 = arith.mulf %82, %86 : vector<32x128xf32>
    %88 = arith.truncf %87 : vector<32x128xf32> to vector<32x128xbf16>
    %89 = vector.extract_strided_slice %17 {offsets = [0, 96], sizes = [128, 32], strides = [1, 1]} : vector<128x128xbf16> to vector<128x32xbf16>
    %cst_35 = arith.constant dense<0.000000e+00> : vector<32x32xf32>
    %90 = tpu.matmul %88, %89, %cst_35 {dimension_numbers = #tpu.dot_dimension_numbers<[1], [0], [0], [1], [0, 0, 1, 1], [], []>} : vector<32x128xbf16>, vector<128x32xbf16>, vector<32x32xf32> -> vector<32x32xf32>
    %91 = tpu.concatenate %36, %54, %72, %90 in 1 : vector<32x32xf32>, vector<32x32xf32>, vector<32x32xf32>, vector<32x32xf32> -> vector<32x128xf32>
    %92 = arith.truncf %91 : vector<32x128xf32> to vector<32x128xbf16>
    %cst_36 = arith.constant dense<0.000000e+00> : vector<32x128xf32>
    %93 = tpu.matmul %92, %2, %cst_36 {dimension_numbers = #tpu.dot_dimension_numbers<[1], [0], [0], [1], [0, 0, 1, 1], [], []>} : vector<32x128xbf16>, vector<128x128xbf16>, vector<32x128xf32> -> vector<32x128xf32>
    %94 = vector.broadcast %3 : vector<1x128xf32> to vector<32x128xf32>
    %95 = arith.addf %93, %94 : vector<32x128xf32>
    %96 = arith.extf %4 : vector<32x128xbf16> to vector<32x128xf32>
    %97 = arith.mulf %96, %95 : vector<32x128xf32>
    %c0_37 = arith.constant 0 : index
    %c0_38 = arith.constant 0 : index
    %98 = vector.load %arg10[%c0_37, %c0_38] : memref<32x256xf32, #tpu.memory_space<vmem>>, vector<32x128xf32>
    tpu.vector_store %arg10[%c0_37, %c0_38], %97 {strides = array<i32>} : memref<32x256xf32, #tpu.memory_space<vmem>>, vector<32x128xf32>,
    %99 = vector.extract_strided_slice %13 {offsets = [32, 0], sizes = [32, 128], strides = [1, 1]} : vector<64x128xf32> to vector<32x128xf32>
    %100 = arith.truncf %99 : vector<32x128xf32> to vector<32x128xbf16>
    %c0_39 = arith.constant 0 : index
    %c128_40 = arith.constant 128 : index
    %101 = vector.load %arg3[%c0_39, %c128_40] : memref<128x256xbf16, #tpu.memory_space<vmem>>, vector<128x128xbf16>
    %c0_41 = arith.constant 0 : index
    %c128_42 = arith.constant 128 : index
    %102 = vector.load %arg4[%c0_41, %c128_42] : memref<128x256xbf16, #tpu.memory_space<vmem>>, vector<128x128xbf16>
    %c1 = arith.constant 1 : index
    %c0_43 = arith.constant 0 : index
    %103 = vector.load %arg5[%c1, %c0_43] : memref<2x128xf32, #tpu.memory_space<vmem>>, vector<1x128xf32>
    %104 = vector.extract_strided_slice %100 {offsets = [0, 0], sizes = [32, 32], strides = [1, 1]} : vector<32x128xbf16> to vector<32x32xbf16>
    %105 = vector.extract_strided_slice %101 {offsets = [0, 0], sizes = [128, 32], strides = [1, 1]} : vector<128x128xbf16> to vector<128x32xbf16>
    %cst_44 = arith.constant dense<0.000000e+00> : vector<32x128xf32>
    %106 = tpu.matmul %104, %105, %cst_44 {dimension_numbers = #tpu.dot_dimension_numbers<[1], [1], [0], [0], [0, 0, 1, 0], [], []>} : vector<32x32xbf16>, vector<128x32xbf16>, vector<32x128xf32> -> vector<32x128xf32>
    %107 = vector.broadcast %103 : vector<1x128xf32> to vector<32x128xf32>
    %108 = arith.addf %106, %107 : vector<32x128xf32>
    %cst_45 = arith.constant dense<0xFF800000> : vector<32xf32>
    %109 = vector.multi_reduction <maximumf>, %108, %cst_45 [1] : vector<32x128xf32> to vector<32xf32>
    %110 = vector.shape_cast %109 : vector<32xf32> to vector<32x1xf32>
    %111 = vector.broadcast %110 : vector<32x1xf32> to vector<32x128xf32>
    %112 = arith.subf %108, %111 : vector<32x128xf32>
    %113 = math.exp %112 : vector<32x128xf32>
    %cst_46 = arith.constant dense<0.000000e+00> : vector<32xf32>
    %114 = vector.multi_reduction <add>, %113, %cst_46 [1] : vector<32x128xf32> to vector<32xf32>
    %115 = vector.shape_cast %114 : vector<32xf32> to vector<32x1xf32>
    %116 = tpu.reciprocal %115 {approx = true} : vector<32x1xf32> -> vector<32x1xf32>
    %117 = vector.broadcast %116 : vector<32x1xf32> to vector<32x128xf32>
    %118 = arith.mulf %113, %117 : vector<32x128xf32>
    %119 = arith.truncf %118 : vector<32x128xf32> to vector<32x128xbf16>
    %120 = vector.extract_strided_slice %102 {offsets = [0, 0], sizes = [128, 32], strides = [1, 1]} : vector<128x128xbf16> to vector<128x32xbf16>
    %cst_47 = arith.constant dense<0.000000e+00> : vector<32x32xf32>
    %121 = tpu.matmul %119, %120, %cst_47 {dimension_numbers = #tpu.dot_dimension_numbers<[1], [0], [0], [1], [0, 0, 1, 1], [], []>} : vector<32x128xbf16>, vector<128x32xbf16>, vector<32x32xf32> -> vector<32x32xf32>
    %122 = vector.extract_strided_slice %100 {offsets = [0, 32], sizes = [32, 32], strides = [1, 1]} : vector<32x128xbf16> to vector<32x32xbf16>
    %123 = vector.extract_strided_slice %101 {offsets = [0, 32], sizes = [128, 32], strides = [1, 1]} : vector<128x128xbf16> to vector<128x32xbf16>
    %cst_48 = arith.constant dense<0.000000e+00> : vector<32x128xf32>
    %124 = tpu.matmul %122, %123, %cst_48 {dimension_numbers = #tpu.dot_dimension_numbers<[1], [1], [0], [0], [0, 0, 1, 0], [], []>} : vector<32x32xbf16>, vector<128x32xbf16>, vector<32x128xf32> -> vector<32x128xf32>
    %125 = vector.broadcast %103 : vector<1x128xf32> to vector<32x128xf32>
    %126 = arith.addf %124, %125 : vector<32x128xf32>
    %cst_49 = arith.constant dense<0xFF800000> : vector<32xf32>
    %127 = vector.multi_reduction <maximumf>, %126, %cst_49 [1] : vector<32x128xf32> to vector<32xf32>
    %128 = vector.shape_cast %127 : vector<32xf32> to vector<32x1xf32>
    %129 = vector.broadcast %128 : vector<32x1xf32> to vector<32x128xf32>
    %130 = arith.subf %126, %129 : vector<32x128xf32>
    %131 = math.exp %130 : vector<32x128xf32>
    %cst_50 = arith.constant dense<0.000000e+00> : vector<32xf32>
    %132 = vector.multi_reduction <add>, %131, %cst_50 [1] : vector<32x128xf32> to vector<32xf32>
    %133 = vector.shape_cast %132 : vector<32xf32> to vector<32x1xf32>
    %134 = tpu.reciprocal %133 {approx = true} : vector<32x1xf32> -> vector<32x1xf32>
    %135 = vector.broadcast %134 : vector<32x1xf32> to vector<32x128xf32>
    %136 = arith.mulf %131, %135 : vector<32x128xf32>
    %137 = arith.truncf %136 : vector<32x128xf32> to vector<32x128xbf16>
    %138 = vector.extract_strided_slice %102 {offsets = [0, 32], sizes = [128, 32], strides = [1, 1]} : vector<128x128xbf16> to vector<128x32xbf16>
    %cst_51 = arith.constant dense<0.000000e+00> : vector<32x32xf32>
    %139 = tpu.matmul %137, %138, %cst_51 {dimension_numbers = #tpu.dot_dimension_numbers<[1], [0], [0], [1], [0, 0, 1, 1], [], []>} : vector<32x128xbf16>, vector<128x32xbf16>, vector<32x32xf32> -> vector<32x32xf32>
    %140 = vector.extract_strided_slice %100 {offsets = [0, 64], sizes = [32, 32], strides = [1, 1]} : vector<32x128xbf16> to vector<32x32xbf16>
    %141 = vector.extract_strided_slice %101 {offsets = [0, 64], sizes = [128, 32], strides = [1, 1]} : vector<128x128xbf16> to vector<128x32xbf16>
    %cst_52 = arith.constant dense<0.000000e+00> : vector<32x128xf32>
    %142 = tpu.matmul %140, %141, %cst_52 {dimension_numbers = #tpu.dot_dimension_numbers<[1], [1], [0], [0], [0, 0, 1, 0], [], []>} : vector<32x32xbf16>, vector<128x32xbf16>, vector<32x128xf32> -> vector<32x128xf32>
    %143 = vector.broadcast %103 : vector<1x128xf32> to vector<32x128xf32>
    %144 = arith.addf %142, %143 : vector<32x128xf32>
    %cst_53 = arith.constant dense<0xFF800000> : vector<32xf32>
    %145 = vector.multi_reduction <maximumf>, %144, %cst_53 [1] : vector<32x128xf32> to vector<32xf32>
    %146 = vector.shape_cast %145 : vector<32xf32> to vector<32x1xf32>
    %147 = vector.broadcast %146 : vector<32x1xf32> to vector<32x128xf32>
    %148 = arith.subf %144, %147 : vector<32x128xf32>
    %149 = math.exp %148 : vector<32x128xf32>
    %cst_54 = arith.constant dense<0.000000e+00> : vector<32xf32>
    %150 = vector.multi_reduction <add>, %149, %cst_54 [1] : vector<32x128xf32> to vector<32xf32>
    %151 = vector.shape_cast %150 : vector<32xf32> to vector<32x1xf32>
    %152 = tpu.reciprocal %151 {approx = true} : vector<32x1xf32> -> vector<32x1xf32>
    %153 = vector.broadcast %152 : vector<32x1xf32> to vector<32x128xf32>
    %154 = arith.mulf %149, %153 : vector<32x128xf32>
    %155 = arith.truncf %154 : vector<32x128xf32> to vector<32x128xbf16>
    %156 = vector.extract_strided_slice %102 {offsets = [0, 64], sizes = [128, 32], strides = [1, 1]} : vector<128x128xbf16> to vector<128x32xbf16>
    %cst_55 = arith.constant dense<0.000000e+00> : vector<32x32xf32>
    %157 = tpu.matmul %155, %156, %cst_55 {dimension_numbers = #tpu.dot_dimension_numbers<[1], [0], [0], [1], [0, 0, 1, 1], [], []>} : vector<32x128xbf16>, vector<128x32xbf16>, vector<32x32xf32> -> vector<32x32xf32>
    %158 = vector.extract_strided_slice %100 {offsets = [0, 96], sizes = [32, 32], strides = [1, 1]} : vector<32x128xbf16> to vector<32x32xbf16>
    %159 = vector.extract_strided_slice %101 {offsets = [0, 96], sizes = [128, 32], strides = [1, 1]} : vector<128x128xbf16> to vector<128x32xbf16>
    %cst_56 = arith.constant dense<0.000000e+00> : vector<32x128xf32>
    %160 = tpu.matmul %158, %159, %cst_56 {dimension_numbers = #tpu.dot_dimension_numbers<[1], [1], [0], [0], [0, 0, 1, 0], [], []>} : vector<32x32xbf16>, vector<128x32xbf16>, vector<32x128xf32> -> vector<32x128xf32>
    %161 = vector.broadcast %103 : vector<1x128xf32> to vector<32x128xf32>
    %162 = arith.addf %160, %161 : vector<32x128xf32>
    %cst_57 = arith.constant dense<0xFF800000> : vector<32xf32>
    %163 = vector.multi_reduction <maximumf>, %162, %cst_57 [1] : vector<32x128xf32> to vector<32xf32>
    %164 = vector.shape_cast %163 : vector<32xf32> to vector<32x1xf32>
    %165 = vector.broadcast %164 : vector<32x1xf32> to vector<32x128xf32>
    %166 = arith.subf %162, %165 : vector<32x128xf32>
    %167 = math.exp %166 : vector<32x128xf32>
    %cst_58 = arith.constant dense<0.000000e+00> : vector<32xf32>
    %168 = vector.multi_reduction <add>, %167, %cst_58 [1] : vector<32x128xf32> to vector<32xf32>
    %169 = vector.shape_cast %168 : vector<32xf32> to vector<32x1xf32>
    %170 = tpu.reciprocal %169 {approx = true} : vector<32x1xf32> -> vector<32x1xf32>
    %171 = vector.broadcast %170 : vector<32x1xf32> to vector<32x128xf32>
    %172 = arith.mulf %167, %171 : vector<32x128xf32>
    %173 = arith.truncf %172 : vector<32x128xf32> to vector<32x128xbf16>
    %174 = vector.extract_strided_slice %102 {offsets = [0, 96], sizes = [128, 32], strides = [1, 1]} : vector<128x128xbf16> to vector<128x32xbf16>
    %cst_59 = arith.constant dense<0.000000e+00> : vector<32x32xf32>
    %175 = tpu.matmul %173, %174, %cst_59 {dimension_numbers = #tpu.dot_dimension_numbers<[1], [0], [0], [1], [0, 0, 1, 1], [], []>} : vector<32x128xbf16>, vector<128x32xbf16>, vector<32x32xf32> -> vector<32x32xf32>
    %176 = tpu.concatenate %121, %139, %157, %175 in 1 : vector<32x32xf32>, vector<32x32xf32>, vector<32x32xf32>, vector<32x32xf32> -> vector<32x128xf32>
    %177 = arith.truncf %176 : vector<32x128xf32> to vector<32x128xbf16>
    %cst_60 = arith.constant dense<0.000000e+00> : vector<32x128xf32>
    %178 = tpu.matmul %177, %2, %cst_60 {dimension_numbers = #tpu.dot_dimension_numbers<[1], [0], [0], [1], [0, 0, 1, 1], [], []>} : vector<32x128xbf16>, vector<128x128xbf16>, vector<32x128xf32> -> vector<32x128xf32>
    %179 = vector.broadcast %3 : vector<1x128xf32> to vector<32x128xf32>
    %180 = arith.addf %178, %179 : vector<32x128xf32>
    %181 = arith.extf %7 : vector<32x128xbf16> to vector<32x128xf32>
    %182 = arith.mulf %181, %180 : vector<32x128xf32>
    %c0_61 = arith.constant 0 : index
    %c128_62 = arith.constant 128 : index
    %183 = vector.load %arg10[%c0_61, %c128_62] : memref<32x256xf32, #tpu.memory_space<vmem>>, vector<32x128xf32>
    tpu.vector_store %arg10[%c0_61, %c128_62], %182 {strides = array<i32>} : memref<32x256xf32, #tpu.memory_space<vmem>>, vector<32x128xf32>,
    return
  }
  func.func @transform_0(%arg0: i32) -> (i32, i32) {
    %c0_i32 = arith.constant 0 : i32
    %c0_i32_0 = arith.constant 0 : i32
    return %arg0, %c0_i32 : i32, i32
  }
  func.func @transform_1(%arg0: i32) -> (i32, i32) {
    %c0_i32 = arith.constant 0 : i32
    %c0_i32_0 = arith.constant 0 : i32
    return %arg0, %c0_i32 : i32, i32
  }
  func.func @transform_2(%arg0: i32) -> (i32, i32) {
    %c0_i32 = arith.constant 0 : i32
    %c0_i32_0 = arith.constant 0 : i32
    %c0_i32_1 = arith.constant 0 : i32
    return %c0_i32, %c0_i32_0 : i32, i32
  }
  func.func @transform_3(%arg0: i32) -> (i32, i32) {
    %c0_i32 = arith.constant 0 : i32
    %c0_i32_0 = arith.constant 0 : i32
    %c0_i32_1 = arith.constant 0 : i32
    return %c0_i32, %c0_i32_0 : i32, i32
  }
  func.func @transform_4(%arg0: i32) -> (i32, i32) {
    %c0_i32 = arith.constant 0 : i32
    %c0_i32_0 = arith.constant 0 : i32
    %c0_i32_1 = arith.constant 0 : i32
    return %c0_i32, %c0_i32_0 : i32, i32
  }
  func.func @transform_5(%arg0: i32) -> (i32, i32) {
    %c0_i32 = arith.constant 0 : i32
    %c0_i32_0 = arith.constant 0 : i32
    %c0_i32_1 = arith.constant 0 : i32
    return %c0_i32, %c0_i32_0 : i32, i32
  }
  func.func @transform_6(%arg0: i32) -> (i32, i32) {
    %c0_i32 = arith.constant 0 : i32
    %c0_i32_0 = arith.constant 0 : i32
    %c0_i32_1 = arith.constant 0 : i32
    return %c0_i32, %c0_i32_0 : i32, i32
  }
  func.func @transform_7(%arg0: i32) -> (i32, i32) {
    %c0_i32 = arith.constant 0 : i32
    %c0_i32_0 = arith.constant 0 : i32
    %c0_i32_1 = arith.constant 0 : i32
    return %c0_i32, %c0_i32_0 : i32, i32
  }
  func.func @transform_8(%arg0: i32) -> (i32, i32) {
    %c0_i32 = arith.constant 0 : i32
    %c0_i32_0 = arith.constant 0 : i32
    %c0_i32_1 = arith.constant 0 : i32
    return %c0_i32, %c0_i32_0 : i32, i32
  }
  func.func @transform_9(%arg0: i32) -> (i32, i32) {
    %c0_i32 = arith.constant 0 : i32
    %c0_i32_0 = arith.constant 0 : i32
    return %arg0, %c0_i32 : i32, i32
  }
}

</mosaic_0001>

<llo_original>
// kernel: tpu_custom_call.1
$region0: #{tpu_custom_call.1}
  #allocation0 [shape = 'u32[]', space=smem, size = 0x4, offset = 0x4, fixed_abs, tag = 'smem constant byte address 0x4 - core index']
  #allocation1 [shape = 'u32[144,128]{1,0:T(1,128)}', space=vmem, size = 0x12000, scoped, tag = 'internal scratch']
  %s0 = inlined_call_operand.hbm [shape: bf16[128,256], index: 0, kind: input, shape index: {}]
  %s1 = inlined_call_operand.hbm [shape: bf16[128,256], index: 1, kind: input, shape index: {}]
  %s2 = inlined_call_operand.hbm [shape: bf16[128,256], index: 2, kind: input, shape index: {}]
  %s3 = inlined_call_operand.hbm [shape: bf16[128,256], index: 3, kind: input, shape index: {}]
  %s4 = inlined_call_operand.vmem [shape: f32[2,128], index: 4, kind: input, shape index: {}]
  %s5 = inlined_call_operand.hbm [shape: bf16[128,128], index: 5, kind: input, shape index: {}]
  %s6 = inlined_call_operand.vmem [shape: f32[1,128], index: 6, kind: input, shape index: {}]
  %s7 = inlined_call_operand.hbm [shape: bf16[128,128], index: 7, kind: input, shape index: {}]
  %s8 = inlined_call_operand.vmem [shape: f32[1,128], index: 8, kind: input, shape index: {}]
  %s9 = inlined_call_operand.hbm [shape: f32[128,256], index: 9, kind: output, shape index: {}]
  %s10 = sld [smem:[#allocation0]]
  $region93: #{tpu_custom_call.1} parent=0
    _
  %s12 = ssub.s32 1, %s10
  %s13 = scalar_select 0, %s12, %s10
  $region1: #{tpu_custom_call.1} parent=0
    #allocation2 [shape = 'u8[32768]{0}', space=vmem, size = 0x8000, scoped, tag = 'input window, operand 0']
    #allocation3 [shape = 's32[2]{0}', space=sflag, size = 0x8, scoped, tag = 'scoped memory for tpu_custom_call.1']
    #allocation4 [shape = 's32[2]{0}', space=sflag, size = 0x8, scoped, tag = 'scoped memory for tpu_custom_call.1']
    #allocation5 [shape = 'u8[32768]{0}', space=vmem, size = 0x8000, scoped, tag = 'input window, operand 1']
    #allocation6 [shape = 's32[2]{0}', space=sflag, size = 0x8, scoped, tag = 'scoped memory for tpu_custom_call.1']
    #allocation7 [shape = 'u8[65536]{0}', space=vmem, size = 0x10000, scoped, tag = 'input window, operand 2, single buffered']
    #allocation8 [shape = 'u8[65536]{0}', space=vmem, size = 0x10000, scoped, tag = 'input window, operand 3, single buffered']
    #allocation9 [shape = 's32[1]{0}', space=sflag, size = 0x4, scoped, tag = 'scoped memory for tpu_custom_call.1']
    #allocation10 [shape = 'u8[32768]{0}', space=vmem, size = 0x8000, scoped, tag = 'input window, operand 5, single buffered']
    #allocation11 [shape = 'u8[32768]{0}', space=vmem, size = 0x8000, scoped, tag = 'input window, operand 7, single buffered']
    #allocation12 [shape = 's32[1]{0}', space=sflag, size = 0x4, scoped, tag = 'scoped memory for tpu_custom_call.1']
    #allocation13 [shape = 'u8[65536]{0}', space=vmem, size = 0x10000, scoped, tag = 'output window, operand 0']
    %14 = vsyncpa [#allocation3], 0
    %s15 = scalar_lea.sflag [#allocation3], 1
    %16 = vsyncpa %s15, 0
    %17 = vsyncpa [#allocation6], 0
    %s18 = scalar_lea.sflag [#allocation6], 1
    %19 = vsyncpa %s18, 0
    %20 = vsyncpa [#allocation9], 0
    %21 = vsyncpa [#allocation12], 0
    %22 = vsyncpa [#allocation4], 0
    %s23 = scalar_lea.sflag [#allocation4], 1
    %24 = vsyncpa %s23, 0
    loop: start=0, step=1, limit=6
    $region2: #{tpu_custom_call.1} parent=1 // loop_pre_header
      _
    $region3: #{tpu_custom_call.1} parent=1 // loop_header
      %s26 = sphi 0, %s30
      %p27 = scmp.ge.s32.totalorder %s26, 6
      %s36 = sphi 0, %s38
      %s39 = sphi 0, %s36
      %s40 = sphi 0, %s39
      %s56 = sphi 0, %s40
      %s62 = sphi 0, %s64
      %s65 = sphi 0, %s62
      %s66 = sphi 0, %s65
      %s82 = sphi 0, %s66
      %s86 = sphi 0, %s86
      %s88 = sphi 0, %s86
      %s89 = sphi 0, %s88
      %s103 = sphi 0, %s89
      %s107 = sphi 0, %s107
      %s109 = sphi 0, %s107
      %s110 = sphi 0, %s109
      %s124 = sphi 0, %s110
      %s128 = sphi 0, %s128
      %s130 = sphi 0, %s128
      %s131 = sphi 0, %s130
      %s145 = sphi 0, %s131
      %s149 = sphi 0, %s149
      %s151 = sphi 0, %s149
      %s152 = sphi 0, %s151
      %s166 = sphi 0, %s152
      %s170 = sphi 0, %s170
      %s172 = sphi 0, %s170
      %s173 = sphi 0, %s172
      %s187 = sphi 0, %s173
      %s191 = sphi 0, %s191
      %s193 = sphi 0, %s191
      %s194 = sphi 0, %s193
      %s208 = sphi 0, %s194
      %s212 = sphi 0, %s212
      %s214 = sphi 0, %s212
      %s215 = sphi 0, %s214
      %s229 = sphi 0, %s215
      %s235 = sphi 0, %s237
      %s238 = sphi 0, %s235
      %s239 = sphi 0, %s238
      %s255 = sphi 0, %s239
    $region4: #{tpu_custom_call.1} parent=1 // loop_header_branch
      %29 = sbr.rel (%p27) target = $region8
    $region5: #{tpu_custom_call.1} parent=1 // loop_body
      %s31 = ssub.s32 %s26, 1
      %s32 = ssub.s32 %s26, 2
      %s33 = sadd.s32 %s26, 1
      %s34 = ssub.s32 %s26, %s33
      %p35 = scmp.eq.s32.totalorder %s34, 0
      %s37 = sadd.s32 %s36, 1
      %s38 = scalar_select %p35, %s36, %s37
      %p41 = pneg %p35
      %p42 = scmp.eq.s32.totalorder %s26, 3
      %p43 = por %p41, %p42
      %p44 = scmp.ne.s32.totalorder %s36, %s39
      %p45 = scmp.eq.s32.totalorder %s26, 0
      %p46 = por %p44, %p45
      %p47 = scmp.ne.s32.totalorder %s36, %s39
      %p48 = scmp.eq.s32.totalorder %s31, 3
      %p49 = por %p47, %p48
      %p50 = scmp.ne.s32.totalorder %s39, %s40
      %p51 = scmp.eq.s32.totalorder %s31, 0
      %p52 = por %p50, %p51
      %p53 = scmp.ne.s32.totalorder %s39, %s40
      %p54 = scmp.eq.s32.totalorder %s32, 3
      %p55 = por %p53, %p54
      %p57 = scmp.ne.s32.totalorder %s40, %s56
      %p58 = scmp.eq.s32.totalorder %s32, 0
      %p59 = por %p57, %p58
      %s60 = ssub.s32 %s26, %s33
      %p61 = scmp.eq.s32.totalorder %s60, 0
      %s63 = sadd.s32 %s62, 1
      %s64 = scalar_select %p61, %s62, %s63
      %p67 = pneg %p61
      %p68 = scmp.eq.s32.totalorder %s26, 3
      %p69 = por %p67, %p68
      %p70 = scmp.ne.s32.totalorder %s62, %s65
      %p71 = scmp.eq.s32.totalorder %s26, 0
      %p72 = por %p70, %p71
      %p73 = scmp.ne.s32.totalorder %s62, %s65
      %p74 = scmp.eq.s32.totalorder %s31, 3
      %p75 = por %p73, %p74
      %p76 = scmp.ne.s32.totalorder %s65, %s66
      %p77 = scmp.eq.s32.totalorder %s31, 0
      %p78 = por %p76, %p77
      %p79 = scmp.ne.s32.totalorder %s65, %s66
      %p80 = scmp.eq.s32.totalorder %s32, 3
      %p81 = por %p79, %p80
      %p83 = scmp.ne.s32.totalorder %s66, %s82
      %p84 = scmp.eq.s32.totalorder %s32, 0
      %p85 = por %p83, %p84
      %s87 = sadd.s32 %s86, 1
      %p90 = scmp.eq.s32.totalorder %s26, 3
      %p91 = scmp.ne.s32.totalorder %s86, %s88
      %p92 = scmp.eq.s32.totalorder %s26, 0
      %p93 = por %p91, %p92
      %p94 = scmp.ne.s32.totalorder %s86, %s88
      %p95 = scmp.eq.s32.totalorder %s31, 3
      %p96 = por %p94, %p95
      %p97 = scmp.ne.s32.totalorder %s88, %s89
      %p98 = scmp.eq.s32.totalorder %s31, 0
      %p99 = por %p97, %p98
      %p100 = scmp.ne.s32.totalorder %s88, %s89
      %p101 = scmp.eq.s32.totalorder %s32, 3
      %p102 = por %p100, %p101
      %p104 = scmp.ne.s32.totalorder %s89, %s103
      %p105 = scmp.eq.s32.totalorder %s32, 0
      %p106 = por %p104, %p105
      %s108 = sadd.s32 %s107, 1
      %p111 = scmp.eq.s32.totalorder %s26, 3
      %p112 = scmp.ne.s32.totalorder %s107, %s109
      %p113 = scmp.eq.s32.totalorder %s26, 0
      %p114 = por %p112, %p113
      %p115 = scmp.ne.s32.totalorder %s107, %s109
      %p116 = scmp.eq.s32.totalorder %s31, 3
      %p117 = por %p115, %p116
      %p118 = scmp.ne.s32.totalorder %s109, %s110
      %p119 = scmp.eq.s32.totalorder %s31, 0
      %p120 = por %p118, %p119
      %p121 = scmp.ne.s32.totalorder %s109, %s110
      %p122 = scmp.eq.s32.totalorder %s32, 3
      %p123 = por %p121, %p122
      %p125 = scmp.ne.s32.totalorder %s110, %s124
      %p126 = scmp.eq.s32.totalorder %s32, 0
      %p127 = por %p125, %p126
      %s129 = sadd.s32 %s128, 1
      %p132 = scmp.eq.s32.totalorder %s26, 3
      %p133 = scmp.ne.s32.totalorder %s128, %s130
      %p134 = scmp.eq.s32.totalorder %s26, 0
      %p135 = por %p133, %p134
      %p136 = scmp.ne.s32.totalorder %s128, %s130
      %p137 = scmp.eq.s32.totalorder %s31, 3
      %p138 = por %p136, %p137
      %p139 = scmp.ne.s32.totalorder %s130, %s131
      %p140 = scmp.eq.s32.totalorder %s31, 0
      %p141 = por %p139, %p140
      %p142 = scmp.ne.s32.totalorder %s130, %s131
      %p143 = scmp.eq.s32.totalorder %s32, 3
      %p144 = por %p142, %p143
      %p146 = scmp.ne.s32.totalorder %s131, %s145
      %p147 = scmp.eq.s32.totalorder %s32, 0
      %p148 = por %p146, %p147
      %s150 = sadd.s32 %s149, 1
      %p153 = scmp.eq.s32.totalorder %s26, 3
      %p154 = scmp.ne.s32.totalorder %s149, %s151
      %p155 = scmp.eq.s32.totalorder %s26, 0
      %p156 = por %p154, %p155
      %p157 = scmp.ne.s32.totalorder %s149, %s151
      %p158 = scmp.eq.s32.totalorder %s31, 3
      %p159 = por %p157, %p158
      %p160 = scmp.ne.s32.totalorder %s151, %s152
      %p161 = scmp.eq.s32.totalorder %s31, 0
      %p162 = por %p160, %p161
      %p163 = scmp.ne.s32.totalorder %s151, %s152
      %p164 = scmp.eq.s32.totalorder %s32, 3
      %p165 = por %p163, %p164
      %p167 = scmp.ne.s32.totalorder %s152, %s166
      %p168 = scmp.eq.s32.totalorder %s32, 0
      %p169 = por %p167, %p168
      %s171 = sadd.s32 %s170, 1
      %p174 = scmp.eq.s32.totalorder %s26, 3
      %p175 = scmp.ne.s32.totalorder %s170, %s172
      %p176 = scmp.eq.s32.totalorder %s26, 0
      %p177 = por %p175, %p176
      %p178 = scmp.ne.s32.totalorder %s170, %s172
      %p179 = scmp.eq.s32.totalorder %s31, 3
      %p180 = por %p178, %p179
      %p181 = scmp.ne.s32.totalorder %s172, %s173
      %p182 = scmp.eq.s32.totalorder %s31, 0
      %p183 = por %p181, %p182
      %p184 = scmp.ne.s32.totalorder %s172, %s173
      %p185 = scmp.eq.s32.totalorder %s32, 3
      %p186 = por %p184, %p185
      %p188 = scmp.ne.s32.totalorder %s173, %s187
      %p189 = scmp.eq.s32.totalorder %s32, 0
      %p190 = por %p188, %p189
      %s192 = sadd.s32 %s191, 1
      %p195 = scmp.eq.s32.totalorder %s26, 3
      %p196 = scmp.ne.s32.totalorder %s191, %s193
      %p197 = scmp.eq.s32.totalorder %s26, 0
      %p198 = por %p196, %p197
      %p199 = scmp.ne.s32.totalorder %s191, %s193
      %p200 = scmp.eq.s32.totalorder %s31, 3
      %p201 = por %p199, %p200
      %p202 = scmp.ne.s32.totalorder %s193, %s194
      %p203 = scmp.eq.s32.totalorder %s31, 0
      %p204 = por %p202, %p203
      %p205 = scmp.ne.s32.totalorder %s193, %s194
      %p206 = scmp.eq.s32.totalorder %s32, 3
      %p207 = por %p205, %p206
      %p209 = scmp.ne.s32.totalorder %s194, %s208
      %p210 = scmp.eq.s32.totalorder %s32, 0
      %p211 = por %p209, %p210
      %s213 = sadd.s32 %s212, 1
      %p216 = scmp.eq.s32.totalorder %s26, 3
      %p217 = scmp.ne.s32.totalorder %s212, %s214
      %p218 = scmp.eq.s32.totalorder %s26, 0
      %p219 = por %p217, %p218
      %p220 = scmp.ne.s32.totalorder %s212, %s214
      %p221 = scmp.eq.s32.totalorder %s31, 3
      %p222 = por %p220, %p221
      %p223 = scmp.ne.s32.totalorder %s214, %s215
      %p224 = scmp.eq.s32.totalorder %s31, 0
      %p225 = por %p223, %p224
      %p226 = scmp.ne.s32.totalorder %s214, %s215
      %p227 = scmp.eq.s32.totalorder %s32, 3
      %p228 = por %p226, %p227
      %p230 = scmp.ne.s32.totalorder %s215, %s229
      %p231 = scmp.eq.s32.totalorder %s32, 0
      %p232 = por %p230, %p231
      %s233 = ssub.s32 %s26, %s33
      %p234 = scmp.eq.s32.totalorder %s233, 0
      %s236 = sadd.s32 %s235, 1
      %s237 = scalar_select %p234, %s235, %s236
      %p240 = pneg %p234
      %p241 = scmp.eq.s32.totalorder %s26, 3
      %p242 = por %p240, %p241
      %p243 = scmp.ne.s32.totalorder %s235, %s238
      %p244 = scmp.eq.s32.totalorder %s26, 0
      %p245 = por %p243, %p244
      %p246 = scmp.ne.s32.totalorder %s235, %s238
      %p247 = scmp.eq.s32.totalorder %s31, 3
      %p248 = por %p246, %p247
      %p249 = scmp.ne.s32.totalorder %s238, %s239
      %p250 = scmp.eq.s32.totalorder %s31, 0
      %p251 = por %p249, %p250
      %p252 = scmp.ne.s32.totalorder %s238, %s239
      %p253 = scmp.eq.s32.totalorder %s32, 3
      %p254 = por %p252, %p253
      %p256 = scmp.ne.s32.totalorder %s239, %s255
      %p257 = scmp.eq.s32.totalorder %s32, 0
      %p258 = por %p256, %p257
      %p259 = scmp.le.s32.totalorder 1, %s26
      %p260 = scmp.lt.s32.totalorder %s26, 5
      %p261 = pnand %p259, %p260
      %p262 = pneg %p261
      // Predicated region
      $region9: #{tpu_custom_call.1} parent=5 // pred_check
        _
      $region10: #{tpu_custom_call.1} parent=5 // pred_check_branch
        %264 = sbr.rel (%p261) target = $region12
      $region11: #{tpu_custom_call.1} parent=5 // pred_region
        %s265 = ssub.s32 %s26, 1
        // Predicated region
        $region13: #{tpu_custom_call.1} parent=11 // pred_check
          %p266 = pneg %p99
        $region14: #{tpu_custom_call.1} parent=11 // pred_check_branch
          %268 = sbr.rel (%p266) target = $region16
        $region15: #{tpu_custom_call.1} parent=11 // pred_region
          %s270 = ssub.s32 2048, 2048
          %271 = vsyncadd [#allocation6], %s270
          %s272 = sshll.u32 [#allocation7], 4
          %s273 = int_to_ptr.vmem [resolvable:$true] %s272
          %278 = dma.hbm_to_vmem [thread:$0]  %s2, 2048, %s273, [#allocation6], 128, 128, 8
        $region16: #{tpu_custom_call.1} parent=11 // pred_fallthru
          _
        // Predicated region
        $region17: #{tpu_custom_call.1} parent=11 // pred_check
          %p279 = pneg %p120
        $region18: #{tpu_custom_call.1} parent=11 // pred_check_branch
          %281 = sbr.rel (%p279) target = $region20
        $region19: #{tpu_custom_call.1} parent=11 // pred_region
          %s283 = ssub.s32 2048, 2048
          %284 = vsyncadd [#allocation9], %s283
          %s285 = sshll.u32 [#allocation8], 4
          %s286 = int_to_ptr.vmem [resolvable:$true] %s285
          %291 = dma.hbm_to_vmem [thread:$0]  %s3, 2048, %s286, [#allocation9], 128, 128, 8
        $region20: #{tpu_custom_call.1} parent=11 // pred_fallthru
          _
        // Predicated region
        $region21: #{tpu_custom_call.1} parent=11 // pred_check
          %p292 = pneg %p141
        $region22: #{tpu_custom_call.1} parent=11 // pred_check_branch
          %294 = sbr.rel (%p292) target = $region24
        $region23: #{tpu_custom_call.1} parent=11 // pred_region
          _
        $region24: #{tpu_custom_call.1} parent=11 // pred_fallthru
          _
        // Predicated region
        $region25: #{tpu_custom_call.1} parent=11 // pred_check
          %p295 = pneg %p162
        $region26: #{tpu_custom_call.1} parent=11 // pred_check_branch
          %297 = sbr.rel (%p295) target = $region28
        $region27: #{tpu_custom_call.1} parent=11 // pred_region
          %s299 = ssub.s32 1024, 1024
          %300 = vsyncadd [#allocation9], %s299
          %s301 = sshll.u32 [#allocation10], 4
          %s302 = int_to_ptr.vmem [resolvable:$true] %s301
          %307 = dma.hbm_to_vmem [thread:$0]  %s5, 1024, %s302, [#allocation9], 64, 64, 4
        $region28: #{tpu_custom_call.1} parent=11 // pred_fallthru
          _
        // Predicated region
        $region29: #{tpu_custom_call.1} parent=11 // pred_check
          %p308 = pneg %p183
        $region30: #{tpu_custom_call.1} parent=11 // pred_check_branch
          %310 = sbr.rel (%p308) target = $region32
        $region31: #{tpu_custom_call.1} parent=11 // pred_region
          _
        $region32: #{tpu_custom_call.1} parent=11 // pred_fallthru
          _
        // Predicated region
        $region33: #{tpu_custom_call.1} parent=11 // pred_check
          %p311 = pneg %p204
        $region34: #{tpu_custom_call.1} parent=11 // pred_check_branch
          %313 = sbr.rel (%p311) target = $region36
        $region35: #{tpu_custom_call.1} parent=11 // pred_region
          %s315 = ssub.s32 1024, 1024
          %316 = vsyncadd [#allocation12], %s315
          %s317 = sshll.u32 [#allocation11], 4
          %s318 = int_to_ptr.vmem [resolvable:$true] %s317
          %323 = dma.hbm_to_vmem [thread:$0]  %s7, 1024, %s318, [#allocation12], 64, 64, 4
        $region36: #{tpu_custom_call.1} parent=11 // pred_fallthru
          _
        // Predicated region
        $region37: #{tpu_custom_call.1} parent=11 // pred_check
          %p324 = pneg %p225
        $region38: #{tpu_custom_call.1} parent=11 // pred_check_branch
          %326 = sbr.rel (%p324) target = $region40
        $region39: #{tpu_custom_call.1} parent=11 // pred_region
          _
        $region40: #{tpu_custom_call.1} parent=11 // pred_fallthru
          _
      $region12: #{tpu_custom_call.1} parent=5 // pred_fallthru
        _
      %p327 = scmp.lt.s32.totalorder %s26, 4
      // Predicated region
      $region41: #{tpu_custom_call.1} parent=5 // pred_check
        %p328 = pneg %p327
      $region42: #{tpu_custom_call.1} parent=5 // pred_check_branch
        %330 = sbr.rel (%p328) target = $region44
      $region43: #{tpu_custom_call.1} parent=5 // pred_region
        // Predicated region
        $region45: #{tpu_custom_call.1} parent=43 // pred_check
          %p331 = pneg %p46
        $region46: #{tpu_custom_call.1} parent=43 // pred_check_branch
          %333 = sbr.rel (%p331) target = $region48
        $region47: #{tpu_custom_call.1} parent=43 // pred_region
          %s334 = sand.u32 %s36, 1
          %s335 = scalar_lea.sflag [#allocation3], %s334
          %s336 = sand.u32 %s36, 1
          %s337 = smul.addr %s336, 32
          %s338 = scalar_lea.vmem [#allocation2], %s337
          %s339 = smul.u32 4, %s26
          %s341 = ssub.s32 512, 512
          %342 = vsyncadd %s335, %s341
          %s343 = smul.addr %s339, 2
          %s344 = smul.addr %s343, 64
          %s345 = scalar_lea.hbm %s0, %s344
          %s346 = sshll.u32 %s338, 4
          %s347 = int_to_ptr.vmem [resolvable:$true] %s346
          %352 = dma.hbm_to_vmem [thread:$0]  %s345, 512, %s347, %s335, 128, 128, 8
        $region48: #{tpu_custom_call.1} parent=43 // pred_fallthru
          _
        // Predicated region
        $region49: #{tpu_custom_call.1} parent=43 // pred_check
          %p353 = pneg %p72
        $region50: #{tpu_custom_call.1} parent=43 // pred_check_branch
          %355 = sbr.rel (%p353) target = $region52
        $region51: #{tpu_custom_call.1} parent=43 // pred_region
          %s356 = sand.u32 %s26, 1
          %s357 = scalar_lea.sflag [#allocation6], %s356
          %s358 = sand.u32 %s62, 1
          %s359 = smul.addr %s358, 32
          %s360 = scalar_lea.vmem [#allocation5], %s359
          %s361 = smul.u32 4, %s26
          %s363 = ssub.s32 512, 512
          %364 = vsyncadd %s357, %s363
          %s365 = smul.addr %s361, 2
          %s366 = smul.addr %s365, 64
          %s367 = scalar_lea.hbm %s1, %s366
          %s368 = sshll.u32 %s360, 4
          %s369 = int_to_ptr.vmem [resolvable:$true] %s368
          %374 = dma.hbm_to_vmem [thread:$0]  %s367, 512, %s369, %s357, 128, 128, 8
        $region52: #{tpu_custom_call.1} parent=43 // pred_fallthru
          _
      $region44: #{tpu_custom_call.1} parent=5 // pred_fallthru
        _
      %p375 = scmp.le.s32.totalorder 1, %s26
      %p376 = scmp.lt.s32.totalorder %s26, 5
      %p377 = pnand %p375, %p376
      %p378 = pneg %p377
      // Predicated region
      $region53: #{tpu_custom_call.1} parent=5 // pred_check
        _
      $region54: #{tpu_custom_call.1} parent=5 // pred_check_branch
        %380 = sbr.rel (%p377) target = $region56
      $region55: #{tpu_custom_call.1} parent=5 // pred_region
        %s381 = ssub.s32 %s26, 1
        %s382 = sand.u32 %s39, 1
        %s383 = scalar_lea.sflag [#allocation3], %s382
        %s384 = sand.u32 %s39, 1
        %s385 = smul.addr %s384, 32
        %s386 = scalar_lea.vmem [#allocation2], %s385
        // Predicated region
        $region57: #{tpu_custom_call.1} parent=55 // pred_check
          %p387 = pneg %p52
        $region58: #{tpu_custom_call.1} parent=55 // pred_check_branch
          %389 = sbr.rel (%p387) target = $region60
        $region59: #{tpu_custom_call.1} parent=55 // pred_region
          %390 = dma.done %s383, 512
        $region60: #{tpu_custom_call.1} parent=55 // pred_fallthru
          _
        %s391 = sand.u32 %s31, 1
        %s392 = scalar_lea.sflag [#allocation6], %s391
        %s393 = sand.u32 %s65, 1
        %s394 = smul.addr %s393, 32
        %s395 = scalar_lea.vmem [#allocation5], %s394
        // Predicated region
        $region61: #{tpu_custom_call.1} parent=55 // pred_check
          %p396 = pneg %p78
        $region62: #{tpu_custom_call.1} parent=55 // pred_check_branch
          %398 = sbr.rel (%p396) target = $region64
        $region63: #{tpu_custom_call.1} parent=55 // pred_region
          %399 = dma.done %s392, 512
        $region64: #{tpu_custom_call.1} parent=55 // pred_fallthru
          _
        // Predicated region
        $region65: #{tpu_custom_call.1} parent=55 // pred_check
          %p400 = pneg %p99
        $region66: #{tpu_custom_call.1} parent=55 // pred_check_branch
          %402 = sbr.rel (%p400) target = $region68
        $region67: #{tpu_custom_call.1} parent=55 // pred_region
          %403 = dma.done [#allocation6], 2048
        $region68: #{tpu_custom_call.1} parent=55 // pred_fallthru
          _
        // Predicated region
        $region69: #{tpu_custom_call.1} parent=55 // pred_check
          %p404 = pneg %p120
        $region70: #{tpu_custom_call.1} parent=55 // pred_check_branch
          %406 = sbr.rel (%p404) target = $region72
        $region71: #{tpu_custom_call.1} parent=55 // pred_region
          %407 = dma.done [#allocation9], 2048
        $region72: #{tpu_custom_call.1} parent=55 // pred_fallthru
          _
        // Predicated region
        $region73: #{tpu_custom_call.1} parent=55 // pred_check
          %p408 = pneg %p162
        $region74: #{tpu_custom_call.1} parent=55 // pred_check_branch
          %410 = sbr.rel (%p408) target = $region76
        $region75: #{tpu_custom_call.1} parent=55 // pred_region
          %411 = dma.done [#allocation9], 1024
        $region76: #{tpu_custom_call.1} parent=55 // pred_fallthru
          _
        // Predicated region
        $region77: #{tpu_custom_call.1} parent=55 // pred_check
          %p412 = pneg %p204
        $region78: #{tpu_custom_call.1} parent=55 // pred_check_branch
          %414 = sbr.rel (%p412) target = $region80
        $region79: #{tpu_custom_call.1} parent=55 // pred_region
          %415 = dma.done [#allocation12], 1024
        $region80: #{tpu_custom_call.1} parent=55 // pred_fallthru
          _
        %s416 = sand.u32 %s39, 1
        %s417 = scalar_lea.sflag [#allocation3], %s416
        %s418 = sand.u32 %s39, 1
        %s419 = smul.addr %s418, 32
        %s420 = scalar_lea.vmem [#allocation2], %s419
        %p421 = pneg %p52
        %p422 = pneg %p49
        %s423 = sand.u32 %s31, 1
        %s424 = scalar_lea.sflag [#allocation6], %s423
        %s425 = sand.u32 %s65, 1
        %s426 = smul.addr %s425, 32
        %s427 = scalar_lea.vmem [#allocation5], %s426
        %p428 = pneg %p78
        %p429 = pneg %p75
        %p430 = pneg %p99
        %p431 = pneg %p96
        %p432 = pneg %p120
        %p433 = pneg %p117
        %p434 = pneg %p141
        %p435 = pneg %p138
        %p436 = pneg %p162
        %p437 = pneg %p159
        %p438 = pneg %p183
        %p439 = pneg %p180
        %p440 = pneg %p204
        %p441 = pneg %p201
        %p442 = pneg %p225
        %p443 = pneg %p222
        %p444 = pneg %p251
        %p445 = pneg %p248
        %s446 = sand.u32 %s238, 1
        %s447 = scalar_lea.sflag [#allocation4], %s446
        %s448 = sand.u32 %s238, 1
        %s449 = smul.addr %s448, 64
        %s450 = scalar_lea.vmem [#allocation13], %s449
        %s451 = smul.u32 4, %s31
        %s452 = smul.u32 4, %s31
        %s453 = smul.u32 4, %s31
        %v455 = vld [vmem:[#allocation10] sm:$0xf]
        %v456 = vld [vmem:[#allocation10 + $0x4] sm:$0xf]
        %v457 = vld [vmem:[#allocation10 + $0x8] sm:$0xf]
        %v458 = vld [vmem:[#allocation10 + $0xc] sm:$0xf]
        %v459 = vld [vmem:[#allocation10 + $0x10] sm:$0xf]
        %v460 = vld [vmem:[#allocation10 + $0x14] sm:$0xf]
        %v461 = vld [vmem:[#allocation10 + $0x18] sm:$0xf]
        %v462 = vld [vmem:[#allocation10 + $0x1c] sm:$0xf]
        %v463 = vld [vmem:[#allocation10 + $0x20] sm:$0xf]
        %v464 = vld [vmem:[#allocation10 + $0x24] sm:$0xf]
        %v465 = vld [vmem:[#allocation10 + $0x28] sm:$0xf]
        %v466 = vld [vmem:[#allocation10 + $0x2c] sm:$0xf]
        %v467 = vld [vmem:[#allocation10 + $0x30] sm:$0xf]
        %v468 = vld [vmem:[#allocation10 + $0x34] sm:$0xf]
        %v469 = vld [vmem:[#allocation10 + $0x38] sm:$0xf]
        %v470 = vld [vmem:[#allocation10 + $0x3c] sm:$0xf]
        %v471 = vld [vmem:[%s6] sm:$0x1]
        %v472 = vld [vmem:[#allocation11] sm:$0xf]
        %v473 = vld [vmem:[#allocation11 + $0x4] sm:$0xf]
        %v474 = vld [vmem:[#allocation11 + $0x8] sm:$0xf]
        %v475 = vld [vmem:[#allocation11 + $0xc] sm:$0xf]
        %v476 = vld [vmem:[#allocation11 + $0x10] sm:$0xf]
        %v477 = vld [vmem:[#allocation11 + $0x14] sm:$0xf]
        %v478 = vld [vmem:[#allocation11 + $0x18] sm:$0xf]
        %v479 = vld [vmem:[#allocation11 + $0x1c] sm:$0xf]
        %v480 = vld [vmem:[#allocation11 + $0x20] sm:$0xf]
        %v481 = vld [vmem:[#allocation11 + $0x24] sm:$0xf]
        %v482 = vld [vmem:[#allocation11 + $0x28] sm:$0xf]
        %v483 = vld [vmem:[#allocation11 + $0x2c] sm:$0xf]
        %v484 = vld [vmem:[#allocation11 + $0x30] sm:$0xf]
        %v485 = vld [vmem:[#allocation11 + $0x34] sm:$0xf]
        %v486 = vld [vmem:[#allocation11 + $0x38] sm:$0xf]
        %v487 = vld [vmem:[#allocation11 + $0x3c] sm:$0xf]
        %v488 = vld [vmem:[%s8] sm:$0x1]
        %v489 = vld [vmem:[%s386] sm:$0xf]
        %v490 = vld [vmem:[%s386 + $0x8] sm:$0xf]
        %v491 = vld [vmem:[%s386 + $0x10] sm:$0xf]
        %v492 = vld [vmem:[%s386 + $0x18] sm:$0xf]
        %v493 = vld [vmem:[%s395] sm:$0xf]
        %v494 = vld [vmem:[%s395 + $0x8] sm:$0xf]
        %v495 = vld [vmem:[%s395 + $0x10] sm:$0xf]
        %v496 = vld [vmem:[%s395 + $0x18] sm:$0xf]
        %v497 = vadd.bf16 %v489, %v493
        %v498 = vadd.bf16 %v490, %v494
        %v499 = vadd.bf16 %v491, %v495
        %v500 = vadd.bf16 %v492, %v496
        %v501 = vld [vmem:[%s386 + $0x4] sm:$0xf]
        %v502 = vld [vmem:[%s386 + $0xc] sm:$0xf]
        %v503 = vld [vmem:[%s386 + $0x14] sm:$0xf]
        %v504 = vld [vmem:[%s386 + $0x1c] sm:$0xf]
        %v505 = vld [vmem:[%s395 + $0x4] sm:$0xf]
        %v506 = vld [vmem:[%s395 + $0xc] sm:$0xf]
        %v507 = vld [vmem:[%s395 + $0x14] sm:$0xf]
        %v508 = vld [vmem:[%s395 + $0x1c] sm:$0xf]
        %v509 = vadd.bf16 %v501, %v505
        %v510 = vadd.bf16 %v502, %v506
        %v511 = vadd.bf16 %v503, %v507
        %v512 = vadd.bf16 %v504, %v508
        %v517 = vunpack.c.l.b16 %v497
        %v518 = vunpack.c.l.b16 %v498
        %v519 = vunpack.c.l.b16 %v499
        %v520 = vunpack.c.l.b16 %v500
        %v521 = vpack.c.b16 %v518, %v517
        %v522 = vpack.c.b16 %v520, %v519
        %v529 = vunpack.c.l.b16 %v509
        %v530 = vunpack.c.l.b16 %v510
        %v531 = vunpack.c.l.b16 %v511
        %v532 = vunpack.c.l.b16 %v512
        %v533 = vpack.c.b16 %v530, %v529
        %v534 = vpack.c.b16 %v532, %v531
        %v538 = vlaneseq
        %v539 = vshrl.u32 %v538, 7
        %v540 = vsub.s32 0, %v539
        %v541 = vrot.slane %v471, %v540
        %v559 = vunpack.c.l.b16 %v455
        %v560 = vunpack.c.l.b16 %v456
        %v561 = vunpack.c.l.b16 %v457
        %v562 = vunpack.c.l.b16 %v458
        %v563 = vunpack.c.l.b16 %v459
        %v564 = vunpack.c.l.b16 %v460
        %v565 = vunpack.c.l.b16 %v461
        %v566 = vunpack.c.l.b16 %v462
        %v567 = vunpack.c.l.b16 %v463
        %v568 = vunpack.c.l.b16 %v464
        %v569 = vunpack.c.l.b16 %v465
        %v570 = vunpack.c.l.b16 %v466
        %v571 = vunpack.c.l.b16 %v467
        %v572 = vunpack.c.l.b16 %v468
        %v573 = vunpack.c.l.b16 %v469
        %v574 = vunpack.c.l.b16 %v470
        %v575 = vpack.c.b16 %v560, %v559
        %v576 = vpack.c.b16 %v562, %v561
        %v577 = vpack.c.b16 %v564, %v563
        %v578 = vpack.c.b16 %v566, %v565
        %v579 = vpack.c.b16 %v568, %v567
        %v580 = vpack.c.b16 %v570, %v569
        %v581 = vpack.c.b16 %v572, %v571
        %v582 = vpack.c.b16 %v574, %v573
        %591 = vmatprep.subr.bf16.mxu0 0
        %592 = vmatpush1.bf16.msra.mxu0 %v582
        %593 = vmatprep.subr.bf16.mxu0 0
        %594 = vmatpush1.bf16.msra.mxu0 %v581
        %595 = vmatprep.subr.bf16.mxu0 0
        %596 = vmatpush1.bf16.msra.mxu0 %v580
        %597 = vmatprep.subr.bf16.mxu0 0
        %598 = vmatpush1.bf16.msra.mxu0 %v579
        %599 = vmatprep.subr.bf16.mxu0 0
        %600 = vmatpush1.bf16.msra.mxu0 %v578
        %601 = vmatprep.subr.bf16.mxu0 0
        %602 = vmatpush1.bf16.msra.mxu0 %v577
        %603 = vmatprep.subr.bf16.mxu0 0
        %604 = vmatpush1.bf16.msra.mxu0 %v576
        %605 = vmatprep.subr.bf16.mxu0 0
        %606 = vmatpush1.bf16.msra.mxu0 %v575
        %607 = vmatprep.subr.bf16.mxu0 0
        %608 = vmatpush2.bf16.msra.mxu0 0
        %609 = vmatprep.subr.bf16.mxu0 0
        %610 = vmatpush2.bf16.msra.mxu0 0
        %611 = vmatprep.subr.bf16.mxu0 0
        %612 = vmatpush2.bf16.msra.mxu0 0
        %613 = vmatprep.subr.bf16.mxu0 0
        %614 = vmatpush2.bf16.msra.mxu0 0
        %615 = vmatprep.subr.bf16.mxu0 0
        %616 = vmatpush2.bf16.msra.mxu0 0
        %617 = vmatprep.subr.bf16.mxu0 0
        %618 = vmatpush2.bf16.msra.mxu0 0
        %619 = vmatprep.subr.bf16.mxu0 0
        %620 = vmatpush2.bf16.msra.mxu0 0
        %621 = vmatprep.subr.bf16.mxu0 0
        %622 = vmatpush2.bf16.msra.mxu0 0
        %623 = vmatprep.mubr.bf16.mxu0 0
        %624 = vmatmul.mubr.bf16.gmra.mxu0 %v521
        %v625 = vpop.f32.mrf.mxu0
        %v626 = vadd.f32 %v541, %v625
        %v627 = vpop.f32.mrf.mxu0
        %v628 = vpop.f32.mrf.mxu0
        %v629 = vadd.f32 %v541, %v628
        %v630 = vpop.f32.mrf.mxu0
        %631 = vmatprep.mubr.bf16.mxu0 0
        %632 = vmatmul.mubr.bf16.gmra.mxu0 %v522
        %v633 = vpop.f32.mrf.mxu0
        %v634 = vadd.f32 %v541, %v633
        %v635 = vpop.f32.mrf.mxu0
        %v636 = vpop.f32.mrf.mxu0
        %v637 = vadd.f32 %v541, %v636
        %v638 = vpop.f32.mrf.mxu0
        %639 = vmatprep.mubr.bf16.mxu0 0
        %640 = vmatmul.mubr.bf16.gmra.mxu0 %v533
        %v641 = vpop.f32.mrf.mxu0
        %v642 = vadd.f32 %v541, %v641
        %v643 = vpop.f32.mrf.mxu0
        %v644 = vpop.f32.mrf.mxu0
        %v645 = vadd.f32 %v541, %v644
        %v646 = vpop.f32.mrf.mxu0
        %647 = vmatprep.mubr.bf16.mxu0 0
        %648 = vmatmul.mubr.bf16.gmra.mxu0 %v534
        %v649 = vpop.f32.mrf.mxu0
        %v650 = vadd.f32 %v541, %v649
        %v651 = vpop.f32.mrf.mxu0
        %v652 = vpop.f32.mrf.mxu0
        %v653 = vadd.f32 %v541, %v652
        %v654 = vpop.f32.mrf.mxu0
        %655 = vdwg.mxu0
        %v656 = vpack.c.bf16 %v629, %v626
        %v657 = vpack.c.bf16 %v637, %v634
        %v658 = vld [vmem:[#allocation7] sm:$0xf]
        %v659 = vld [vmem:[#allocation7 + $0x8] sm:$0xf]
        %v660 = vld [vmem:[#allocation7 + $0x10] sm:$0xf]
        %v661 = vld [vmem:[#allocation7 + $0x18] sm:$0xf]
        %v662 = vld [vmem:[#allocation7 + $0x20] sm:$0xf]
        %v663 = vld [vmem:[#allocation7 + $0x28] sm:$0xf]
        %v664 = vld [vmem:[#allocation7 + $0x30] sm:$0xf]
        %v665 = vld [vmem:[#allocation7 + $0x38] sm:$0xf]
        %v666 = vld [vmem:[#allocation7 + $0x40] sm:$0xf]
        %v667 = vld [vmem:[#allocation7 + $0x48] sm:$0xf]
        %v668 = vld [vmem:[#allocation7 + $0x50] sm:$0xf]
        %v669 = vld [vmem:[#allocation7 + $0x58] sm:$0xf]
        %v670 = vld [vmem:[#allocation7 + $0x60] sm:$0xf]
        %v671 = vld [vmem:[#allocation7 + $0x68] sm:$0xf]
        %v672 = vld [vmem:[#allocation7 + $0x70] sm:$0xf]
        %v673 = vld [vmem:[#allocation7 + $0x78] sm:$0xf]
        %v674 = vld [vmem:[#allocation8] sm:$0xf]
        %v675 = vld [vmem:[#allocation8 + $0x8] sm:$0xf]
        %v676 = vld [vmem:[#allocation8 + $0x10] sm:$0xf]
        %v677 = vld [vmem:[#allocation8 + $0x18] sm:$0xf]
        %v678 = vld [vmem:[#allocation8 + $0x20] sm:$0xf]
        %v679 = vld [vmem:[#allocation8 + $0x28] sm:$0xf]
        %v680 = vld [vmem:[#allocation8 + $0x30] sm:$0xf]
        %v681 = vld [vmem:[#allocation8 + $0x38] sm:$0xf]
        %v682 = vld [vmem:[#allocation8 + $0x40] sm:$0xf]
        %v683 = vld [vmem:[#allocation8 + $0x48] sm:$0xf]
        %v684 = vld [vmem:[#allocation8 + $0x50] sm:$0xf]
        %v685 = vld [vmem:[#allocation8 + $0x58] sm:$0xf]
        %v686 = vld [vmem:[#allocation8 + $0x60] sm:$0xf]
        %v687 = vld [vmem:[#allocation8 + $0x68] sm:$0xf]
        %v688 = vld [vmem:[#allocation8 + $0x70] sm:$0xf]
        %v689 = vld [vmem:[#allocation8 + $0x78] sm:$0xf]
        %v690 = vld [vmem:[%s4] sm:$0x1]
        %v691 = vlaneseq
        %v692 = vshrl.u32 %v691, 7
        %v693 = vsub.s32 0, %v692
        %v694 = vrot.slane %v690, %v693
        %v711 = vunpack.c.l.b16 %v658
        %v712 = vunpack.c.l.b16 %v659
        %v713 = vunpack.c.l.b16 %v660
        %v714 = vunpack.c.l.b16 %v661
        %v715 = vunpack.c.l.b16 %v662
        %v716 = vunpack.c.l.b16 %v663
        %v717 = vunpack.c.l.b16 %v664
        %v718 = vunpack.c.l.b16 %v665
        %v719 = vunpack.c.l.b16 %v666
        %v720 = vunpack.c.l.b16 %v667
        %v721 = vunpack.c.l.b16 %v668
        %v722 = vunpack.c.l.b16 %v669
        %v723 = vunpack.c.l.b16 %v670
        %v724 = vunpack.c.l.b16 %v671
        %v725 = vunpack.c.l.b16 %v672
        %v726 = vunpack.c.l.b16 %v673
        %v727 = vpack.c.b16 %v712, %v711
        %v728 = vpack.c.b16 %v714, %v713
        %v729 = vpack.c.b16 %v716, %v715
        %v730 = vpack.c.b16 %v718, %v717
        %v731 = vpack.c.b16 %v720, %v719
        %v732 = vpack.c.b16 %v722, %v721
        %v733 = vpack.c.b16 %v724, %v723
        %v734 = vpack.c.b16 %v726, %v725
        %vm735 = vcmask 261120
        %v737 = vsel %vm735, %v656, 0
        %v740 = vsel %vm735, %v657, 0
        %v743 = vsel %vm735, %v727, 0
        %v746 = vsel %vm735, %v728, 0
        %v749 = vsel %vm735, %v729, 0
        %v752 = vsel %vm735, %v730, 0
        %v755 = vsel %vm735, %v731, 0
        %v758 = vsel %vm735, %v732, 0
        %v761 = vsel %vm735, %v733, 0
        %v764 = vsel %vm735, %v734, 0
        %766 = vmatprep.subr.bf16.mxu0 0
        %767 = vmatpush1.bf16.xpose.msra.mxu0 %v764
        %768 = vmatprep.subr.bf16.mxu0 0
        %769 = vmatpush1.bf16.xpose.msra.mxu0 %v761
        %770 = vmatprep.subr.bf16.mxu0 0
        %771 = vmatpush1.bf16.xpose.msra.mxu0 %v758
        %772 = vmatprep.subr.bf16.mxu0 0
        %773 = vmatpush1.bf16.xpose.msra.mxu0 %v755
        %774 = vmatprep.subr.bf16.mxu0 0
        %775 = vmatpush1.bf16.xpose.msra.mxu0 %v752
        %776 = vmatprep.subr.bf16.mxu0 0
        %777 = vmatpush1.bf16.xpose.msra.mxu0 %v749
        %778 = vmatprep.subr.bf16.mxu0 0
        %779 = vmatpush1.bf16.xpose.msra.mxu0 %v746
        %780 = vmatprep.subr.bf16.mxu0 0
        %781 = vmatpush1.bf16.xpose.msra.mxu0 %v743
        %782 = vmatprep.subr.bf16.mxu0 0
        %783 = vmatpush2.bf16.xpose.msra.mxu0 0
        %784 = vmatprep.subr.bf16.mxu0 0
        %785 = vmatpush2.bf16.xpose.msra.mxu0 0
        %786 = vmatprep.subr.bf16.mxu0 0
        %787 = vmatpush2.bf16.xpose.msra.mxu0 0
        %788 = vmatprep.subr.bf16.mxu0 0
        %789 = vmatpush2.bf16.xpose.msra.mxu0 0
        %790 = vmatprep.subr.bf16.mxu0 0
        %791 = vmatpush2.bf16.xpose.msra.mxu0 0
        %792 = vmatprep.subr.bf16.mxu0 0
        %793 = vmatpush2.bf16.xpose.msra.mxu0 0
        %794 = vmatprep.subr.bf16.mxu0 0
        %795 = vmatpush2.bf16.xpose.msra.mxu0 0
        %796 = vmatprep.subr.bf16.mxu0 0
        %797 = vmatpush2.bf16.xpose.msra.mxu0 0
        %798 = vmatprep.mubr.bf16.mxu0 0
        %799 = vmatmul.mubr.bf16.gmra.mxu0 %v737
        %v800 = vpop.f32.mrf.mxu0
        %v801 = vadd.f32 %v694, %v800
        %v802 = vpop.f32.mrf.mxu0
        %v803 = vpop.f32.mrf.mxu0
        %v804 = vadd.f32 %v694, %v803
        %v805 = vpop.f32.mrf.mxu0
        %806 = vmatprep.mubr.bf16.mxu0 0
        %807 = vmatmul.mubr.bf16.gmra.mxu0 %v740
        %v808 = vpop.f32.mrf.mxu0
        %v809 = vadd.f32 %v694, %v808
        %v810 = vpop.f32.mrf.mxu0
        %v811 = vpop.f32.mrf.mxu0
        %v812 = vadd.f32 %v694, %v811
        %v813 = vpop.f32.mrf.mxu0
        %814 = vdwg.mxu0
        %815 = vmax.xlane.f32.xlu0 %v801
        %v816 = vpop.xlane.xlu0 %815
        %817 = vmax.xlane.f32.xlu0 %v804
        %v818 = vpop.xlane.xlu0 %817
        %819 = vmax.xlane.f32.xlu0 %v809
        %v820 = vpop.xlane.xlu0 %819
        %821 = vmax.xlane.f32.xlu0 %v812
        %v822 = vpop.xlane.xlu0 %821
        %v823 = vsub.f32 %v801, %v816
        %v824 = vsub.f32 %v804, %v818
        %v825 = vsub.f32 %v809, %v820
        %v826 = vsub.f32 %v812, %v822
        %v827 = vmul.f32 %v823, 1.442695
        %v828 = vpow.pop %v827
        %v829 = vmul.f32 %v824, 1.442695
        %v830 = vpow.pop %v829
        %v831 = vmul.f32 %v825, 1.442695
        %v832 = vpow.pop %v831
        %v833 = vmul.f32 %v826, 1.442695
        %v834 = vpow.pop %v833
        %835 = vadd.xlane.f32.xlu0 %v828
        %v836 = vpop.xlane.xlu0 %835
        %837 = vadd.xlane.f32.xlu0 %v830
        %v838 = vpop.xlane.xlu0 %837
        %839 = vadd.xlane.f32.xlu0 %v832
        %v840 = vpop.xlane.xlu0 %839
        %841 = vadd.xlane.f32.xlu0 %v834
        %v842 = vpop.xlane.xlu0 %841
        %v843 = vrcp.pop %v836
        %v844 = vrcp.pop %v838
        %v845 = vrcp.pop %v840
        %v846 = vrcp.pop %v842
        %v847 = vmul.f32 %v828, %v843
        %v848 = vmul.f32 %v830, %v844
        %v849 = vmul.f32 %v832, %v845
        %v850 = vmul.f32 %v834, %v846
        %v851 = vpack.c.bf16 %v848, %v847
        %v852 = vpack.c.bf16 %v850, %v849
        %v869 = vunpack.c.l.b16 %v674
        %v870 = vunpack.c.l.b16 %v675
        %v871 = vunpack.c.l.b16 %v676
        %v872 = vunpack.c.l.b16 %v677
        %v873 = vunpack.c.l.b16 %v678
        %v874 = vunpack.c.l.b16 %v679
        %v875 = vunpack.c.l.b16 %v680
        %v876 = vunpack.c.l.b16 %v681
        %v877 = vunpack.c.l.b16 %v682
        %v878 = vunpack.c.l.b16 %v683
        %v879 = vunpack.c.l.b16 %v684
        %v880 = vunpack.c.l.b16 %v685
        %v881 = vunpack.c.l.b16 %v686
        %v882 = vunpack.c.l.b16 %v687
        %v883 = vunpack.c.l.b16 %v688
        %v884 = vunpack.c.l.b16 %v689
        %v885 = vpack.c.b16 %v870, %v869
        %v886 = vpack.c.b16 %v872, %v871
        %v887 = vpack.c.b16 %v874, %v873
        %v888 = vpack.c.b16 %v876, %v875
        %v889 = vpack.c.b16 %v878, %v877
        %v890 = vpack.c.b16 %v880, %v879
        %v891 = vpack.c.b16 %v882, %v881
        %v892 = vpack.c.b16 %v884, %v883
        %901 = vmatprep.subr.bf16.mxu0 0
        %902 = vmatpush1.bf16.msra.mxu0 %v892
        %903 = vmatprep.subr.bf16.mxu0 0
        %904 = vmatpush1.bf16.msra.mxu0 %v891
        %905 = vmatprep.subr.bf16.mxu0 0
        %906 = vmatpush1.bf16.msra.mxu0 %v890
        %907 = vmatprep.subr.bf16.mxu0 0
        %908 = vmatpush1.bf16.msra.mxu0 %v889
        %909 = vmatprep.subr.bf16.mxu0 0
        %910 = vmatpush1.bf16.msra.mxu0 %v888
        %911 = vmatprep.subr.bf16.mxu0 0
        %912 = vmatpush1.bf16.msra.mxu0 %v887
        %913 = vmatprep.subr.bf16.mxu0 0
        %914 = vmatpush1.bf16.msra.mxu0 %v886
        %915 = vmatprep.subr.bf16.mxu0 0
        %916 = vmatpush1.bf16.msra.mxu0 %v885
        %917 = vmatprep.subr.bf16.mxu0 0
        %918 = vmatpush2.bf16.msra.mxu0 0
        %919 = vmatprep.subr.bf16.mxu0 0
        %920 = vmatpush2.bf16.msra.mxu0 0
        %921 = vmatprep.subr.bf16.mxu0 0
        %922 = vmatpush2.bf16.msra.mxu0 0
        %923 = vmatprep.subr.bf16.mxu0 0
        %924 = vmatpush2.bf16.msra.mxu0 0
        %925 = vmatprep.subr.bf16.mxu0 0
        %926 = vmatpush2.bf16.msra.mxu0 0
        %927 = vmatprep.subr.bf16.mxu0 0
        %928 = vmatpush2.bf16.msra.mxu0 0
        %929 = vmatprep.subr.bf16.mxu0 0
        %930 = vmatpush2.bf16.msra.mxu0 0
        %931 = vmatprep.subr.bf16.mxu0 0
        %932 = vmatpush2.bf16.msra.mxu0 0
        %933 = vmatprep.mubr.bf16.mxu0 0
        %934 = vmatmul.mubr.bf16.gmra.mxu0 %v851
        %v935 = vpop.f32.mrf.mxu0
        %v936 = vadd.f32 0.0, %v935
        %v937 = vpop.f32.mrf.mxu0
        %v938 = vpop.f32.mrf.mxu0
        %v939 = vadd.f32 0.0, %v938
        %v940 = vpop.f32.mrf.mxu0
        %941 = vmatprep.mubr.bf16.mxu0 0
        %942 = vmatmul.mubr.bf16.gmra.mxu0 %v852
        %v943 = vpop.f32.mrf.mxu0
        %v944 = vadd.f32 0.0, %v943
        %v945 = vpop.f32.mrf.mxu0
        %v946 = vpop.f32.mrf.mxu0
        %v947 = vadd.f32 0.0, %v946
        %v948 = vpop.f32.mrf.mxu0
        %949 = vdwg.mxu0
        %952 = vrot.lane.b32.xlu0 %v656, 96
        %v953 = vpop.permute.xlu0 %952
        %954 = vrot.lane.b32.xlu0 %v657, 96
        %v955 = vpop.permute.xlu0 %954
        %956 = vrot.lane.b32.xlu0 %v727, 96
        %v957 = vpop.permute.xlu0 %956
        %958 = vrot.lane.b32.xlu0 %v728, 96
        %v959 = vpop.permute.xlu0 %958
        %960 = vrot.lane.b32.xlu0 %v729, 96
        %v961 = vpop.permute.xlu0 %960
        %962 = vrot.lane.b32.xlu0 %v730, 96
        %v963 = vpop.permute.xlu0 %962
        %964 = vrot.lane.b32.xlu0 %v731, 96
        %v965 = vpop.permute.xlu0 %964
        %966 = vrot.lane.b32.xlu0 %v732, 96
        %v967 = vpop.permute.xlu0 %966
        %968 = vrot.lane.b32.xlu0 %v733, 96
        %v969 = vpop.permute.xlu0 %968
        %970 = vrot.lane.b32.xlu0 %v734, 96
        %v971 = vpop.permute.xlu0 %970
        %v973 = vsel %vm735, %v953, 0
        %v976 = vsel %vm735, %v955, 0
        %v979 = vsel %vm735, %v957, 0
        %v982 = vsel %vm735, %v959, 0
        %v985 = vsel %vm735, %v961, 0
        %v988 = vsel %vm735, %v963, 0
        %v991 = vsel %vm735, %v965, 0
        %v994 = vsel %vm735, %v967, 0
        %v997 = vsel %vm735, %v969, 0
        %v1000 = vsel %vm735, %v971, 0
        %1002 = vmatprep.subr.bf16.mxu0 0
        %1003 = vmatpush1.bf16.xpose.msra.mxu0 %v1000
        %1004 = vmatprep.subr.bf16.mxu0 0
        %1005 = vmatpush1.bf16.xpose.msra.mxu0 %v997
        %1006 = vmatprep.subr.bf16.mxu0 0
        %1007 = vmatpush1.bf16.xpose.msra.mxu0 %v994
        %1008 = vmatprep.subr.bf16.mxu0 0
        %1009 = vmatpush1.bf16.xpose.msra.mxu0 %v991
        %1010 = vmatprep.subr.bf16.mxu0 0
        %1011 = vmatpush1.bf16.xpose.msra.mxu0 %v988
        %1012 = vmatprep.subr.bf16.mxu0 0
        %1013 = vmatpush1.bf16.xpose.msra.mxu0 %v985
        %1014 = vmatprep.subr.bf16.mxu0 0
        %1015 = vmatpush1.bf16.xpose.msra.mxu0 %v982
        %1016 = vmatprep.subr.bf16.mxu0 0
        %1017 = vmatpush1.bf16.xpose.msra.mxu0 %v979
        %1018 = vmatprep.subr.bf16.mxu0 0
        %1019 = vmatpush2.bf16.xpose.msra.mxu0 0
        %1020 = vmatprep.subr.bf16.mxu0 0
        %1021 = vmatpush2.bf16.xpose.msra.mxu0 0
        %1022 = vmatprep.subr.bf16.mxu0 0
        %1023 = vmatpush2.bf16.xpose.msra.mxu0 0
        %1024 = vmatprep.subr.bf16.mxu0 0
        %1025 = vmatpush2.bf16.xpose.msra.mxu0 0
        %1026 = vmatprep.subr.bf16.mxu0 0
        %1027 = vmatpush2.bf16.xpose.msra.mxu0 0
        %1028 = vmatprep.subr.bf16.mxu0 0
        %1029 = vmatpush2.bf16.xpose.msra.mxu0 0
        %1030 = vmatprep.subr.bf16.mxu0 0
        %1031 = vmatpush2.bf16.xpose.msra.mxu0 0
        %1032 = vmatprep.subr.bf16.mxu0 0
        %1033 = vmatpush2.bf16.xpose.msra.mxu0 0
        %1034 = vmatprep.mubr.bf16.mxu0 0
        %1035 = vmatmul.mubr.bf16.gmra.mxu0 %v973
        %v1036 = vpop.f32.mrf.mxu0
        %v1037 = vadd.f32 %v694, %v1036
        %v1038 = vpop.f32.mrf.mxu0
        %v1039 = vpop.f32.mrf.mxu0
        %v1040 = vadd.f32 %v694, %v1039
        %v1041 = vpop.f32.mrf.mxu0
        %1042 = vmatprep.mubr.bf16.mxu0 0
        %1043 = vmatmul.mubr.bf16.gmra.mxu0 %v976
        %v1044 = vpop.f32.mrf.mxu0
        %v1045 = vadd.f32 %v694, %v1044
        %v1046 = vpop.f32.mrf.mxu0
        %v1047 = vpop.f32.mrf.mxu0
        %v1048 = vadd.f32 %v694, %v1047
        %v1049 = vpop.f32.mrf.mxu0
        %1050 = vdwg.mxu0
        %1051 = vmax.xlane.f32.xlu0 %v1037
        %v1052 = vpop.xlane.xlu0 %1051
        %1053 = vmax.xlane.f32.xlu0 %v1040
        %v1054 = vpop.xlane.xlu0 %1053
        %1055 = vmax.xlane.f32.xlu0 %v1045
        %v1056 = vpop.xlane.xlu0 %1055
        %1057 = vmax.xlane.f32.xlu0 %v1048
        %v1058 = vpop.xlane.xlu0 %1057
        %v1059 = vsub.f32 %v1037, %v1052
        %v1060 = vsub.f32 %v1040, %v1054
        %v1061 = vsub.f32 %v1045, %v1056
        %v1062 = vsub.f32 %v1048, %v1058
        %v1063 = vmul.f32 %v1059, 1.442695
        %v1064 = vpow.pop %v1063
        %v1065 = vmul.f32 %v1060, 1.442695
        %v1066 = vpow.pop %v1065
        %v1067 = vmul.f32 %v1061, 1.442695
        %v1068 = vpow.pop %v1067
        %v1069 = vmul.f32 %v1062, 1.442695
        %v1070 = vpow.pop %v1069
        %1071 = vadd.xlane.f32.xlu0 %v1064
        %v1072 = vpop.xlane.xlu0 %1071
        %1073 = vadd.xlane.f32.xlu0 %v1066
        %v1074 = vpop.xlane.xlu0 %1073
        %1075 = vadd.xlane.f32.xlu0 %v1068
        %v1076 = vpop.xlane.xlu0 %1075
        %1077 = vadd.xlane.f32.xlu0 %v1070
        %v1078 = vpop.xlane.xlu0 %1077
        %v1079 = vrcp.pop %v1072
        %v1080 = vrcp.pop %v1074
        %v1081 = vrcp.pop %v1076
        %v1082 = vrcp.pop %v1078
        %v1083 = vmul.f32 %v1064, %v1079
        %v1084 = vmul.f32 %v1066, %v1080
        %v1085 = vmul.f32 %v1068, %v1081
        %v1086 = vmul.f32 %v1070, %v1082
        %v1087 = vpack.c.bf16 %v1084, %v1083
        %v1088 = vpack.c.bf16 %v1086, %v1085
        %1089 = vrot.lane.b32.xlu0 %v885, 96
        %v1090 = vpop.permute.xlu0 %1089
        %1091 = vrot.lane.b32.xlu0 %v886, 96
        %v1092 = vpop.permute.xlu0 %1091
        %1093 = vrot.lane.b32.xlu0 %v887, 96
        %v1094 = vpop.permute.xlu0 %1093
        %1095 = vrot.lane.b32.xlu0 %v888, 96
        %v1096 = vpop.permute.xlu0 %1095
        %1097 = vrot.lane.b32.xlu0 %v889, 96
        %v1098 = vpop.permute.xlu0 %1097
        %1099 = vrot.lane.b32.xlu0 %v890, 96
        %v1100 = vpop.permute.xlu0 %1099
        %1101 = vrot.lane.b32.xlu0 %v891, 96
        %v1102 = vpop.permute.xlu0 %1101
        %1103 = vrot.lane.b32.xlu0 %v892, 96
        %v1104 = vpop.permute.xlu0 %1103
        %1113 = vmatprep.subr.bf16.mxu0 0
        %1114 = vmatpush1.bf16.msra.mxu0 %v1104
        %1115 = vmatprep.subr.bf16.mxu0 0
        %1116 = vmatpush1.bf16.msra.mxu0 %v1102
        %1117 = vmatprep.subr.bf16.mxu0 0
        %1118 = vmatpush1.bf16.msra.mxu0 %v1100
        %1119 = vmatprep.subr.bf16.mxu0 0
        %1120 = vmatpush1.bf16.msra.mxu0 %v1098
        %1121 = vmatprep.subr.bf16.mxu0 0
        %1122 = vmatpush1.bf16.msra.mxu0 %v1096
        %1123 = vmatprep.subr.bf16.mxu0 0
        %1124 = vmatpush1.bf16.msra.mxu0 %v1094
        %1125 = vmatprep.subr.bf16.mxu0 0
        %1126 = vmatpush1.bf16.msra.mxu0 %v1092
        %1127 = vmatprep.subr.bf16.mxu0 0
        %1128 = vmatpush1.bf16.msra.mxu0 %v1090
        %1129 = vmatprep.subr.bf16.mxu0 0
        %1130 = vmatpush2.bf16.msra.mxu0 0
        %1131 = vmatprep.subr.bf16.mxu0 0
        %1132 = vmatpush2.bf16.msra.mxu0 0
        %1133 = vmatprep.subr.bf16.mxu0 0
        %1134 = vmatpush2.bf16.msra.mxu0 0
        %1135 = vmatprep.subr.bf16.mxu0 0
        %1136 = vmatpush2.bf16.msra.mxu0 0
        %1137 = vmatprep.subr.bf16.mxu0 0
        %1138 = vmatpush2.bf16.msra.mxu0 0
        %1139 = vmatprep.subr.bf16.mxu0 0
        %1140 = vmatpush2.bf16.msra.mxu0 0
        %1141 = vmatprep.subr.bf16.mxu0 0
        %1142 = vmatpush2.bf16.msra.mxu0 0
        %1143 = vmatprep.subr.bf16.mxu0 0
        %1144 = vmatpush2.bf16.msra.mxu0 0
        %1145 = vmatprep.mubr.bf16.mxu0 0
        %1146 = vmatmul.mubr.bf16.gmra.mxu0 %v1087
        %v1147 = vpop.f32.mrf.mxu0
        %v1148 = vadd.f32 0.0, %v1147
        %v1149 = vpop.f32.mrf.mxu0
        %v1150 = vpop.f32.mrf.mxu0
        %v1151 = vadd.f32 0.0, %v1150
        %v1152 = vpop.f32.mrf.mxu0
        %1153 = vmatprep.mubr.bf16.mxu0 0
        %1154 = vmatmul.mubr.bf16.gmra.mxu0 %v1088
        %v1155 = vpop.f32.mrf.mxu0
        %v1156 = vadd.f32 0.0, %v1155
        %v1157 = vpop.f32.mrf.mxu0
        %v1158 = vpop.f32.mrf.mxu0
        %v1159 = vadd.f32 0.0, %v1158
        %v1160 = vpop.f32.mrf.mxu0
        %1161 = vdwg.mxu0
        %1162 = vrot.lane.b32.xlu0 %v656, 64
        %v1163 = vpop.permute.xlu0 %1162
        %1164 = vrot.lane.b32.xlu0 %v657, 64
        %v1165 = vpop.permute.xlu0 %1164
        %1166 = vrot.lane.b32.xlu0 %v727, 64
        %v1167 = vpop.permute.xlu0 %1166
        %1168 = vrot.lane.b32.xlu0 %v728, 64
        %v1169 = vpop.permute.xlu0 %1168
        %1170 = vrot.lane.b32.xlu0 %v729, 64
        %v1171 = vpop.permute.xlu0 %1170
        %1172 = vrot.lane.b32.xlu0 %v730, 64
        %v1173 = vpop.permute.xlu0 %1172
        %1174 = vrot.lane.b32.xlu0 %v731, 64
        %v1175 = vpop.permute.xlu0 %1174
        %1176 = vrot.lane.b32.xlu0 %v732, 64
        %v1177 = vpop.permute.xlu0 %1176
        %1178 = vrot.lane.b32.xlu0 %v733, 64
        %v1179 = vpop.permute.xlu0 %1178
        %1180 = vrot.lane.b32.xlu0 %v734, 64
        %v1181 = vpop.permute.xlu0 %1180
        %v1183 = vsel %vm735, %v1163, 0
        %v1186 = vsel %vm735, %v1165, 0
        %v1189 = vsel %vm735, %v1167, 0
        %v1192 = vsel %vm735, %v1169, 0
        %v1195 = vsel %vm735, %v1171, 0
        %v1198 = vsel %vm735, %v1173, 0
        %v1201 = vsel %vm735, %v1175, 0
        %v1204 = vsel %vm735, %v1177, 0
        %v1207 = vsel %vm735, %v1179, 0
        %v1210 = vsel %vm735, %v1181, 0
        %1212 = vmatprep.subr.bf16.mxu0 0
        %1213 = vmatpush1.bf16.xpose.msra.mxu0 %v1210
        %1214 = vmatprep.subr.bf16.mxu0 0
        %1215 = vmatpush1.bf16.xpose.msra.mxu0 %v1207
        %1216 = vmatprep.subr.bf16.mxu0 0
        %1217 = vmatpush1.bf16.xpose.msra.mxu0 %v1204
        %1218 = vmatprep.subr.bf16.mxu0 0
        %1219 = vmatpush1.bf16.xpose.msra.mxu0 %v1201
        %1220 = vmatprep.subr.bf16.mxu0 0
        %1221 = vmatpush1.bf16.xpose.msra.mxu0 %v1198
        %1222 = vmatprep.subr.bf16.mxu0 0
        %1223 = vmatpush1.bf16.xpose.msra.mxu0 %v1195
        %1224 = vmatprep.subr.bf16.mxu0 0
        %1225 = vmatpush1.bf16.xpose.msra.mxu0 %v1192
        %1226 = vmatprep.subr.bf16.mxu0 0
        %1227 = vmatpush1.bf16.xpose.msra.mxu0 %v1189
        %1228 = vmatprep.subr.bf16.mxu0 0
        %1229 = vmatpush2.bf16.xpose.msra.mxu0 0
        %1230 = vmatprep.subr.bf16.mxu0 0
        %1231 = vmatpush2.bf16.xpose.msra.mxu0 0
        %1232 = vmatprep.subr.bf16.mxu0 0
        %1233 = vmatpush2.bf16.xpose.msra.mxu0 0
        %1234 = vmatprep.subr.bf16.mxu0 0
        %1235 = vmatpush2.bf16.xpose.msra.mxu0 0
        %1236 = vmatprep.subr.bf16.mxu0 0
        %1237 = vmatpush2.bf16.xpose.msra.mxu0 0
        %1238 = vmatprep.subr.bf16.mxu0 0
        %1239 = vmatpush2.bf16.xpose.msra.mxu0 0
        %1240 = vmatprep.subr.bf16.mxu0 0
        %1241 = vmatpush2.bf16.xpose.msra.mxu0 0
        %1242 = vmatprep.subr.bf16.mxu0 0
        %1243 = vmatpush2.bf16.xpose.msra.mxu0 0
        %1244 = vmatprep.mubr.bf16.mxu0 0
        %1245 = vmatmul.mubr.bf16.gmra.mxu0 %v1183
        %v1246 = vpop.f32.mrf.mxu0
        %v1247 = vadd.f32 %v694, %v1246
        %v1248 = vpop.f32.mrf.mxu0
        %v1249 = vpop.f32.mrf.mxu0
        %v1250 = vadd.f32 %v694, %v1249
        %v1251 = vpop.f32.mrf.mxu0
        %1252 = vmatprep.mubr.bf16.mxu0 0
        %1253 = vmatmul.mubr.bf16.gmra.mxu0 %v1186
        %v1254 = vpop.f32.mrf.mxu0
        %v1255 = vadd.f32 %v694, %v1254
        %v1256 = vpop.f32.mrf.mxu0
        %v1257 = vpop.f32.mrf.mxu0
        %v1258 = vadd.f32 %v694, %v1257
        %v1259 = vpop.f32.mrf.mxu0
        %1260 = vdwg.mxu0
        %1261 = vmax.xlane.f32.xlu0 %v1247
        %v1262 = vpop.xlane.xlu0 %1261
        %1263 = vmax.xlane.f32.xlu0 %v1250
        %v1264 = vpop.xlane.xlu0 %1263
        %1265 = vmax.xlane.f32.xlu0 %v1255
        %v1266 = vpop.xlane.xlu0 %1265
        %1267 = vmax.xlane.f32.xlu0 %v1258
        %v1268 = vpop.xlane.xlu0 %1267
        %v1269 = vsub.f32 %v1247, %v1262
        %v1270 = vsub.f32 %v1250, %v1264
        %v1271 = vsub.f32 %v1255, %v1266
        %v1272 = vsub.f32 %v1258, %v1268
        %v1273 = vmul.f32 %v1269, 1.442695
        %v1274 = vpow.pop %v1273
        %v1275 = vmul.f32 %v1270, 1.442695
        %v1276 = vpow.pop %v1275
        %v1277 = vmul.f32 %v1271, 1.442695
        %v1278 = vpow.pop %v1277
        %v1279 = vmul.f32 %v1272, 1.442695
        %v1280 = vpow.pop %v1279
        %1281 = vadd.xlane.f32.xlu0 %v1274
        %v1282 = vpop.xlane.xlu0 %1281
        %1283 = vadd.xlane.f32.xlu0 %v1276
        %v1284 = vpop.xlane.xlu0 %1283
        %1285 = vadd.xlane.f32.xlu0 %v1278
        %v1286 = vpop.xlane.xlu0 %1285
        %1287 = vadd.xlane.f32.xlu0 %v1280
        %v1288 = vpop.xlane.xlu0 %1287
        %v1289 = vrcp.pop %v1282
        %v1290 = vrcp.pop %v1284
        %v1291 = vrcp.pop %v1286
        %v1292 = vrcp.pop %v1288
        %v1293 = vmul.f32 %v1274, %v1289
        %v1294 = vmul.f32 %v1276, %v1290
        %v1295 = vmul.f32 %v1278, %v1291
        %v1296 = vmul.f32 %v1280, %v1292
        %v1297 = vpack.c.bf16 %v1294, %v1293
        %v1298 = vpack.c.bf16 %v1296, %v1295
        %1299 = vrot.lane.b32.xlu0 %v885, 64
        %v1300 = vpop.permute.xlu0 %1299
        %1301 = vrot.lane.b32.xlu0 %v886, 64
        %v1302 = vpop.permute.xlu0 %1301
        %1303 = vrot.lane.b32.xlu0 %v887, 64
        %v1304 = vpop.permute.xlu0 %1303
        %1305 = vrot.lane.b32.xlu0 %v888, 64
        %v1306 = vpop.permute.xlu0 %1305
        %1307 = vrot.lane.b32.xlu0 %v889, 64
        %v1308 = vpop.permute.xlu0 %1307
        %1309 = vrot.lane.b32.xlu0 %v890, 64
        %v1310 = vpop.permute.xlu0 %1309
        %1311 = vrot.lane.b32.xlu0 %v891, 64
        %v1312 = vpop.permute.xlu0 %1311
        %1313 = vrot.lane.b32.xlu0 %v892, 64
        %v1314 = vpop.permute.xlu0 %1313
        %1323 = vmatprep.subr.bf16.mxu0 0
        %1324 = vmatpush1.bf16.msra.mxu0 %v1314
        %1325 = vmatprep.subr.bf16.mxu0 0
        %1326 = vmatpush1.bf16.msra.mxu0 %v1312
        %1327 = vmatprep.subr.bf16.mxu0 0
        %1328 = vmatpush1.bf16.msra.mxu0 %v1310
        %1329 = vmatprep.subr.bf16.mxu0 0
        %1330 = vmatpush1.bf16.msra.mxu0 %v1308
        %1331 = vmatprep.subr.bf16.mxu0 0
        %1332 = vmatpush1.bf16.msra.mxu0 %v1306
        %1333 = vmatprep.subr.bf16.mxu0 0
        %1334 = vmatpush1.bf16.msra.mxu0 %v1304
        %1335 = vmatprep.subr.bf16.mxu0 0
        %1336 = vmatpush1.bf16.msra.mxu0 %v1302
        %1337 = vmatprep.subr.bf16.mxu0 0
        %1338 = vmatpush1.bf16.msra.mxu0 %v1300
        %1339 = vmatprep.subr.bf16.mxu0 0
        %1340 = vmatpush2.bf16.msra.mxu0 0
        %1341 = vmatprep.subr.bf16.mxu0 0
        %1342 = vmatpush2.bf16.msra.mxu0 0
        %1343 = vmatprep.subr.bf16.mxu0 0
        %1344 = vmatpush2.bf16.msra.mxu0 0
        %1345 = vmatprep.subr.bf16.mxu0 0
        %1346 = vmatpush2.bf16.msra.mxu0 0
        %1347 = vmatprep.subr.bf16.mxu0 0
        %1348 = vmatpush2.bf16.msra.mxu0 0
        %1349 = vmatprep.subr.bf16.mxu0 0
        %1350 = vmatpush2.bf16.msra.mxu0 0
        %1351 = vmatprep.subr.bf16.mxu0 0
        %1352 = vmatpush2.bf16.msra.mxu0 0
        %1353 = vmatprep.subr.bf16.mxu0 0
        %1354 = vmatpush2.bf16.msra.mxu0 0
        %1355 = vmatprep.mubr.bf16.mxu0 0
        %1356 = vmatmul.mubr.bf16.gmra.mxu0 %v1297
        %v1357 = vpop.f32.mrf.mxu0
        %v1358 = vadd.f32 0.0, %v1357
        %v1359 = vpop.f32.mrf.mxu0
        %v1360 = vpop.f32.mrf.mxu0
        %v1361 = vadd.f32 0.0, %v1360
        %v1362 = vpop.f32.mrf.mxu0
        %1363 = vmatprep.mubr.bf16.mxu0 0
        %1364 = vmatmul.mubr.bf16.gmra.mxu0 %v1298
        %v1365 = vpop.f32.mrf.mxu0
        %v1366 = vadd.f32 0.0, %v1365
        %v1367 = vpop.f32.mrf.mxu0
        %v1368 = vpop.f32.mrf.mxu0
        %v1369 = vadd.f32 0.0, %v1368
        %v1370 = vpop.f32.mrf.mxu0
        %1371 = vdwg.mxu0
        %1372 = vrot.lane.b32.xlu0 %v656, 32
        %v1373 = vpop.permute.xlu0 %1372
        %1374 = vrot.lane.b32.xlu0 %v657, 32
        %v1375 = vpop.permute.xlu0 %1374
        %1376 = vrot.lane.b32.xlu0 %v727, 32
        %v1377 = vpop.permute.xlu0 %1376
        %1378 = vrot.lane.b32.xlu0 %v728, 32
        %v1379 = vpop.permute.xlu0 %1378
        %1380 = vrot.lane.b32.xlu0 %v729, 32
        %v1381 = vpop.permute.xlu0 %1380
        %1382 = vrot.lane.b32.xlu0 %v730, 32
        %v1383 = vpop.permute.xlu0 %1382
        %1384 = vrot.lane.b32.xlu0 %v731, 32
        %v1385 = vpop.permute.xlu0 %1384
        %1386 = vrot.lane.b32.xlu0 %v732, 32
        %v1387 = vpop.permute.xlu0 %1386
        %1388 = vrot.lane.b32.xlu0 %v733, 32
        %v1389 = vpop.permute.xlu0 %1388
        %1390 = vrot.lane.b32.xlu0 %v734, 32
        %v1391 = vpop.permute.xlu0 %1390
        %v1393 = vsel %vm735, %v1373, 0
        %v1396 = vsel %vm735, %v1375, 0
        %v1399 = vsel %vm735, %v1377, 0
        %v1402 = vsel %vm735, %v1379, 0
        %v1405 = vsel %vm735, %v1381, 0
        %v1408 = vsel %vm735, %v1383, 0
        %v1411 = vsel %vm735, %v1385, 0
        %v1414 = vsel %vm735, %v1387, 0
        %v1417 = vsel %vm735, %v1389, 0
        %v1420 = vsel %vm735, %v1391, 0
        %1422 = vmatprep.subr.bf16.mxu0 0
        %1423 = vmatpush1.bf16.xpose.msra.mxu0 %v1420
        %1424 = vmatprep.subr.bf16.mxu0 0
        %1425 = vmatpush1.bf16.xpose.msra.mxu0 %v1417
        %1426 = vmatprep.subr.bf16.mxu0 0
        %1427 = vmatpush1.bf16.xpose.msra.mxu0 %v1414
        %1428 = vmatprep.subr.bf16.mxu0 0
        %1429 = vmatpush1.bf16.xpose.msra.mxu0 %v1411
        %1430 = vmatprep.subr.bf16.mxu0 0
        %1431 = vmatpush1.bf16.xpose.msra.mxu0 %v1408
        %1432 = vmatprep.subr.bf16.mxu0 0
        %1433 = vmatpush1.bf16.xpose.msra.mxu0 %v1405
        %1434 = vmatprep.subr.bf16.mxu0 0
        %1435 = vmatpush1.bf16.xpose.msra.mxu0 %v1402
        %1436 = vmatprep.subr.bf16.mxu0 0
        %1437 = vmatpush1.bf16.xpose.msra.mxu0 %v1399
        %1438 = vmatprep.subr.bf16.mxu0 0
        %1439 = vmatpush2.bf16.xpose.msra.mxu0 0
        %1440 = vmatprep.subr.bf16.mxu0 0
        %1441 = vmatpush2.bf16.xpose.msra.mxu0 0
        %1442 = vmatprep.subr.bf16.mxu0 0
        %1443 = vmatpush2.bf16.xpose.msra.mxu0 0
        %1444 = vmatprep.subr.bf16.mxu0 0
        %1445 = vmatpush2.bf16.xpose.msra.mxu0 0
        %1446 = vmatprep.subr.bf16.mxu0 0
        %1447 = vmatpush2.bf16.xpose.msra.mxu0 0
        %1448 = vmatprep.subr.bf16.mxu0 0
        %1449 = vmatpush2.bf16.xpose.msra.mxu0 0
        %1450 = vmatprep.subr.bf16.mxu0 0
        %1451 = vmatpush2.bf16.xpose.msra.mxu0 0
        %1452 = vmatprep.subr.bf16.mxu0 0
        %1453 = vmatpush2.bf16.xpose.msra.mxu0 0
        %1454 = vmatprep.mubr.bf16.mxu0 0
        %1455 = vmatmul.mubr.bf16.gmra.mxu0 %v1393
        %v1456 = vpop.f32.mrf.mxu0
        %v1457 = vadd.f32 %v694, %v1456
        %v1458 = vpop.f32.mrf.mxu0
        %v1459 = vpop.f32.mrf.mxu0
        %v1460 = vadd.f32 %v694, %v1459
        %v1461 = vpop.f32.mrf.mxu0
        %1462 = vmatprep.mubr.bf16.mxu0 0
        %1463 = vmatmul.mubr.bf16.gmra.mxu0 %v1396
        %v1464 = vpop.f32.mrf.mxu0
        %v1465 = vadd.f32 %v694, %v1464
        %v1466 = vpop.f32.mrf.mxu0
        %v1467 = vpop.f32.mrf.mxu0
        %v1468 = vadd.f32 %v694, %v1467
        %v1469 = vpop.f32.mrf.mxu0
        %1470 = vdwg.mxu0
        %1471 = vmax.xlane.f32.xlu0 %v1457
        %v1472 = vpop.xlane.xlu0 %1471
        %1473 = vmax.xlane.f32.xlu0 %v1460
        %v1474 = vpop.xlane.xlu0 %1473
        %1475 = vmax.xlane.f32.xlu0 %v1465
        %v1476 = vpop.xlane.xlu0 %1475
        %1477 = vmax.xlane.f32.xlu0 %v1468
        %v1478 = vpop.xlane.xlu0 %1477
        %v1479 = vsub.f32 %v1457, %v1472
        %v1480 = vsub.f32 %v1460, %v1474
        %v1481 = vsub.f32 %v1465, %v1476
        %v1482 = vsub.f32 %v1468, %v1478
        %v1483 = vmul.f32 %v1479, 1.442695
        %v1484 = vpow.pop %v1483
        %v1485 = vmul.f32 %v1480, 1.442695
        %v1486 = vpow.pop %v1485
        %v1487 = vmul.f32 %v1481, 1.442695
        %v1488 = vpow.pop %v1487
        %v1489 = vmul.f32 %v1482, 1.442695
        %v1490 = vpow.pop %v1489
        %1491 = vadd.xlane.f32.xlu0 %v1484
        %v1492 = vpop.xlane.xlu0 %1491
        %1493 = vadd.xlane.f32.xlu0 %v1486
        %v1494 = vpop.xlane.xlu0 %1493
        %1495 = vadd.xlane.f32.xlu0 %v1488
        %v1496 = vpop.xlane.xlu0 %1495
        %1497 = vadd.xlane.f32.xlu0 %v1490
        %v1498 = vpop.xlane.xlu0 %1497
        %v1499 = vrcp.pop %v1492
        %v1500 = vrcp.pop %v1494
        %v1501 = vrcp.pop %v1496
        %v1502 = vrcp.pop %v1498
        %v1503 = vmul.f32 %v1484, %v1499
        %v1504 = vmul.f32 %v1486, %v1500
        %v1505 = vmul.f32 %v1488, %v1501
        %v1506 = vmul.f32 %v1490, %v1502
        %v1507 = vpack.c.bf16 %v1504, %v1503
        %v1508 = vpack.c.bf16 %v1506, %v1505
        %1509 = vrot.lane.b32.xlu0 %v885, 32
        %v1510 = vpop.permute.xlu0 %1509
        %1511 = vrot.lane.b32.xlu0 %v886, 32
        %v1512 = vpop.permute.xlu0 %1511
        %1513 = vrot.lane.b32.xlu0 %v887, 32
        %v1514 = vpop.permute.xlu0 %1513
        %1515 = vrot.lane.b32.xlu0 %v888, 32
        %v1516 = vpop.permute.xlu0 %1515
        %1517 = vrot.lane.b32.xlu0 %v889, 32
        %v1518 = vpop.permute.xlu0 %1517
        %1519 = vrot.lane.b32.xlu0 %v890, 32
        %v1520 = vpop.permute.xlu0 %1519
        %1521 = vrot.lane.b32.xlu0 %v891, 32
        %v1522 = vpop.permute.xlu0 %1521
        %1523 = vrot.lane.b32.xlu0 %v892, 32
        %v1524 = vpop.permute.xlu0 %1523
        %1533 = vmatprep.subr.bf16.mxu0 0
        %1534 = vmatpush1.bf16.msra.mxu0 %v1524
        %1535 = vmatprep.subr.bf16.mxu0 0
        %1536 = vmatpush1.bf16.msra.mxu0 %v1522
        %1537 = vmatprep.subr.bf16.mxu0 0
        %1538 = vmatpush1.bf16.msra.mxu0 %v1520
        %1539 = vmatprep.subr.bf16.mxu0 0
        %1540 = vmatpush1.bf16.msra.mxu0 %v1518
        %1541 = vmatprep.subr.bf16.mxu0 0
        %1542 = vmatpush1.bf16.msra.mxu0 %v1516
        %1543 = vmatprep.subr.bf16.mxu0 0
        %1544 = vmatpush1.bf16.msra.mxu0 %v1514
        %1545 = vmatprep.subr.bf16.mxu0 0
        %1546 = vmatpush1.bf16.msra.mxu0 %v1512
        %1547 = vmatprep.subr.bf16.mxu0 0
        %1548 = vmatpush1.bf16.msra.mxu0 %v1510
        %1549 = vmatprep.subr.bf16.mxu0 0
        %1550 = vmatpush2.bf16.msra.mxu0 0
        %1551 = vmatprep.subr.bf16.mxu0 0
        %1552 = vmatpush2.bf16.msra.mxu0 0
        %1553 = vmatprep.subr.bf16.mxu0 0
        %1554 = vmatpush2.bf16.msra.mxu0 0
        %1555 = vmatprep.subr.bf16.mxu0 0
        %1556 = vmatpush2.bf16.msra.mxu0 0
        %1557 = vmatprep.subr.bf16.mxu0 0
        %1558 = vmatpush2.bf16.msra.mxu0 0
        %1559 = vmatprep.subr.bf16.mxu0 0
        %1560 = vmatpush2.bf16.msra.mxu0 0
        %1561 = vmatprep.subr.bf16.mxu0 0
        %1562 = vmatpush2.bf16.msra.mxu0 0
        %1563 = vmatprep.subr.bf16.mxu0 0
        %1564 = vmatpush2.bf16.msra.mxu0 0
        %1565 = vmatprep.mubr.bf16.mxu0 0
        %1566 = vmatmul.mubr.bf16.gmra.mxu0 %v1507
        %v1567 = vpop.f32.mrf.mxu0
        %v1568 = vadd.f32 0.0, %v1567
        %v1569 = vpop.f32.mrf.mxu0
        %v1570 = vpop.f32.mrf.mxu0
        %v1571 = vadd.f32 0.0, %v1570
        %v1572 = vpop.f32.mrf.mxu0
        %1573 = vmatprep.mubr.bf16.mxu0 0
        %1574 = vmatmul.mubr.bf16.gmra.mxu0 %v1508
        %v1575 = vpop.f32.mrf.mxu0
        %v1576 = vadd.f32 0.0, %v1575
        %v1577 = vpop.f32.mrf.mxu0
        %v1578 = vpop.f32.mrf.mxu0
        %v1579 = vadd.f32 0.0, %v1578
        %v1580 = vpop.f32.mrf.mxu0
        %1581 = vdwg.mxu0
        %1586 = vrot.lane.b32.xlu0 %v1148, 32
        %v1587 = vpop.permute.xlu0 %1586
        %1588 = vrot.lane.b32.xlu0 %v1151, 32
        %v1589 = vpop.permute.xlu0 %1588
        %1590 = vrot.lane.b32.xlu0 %v1156, 32
        %v1591 = vpop.permute.xlu0 %1590
        %1592 = vrot.lane.b32.xlu0 %v1159, 32
        %v1593 = vpop.permute.xlu0 %1592
        %1602 = vrot.lane.b32.xlu0 %v1358, 64
        %v1603 = vpop.permute.xlu0 %1602
        %1604 = vrot.lane.b32.xlu0 %v1361, 64
        %v1605 = vpop.permute.xlu0 %1604
        %1606 = vrot.lane.b32.xlu0 %v1366, 64
        %v1607 = vpop.permute.xlu0 %1606
        %1608 = vrot.lane.b32.xlu0 %v1369, 64
        %v1609 = vpop.permute.xlu0 %1608
        %1618 = vrot.lane.b32.xlu0 %v1568, 96
        %v1619 = vpop.permute.xlu0 %1618
        %1620 = vrot.lane.b32.xlu0 %v1571, 96
        %v1621 = vpop.permute.xlu0 %1620
        %1622 = vrot.lane.b32.xlu0 %v1576, 96
        %v1623 = vpop.permute.xlu0 %1622
        %1624 = vrot.lane.b32.xlu0 %v1579, 96
        %v1625 = vpop.permute.xlu0 %1624
        %v1630 = vsel %vm735, %v936, %v1587
        %v1631 = vsel %vm735, %v939, %v1589
        %v1632 = vsel %vm735, %v944, %v1591
        %v1633 = vsel %vm735, %v947, %v1593
        %vm1634 = vcmask 523264
        %v1635 = vsel %vm1634, %v1630, %v1603
        %v1636 = vsel %vm1634, %v1631, %v1605
        %v1637 = vsel %vm1634, %v1632, %v1607
        %v1638 = vsel %vm1634, %v1633, %v1609
        %vm1639 = vcmask 785408
        %v1640 = vsel %vm1639, %v1635, %v1619
        %v1641 = vsel %vm1639, %v1636, %v1621
        %v1642 = vsel %vm1639, %v1637, %v1623
        %v1643 = vsel %vm1639, %v1638, %v1625
        %v1644 = vpack.c.bf16 %v1641, %v1640
        %v1645 = vpack.c.bf16 %v1643, %v1642
        %v1647 = vlaneseq
        %v1648 = vshrl.u32 %v1647, 7
        %v1649 = vsub.s32 0, %v1648
        %v1650 = vrot.slane %v488, %v1649
        %v1668 = vunpack.c.l.b16 %v472
        %v1669 = vunpack.c.l.b16 %v473
        %v1670 = vunpack.c.l.b16 %v474
        %v1671 = vunpack.c.l.b16 %v475
        %v1672 = vunpack.c.l.b16 %v476
        %v1673 = vunpack.c.l.b16 %v477
        %v1674 = vunpack.c.l.b16 %v478
        %v1675 = vunpack.c.l.b16 %v479
        %v1676 = vunpack.c.l.b16 %v480
        %v1677 = vunpack.c.l.b16 %v481
        %v1678 = vunpack.c.l.b16 %v482
        %v1679 = vunpack.c.l.b16 %v483
        %v1680 = vunpack.c.l.b16 %v484
        %v1681 = vunpack.c.l.b16 %v485
        %v1682 = vunpack.c.l.b16 %v486
        %v1683 = vunpack.c.l.b16 %v487
        %v1684 = vpack.c.b16 %v1669, %v1668
        %v1685 = vpack.c.b16 %v1671, %v1670
        %v1686 = vpack.c.b16 %v1673, %v1672
        %v1687 = vpack.c.b16 %v1675, %v1674
        %v1688 = vpack.c.b16 %v1677, %v1676
        %v1689 = vpack.c.b16 %v1679, %v1678
        %v1690 = vpack.c.b16 %v1681, %v1680
        %v1691 = vpack.c.b16 %v1683, %v1682
        %1700 = vmatprep.subr.bf16.mxu0 0
        %1701 = vmatpush1.bf16.msra.mxu0 %v1691
        %1702 = vmatprep.subr.bf16.mxu0 0
        %1703 = vmatpush1.bf16.msra.mxu0 %v1690
        %1704 = vmatprep.subr.bf16.mxu0 0
        %1705 = vmatpush1.bf16.msra.mxu0 %v1689
        %1706 = vmatprep.subr.bf16.mxu0 0
        %1707 = vmatpush1.bf16.msra.mxu0 %v1688
        %1708 = vmatprep.subr.bf16.mxu0 0
        %1709 = vmatpush1.bf16.msra.mxu0 %v1687
        %1710 = vmatprep.subr.bf16.mxu0 0
        %1711 = vmatpush1.bf16.msra.mxu0 %v1686
        %1712 = vmatprep.subr.bf16.mxu0 0
        %1713 = vmatpush1.bf16.msra.mxu0 %v1685
        %1714 = vmatprep.subr.bf16.mxu0 0
        %1715 = vmatpush1.bf16.msra.mxu0 %v1684
        %1716 = vmatprep.subr.bf16.mxu0 0
        %1717 = vmatpush2.bf16.msra.mxu0 0
        %1718 = vmatprep.subr.bf16.mxu0 0
        %1719 = vmatpush2.bf16.msra.mxu0 0
        %1720 = vmatprep.subr.bf16.mxu0 0
        %1721 = vmatpush2.bf16.msra.mxu0 0
        %1722 = vmatprep.subr.bf16.mxu0 0
        %1723 = vmatpush2.bf16.msra.mxu0 0
        %1724 = vmatprep.subr.bf16.mxu0 0
        %1725 = vmatpush2.bf16.msra.mxu0 0
        %1726 = vmatprep.subr.bf16.mxu0 0
        %1727 = vmatpush2.bf16.msra.mxu0 0
        %1728 = vmatprep.subr.bf16.mxu0 0
        %1729 = vmatpush2.bf16.msra.mxu0 0
        %1730 = vmatprep.subr.bf16.mxu0 0
        %1731 = vmatpush2.bf16.msra.mxu0 0
        %1732 = vmatprep.mubr.bf16.mxu0 0
        %1733 = vmatmul.mubr.bf16.gmra.mxu0 %v1644
        %v1734 = vpop.f32.mrf.mxu0
        %v1735 = vadd.f32 %v1650, %v1734
        %v1736 = vpop.f32.mrf.mxu0
        %v1737 = vpop.f32.mrf.mxu0
        %v1738 = vadd.f32 %v1650, %v1737
        %v1739 = vpop.f32.mrf.mxu0
        %1740 = vmatprep.mubr.bf16.mxu0 0
        %1741 = vmatmul.mubr.bf16.gmra.mxu0 %v1645
        %v1742 = vpop.f32.mrf.mxu0
        %v1743 = vadd.f32 %v1650, %v1742
        %v1744 = vpop.f32.mrf.mxu0
        %v1745 = vpop.f32.mrf.mxu0
        %v1746 = vadd.f32 %v1650, %v1745
        %v1747 = vpop.f32.mrf.mxu0
        %1748 = vdwg.mxu0
        %v1749 = vunpack.c.l.bf16 %v489
        %v1750 = vunpack.c.l.bf16 %v490
        %v1751 = vunpack.c.l.bf16 %v491
        %v1752 = vunpack.c.l.bf16 %v492
        %v1753 = vmul.f32 %v1749, %v1735
        %v1754 = vmul.f32 %v1750, %v1738
        %v1755 = vmul.f32 %v1751, %v1743
        %v1756 = vmul.f32 %v1752, %v1746
        %1757 = vst [vmem:[%s450] sm:$0xff] %v1753
        %1758 = vst [vmem:[%s450 + $0x10] sm:$0xff] %v1754
        %1759 = vst [vmem:[%s450 + $0x20] sm:$0xff] %v1755
        %1760 = vst [vmem:[%s450 + $0x30] sm:$0xff] %v1756
        %v1761 = vpack.c.bf16 %v645, %v642
        %v1762 = vpack.c.bf16 %v653, %v650
        %v1763 = vld [vmem:[#allocation7 + $0x4] sm:$0xf]
        %v1764 = vld [vmem:[#allocation7 + $0xc] sm:$0xf]
        %v1765 = vld [vmem:[#allocation7 + $0x14] sm:$0xf]
        %v1766 = vld [vmem:[#allocation7 + $0x1c] sm:$0xf]
        %v1767 = vld [vmem:[#allocation7 + $0x24] sm:$0xf]
        %v1768 = vld [vmem:[#allocation7 + $0x2c] sm:$0xf]
        %v1769 = vld [vmem:[#allocation7 + $0x34] sm:$0xf]
        %v1770 = vld [vmem:[#allocation7 + $0x3c] sm:$0xf]
        %v1771 = vld [vmem:[#allocation7 + $0x44] sm:$0xf]
        %v1772 = vld [vmem:[#allocation7 + $0x4c] sm:$0xf]
        %v1773 = vld [vmem:[#allocation7 + $0x54] sm:$0xf]
        %v1774 = vld [vmem:[#allocation7 + $0x5c] sm:$0xf]
        %v1775 = vld [vmem:[#allocation7 + $0x64] sm:$0xf]
        %v1776 = vld [vmem:[#allocation7 + $0x6c] sm:$0xf]
        %v1777 = vld [vmem:[#allocation7 + $0x74] sm:$0xf]
        %v1778 = vld [vmem:[#allocation7 + $0x7c] sm:$0xf]
        %v1779 = vld [vmem:[#allocation8 + $0x4] sm:$0xf]
        %v1780 = vld [vmem:[#allocation8 + $0xc] sm:$0xf]
        %v1781 = vld [vmem:[#allocation8 + $0x14] sm:$0xf]
        %v1782 = vld [vmem:[#allocation8 + $0x1c] sm:$0xf]
        %v1783 = vld [vmem:[#allocation8 + $0x24] sm:$0xf]
        %v1784 = vld [vmem:[#allocation8 + $0x2c] sm:$0xf]
        %v1785 = vld [vmem:[#allocation8 + $0x34] sm:$0xf]
        %v1786 = vld [vmem:[#allocation8 + $0x3c] sm:$0xf]
        %v1787 = vld [vmem:[#allocation8 + $0x44] sm:$0xf]
        %v1788 = vld [vmem:[#allocation8 + $0x4c] sm:$0xf]
        %v1789 = vld [vmem:[#allocation8 + $0x54] sm:$0xf]
        %v1790 = vld [vmem:[#allocation8 + $0x5c] sm:$0xf]
        %v1791 = vld [vmem:[#allocation8 + $0x64] sm:$0xf]
        %v1792 = vld [vmem:[#allocation8 + $0x6c] sm:$0xf]
        %v1793 = vld [vmem:[#allocation8 + $0x74] sm:$0xf]
        %v1794 = vld [vmem:[#allocation8 + $0x7c] sm:$0xf]
        %v1795 = vld [vmem:[%s4 + $0x1] sm:$0x1]
        %v1796 = vlaneseq
        %v1797 = vshrl.u32 %v1796, 7
        %v1798 = vsub.s32 0, %v1797
        %v1799 = vrot.slane %v1795, %v1798
        %v1816 = vunpack.c.l.b16 %v1763
        %v1817 = vunpack.c.l.b16 %v1764
        %v1818 = vunpack.c.l.b16 %v1765
        %v1819 = vunpack.c.l.b16 %v1766
        %v1820 = vunpack.c.l.b16 %v1767
        %v1821 = vunpack.c.l.b16 %v1768
        %v1822 = vunpack.c.l.b16 %v1769
        %v1823 = vunpack.c.l.b16 %v1770
        %v1824 = vunpack.c.l.b16 %v1771
        %v1825 = vunpack.c.l.b16 %v1772
        %v1826 = vunpack.c.l.b16 %v1773
        %v1827 = vunpack.c.l.b16 %v1774
        %v1828 = vunpack.c.l.b16 %v1775
        %v1829 = vunpack.c.l.b16 %v1776
        %v1830 = vunpack.c.l.b16 %v1777
        %v1831 = vunpack.c.l.b16 %v1778
        %v1832 = vpack.c.b16 %v1817, %v1816
        %v1833 = vpack.c.b16 %v1819, %v1818
        %v1834 = vpack.c.b16 %v1821, %v1820
        %v1835 = vpack.c.b16 %v1823, %v1822
        %v1836 = vpack.c.b16 %v1825, %v1824
        %v1837 = vpack.c.b16 %v1827, %v1826
        %v1838 = vpack.c.b16 %v1829, %v1828
        %v1839 = vpack.c.b16 %v1831, %v1830
        %v1841 = vsel %vm735, %v1761, 0
        %v1844 = vsel %vm735, %v1762, 0
        %v1847 = vsel %vm735, %v1832, 0
        %v1850 = vsel %vm735, %v1833, 0
        %v1853 = vsel %vm735, %v1834, 0
        %v1856 = vsel %vm735, %v1835, 0
        %v1859 = vsel %vm735, %v1836, 0
        %v1862 = vsel %vm735, %v1837, 0
        %v1865 = vsel %vm735, %v1838, 0
        %v1868 = vsel %vm735, %v1839, 0
        %1870 = vmatprep.subr.bf16.mxu0 0
        %1871 = vmatpush1.bf16.xpose.msra.mxu0 %v1868
        %1872 = vmatprep.subr.bf16.mxu0 0
        %1873 = vmatpush1.bf16.xpose.msra.mxu0 %v1865
        %1874 = vmatprep.subr.bf16.mxu0 0
        %1875 = vmatpush1.bf16.xpose.msra.mxu0 %v1862
        %1876 = vmatprep.subr.bf16.mxu0 0
        %1877 = vmatpush1.bf16.xpose.msra.mxu0 %v1859
        %1878 = vmatprep.subr.bf16.mxu0 0
        %1879 = vmatpush1.bf16.xpose.msra.mxu0 %v1856
        %1880 = vmatprep.subr.bf16.mxu0 0
        %1881 = vmatpush1.bf16.xpose.msra.mxu0 %v1853
        %1882 = vmatprep.subr.bf16.mxu0 0
        %1883 = vmatpush1.bf16.xpose.msra.mxu0 %v1850
        %1884 = vmatprep.subr.bf16.mxu0 0
        %1885 = vmatpush1.bf16.xpose.msra.mxu0 %v1847
        %1886 = vmatprep.subr.bf16.mxu0 0
        %1887 = vmatpush2.bf16.xpose.msra.mxu0 0
        %1888 = vmatprep.subr.bf16.mxu0 0
        %1889 = vmatpush2.bf16.xpose.msra.mxu0 0
        %1890 = vmatprep.subr.bf16.mxu0 0
        %1891 = vmatpush2.bf16.xpose.msra.mxu0 0
        %1892 = vmatprep.subr.bf16.mxu0 0
        %1893 = vmatpush2.bf16.xpose.msra.mxu0 0
        %1894 = vmatprep.subr.bf16.mxu0 0
        %1895 = vmatpush2.bf16.xpose.msra.mxu0 0
        %1896 = vmatprep.subr.bf16.mxu0 0
        %1897 = vmatpush2.bf16.xpose.msra.mxu0 0
        %1898 = vmatprep.subr.bf16.mxu0 0
        %1899 = vmatpush2.bf16.xpose.msra.mxu0 0
        %1900 = vmatprep.subr.bf16.mxu0 0
        %1901 = vmatpush2.bf16.xpose.msra.mxu0 0
        %1902 = vmatprep.mubr.bf16.mxu0 0
        %1903 = vmatmul.mubr.bf16.gmra.mxu0 %v1841
        %v1904 = vpop.f32.mrf.mxu0
        %v1905 = vadd.f32 %v1799, %v1904
        %v1906 = vpop.f32.mrf.mxu0
        %v1907 = vpop.f32.mrf.mxu0
        %v1908 = vadd.f32 %v1799, %v1907
        %v1909 = vpop.f32.mrf.mxu0
        %1910 = vmatprep.mubr.bf16.mxu0 0
        %1911 = vmatmul.mubr.bf16.gmra.mxu0 %v1844
        %v1912 = vpop.f32.mrf.mxu0
        %v1913 = vadd.f32 %v1799, %v1912
        %v1914 = vpop.f32.mrf.mxu0
        %v1915 = vpop.f32.mrf.mxu0
        %v1916 = vadd.f32 %v1799, %v1915
        %v1917 = vpop.f32.mrf.mxu0
        %1918 = vdwg.mxu0
        %1919 = vmax.xlane.f32.xlu0 %v1905
        %v1920 = vpop.xlane.xlu0 %1919
        %1921 = vmax.xlane.f32.xlu0 %v1908
        %v1922 = vpop.xlane.xlu0 %1921
        %1923 = vmax.xlane.f32.xlu0 %v1913
        %v1924 = vpop.xlane.xlu0 %1923
        %1925 = vmax.xlane.f32.xlu0 %v1916
        %v1926 = vpop.xlane.xlu0 %1925
        %v1927 = vsub.f32 %v1905, %v1920
        %v1928 = vsub.f32 %v1908, %v1922
        %v1929 = vsub.f32 %v1913, %v1924
        %v1930 = vsub.f32 %v1916, %v1926
        %v1931 = vmul.f32 %v1927, 1.442695
        %v1932 = vpow.pop %v1931
        %v1933 = vmul.f32 %v1928, 1.442695
        %v1934 = vpow.pop %v1933
        %v1935 = vmul.f32 %v1929, 1.442695
        %v1936 = vpow.pop %v1935
        %v1937 = vmul.f32 %v1930, 1.442695
        %v1938 = vpow.pop %v1937
        %1939 = vadd.xlane.f32.xlu0 %v1932
        %v1940 = vpop.xlane.xlu0 %1939
        %1941 = vadd.xlane.f32.xlu0 %v1934
        %v1942 = vpop.xlane.xlu0 %1941
        %1943 = vadd.xlane.f32.xlu0 %v1936
        %v1944 = vpop.xlane.xlu0 %1943
        %1945 = vadd.xlane.f32.xlu0 %v1938
        %v1946 = vpop.xlane.xlu0 %1945
        %v1947 = vrcp.pop %v1940
        %v1948 = vrcp.pop %v1942
        %v1949 = vrcp.pop %v1944
        %v1950 = vrcp.pop %v1946
        %v1951 = vmul.f32 %v1932, %v1947
        %v1952 = vmul.f32 %v1934, %v1948
        %v1953 = vmul.f32 %v1936, %v1949
        %v1954 = vmul.f32 %v1938, %v1950
        %v1955 = vpack.c.bf16 %v1952, %v1951
        %v1956 = vpack.c.bf16 %v1954, %v1953
        %v1973 = vunpack.c.l.b16 %v1779
        %v1974 = vunpack.c.l.b16 %v1780
        %v1975 = vunpack.c.l.b16 %v1781
        %v1976 = vunpack.c.l.b16 %v1782
        %v1977 = vunpack.c.l.b16 %v1783
        %v1978 = vunpack.c.l.b16 %v1784
        %v1979 = vunpack.c.l.b16 %v1785
        %v1980 = vunpack.c.l.b16 %v1786
        %v1981 = vunpack.c.l.b16 %v1787
        %v1982 = vunpack.c.l.b16 %v1788
        %v1983 = vunpack.c.l.b16 %v1789
        %v1984 = vunpack.c.l.b16 %v1790
        %v1985 = vunpack.c.l.b16 %v1791
        %v1986 = vunpack.c.l.b16 %v1792
        %v1987 = vunpack.c.l.b16 %v1793
        %v1988 = vunpack.c.l.b16 %v1794
        %v1989 = vpack.c.b16 %v1974, %v1973
        %v1990 = vpack.c.b16 %v1976, %v1975
        %v1991 = vpack.c.b16 %v1978, %v1977
        %v1992 = vpack.c.b16 %v1980, %v1979
        %v1993 = vpack.c.b16 %v1982, %v1981
        %v1994 = vpack.c.b16 %v1984, %v1983
        %v1995 = vpack.c.b16 %v1986, %v1985
        %v1996 = vpack.c.b16 %v1988, %v1987
        %2005 = vmatprep.subr.bf16.mxu0 0
        %2006 = vmatpush1.bf16.msra.mxu0 %v1996
        %2007 = vmatprep.subr.bf16.mxu0 0
        %2008 = vmatpush1.bf16.msra.mxu0 %v1995
        %2009 = vmatprep.subr.bf16.mxu0 0
        %2010 = vmatpush1.bf16.msra.mxu0 %v1994
        %2011 = vmatprep.subr.bf16.mxu0 0
        %2012 = vmatpush1.bf16.msra.mxu0 %v1993
        %2013 = vmatprep.subr.bf16.mxu0 0
        %2014 = vmatpush1.bf16.msra.mxu0 %v1992
        %2015 = vmatprep.subr.bf16.mxu0 0
        %2016 = vmatpush1.bf16.msra.mxu0 %v1991
        %2017 = vmatprep.subr.bf16.mxu0 0
        %2018 = vmatpush1.bf16.msra.mxu0 %v1990
        %2019 = vmatprep.subr.bf16.mxu0 0
        %2020 = vmatpush1.bf16.msra.mxu0 %v1989
        %2021 = vmatprep.subr.bf16.mxu0 0
        %2022 = vmatpush2.bf16.msra.mxu0 0
        %2023 = vmatprep.subr.bf16.mxu0 0
        %2024 = vmatpush2.bf16.msra.mxu0 0
        %2025 = vmatprep.subr.bf16.mxu0 0
        %2026 = vmatpush2.bf16.msra.mxu0 0
        %2027 = vmatprep.subr.bf16.mxu0 0
        %2028 = vmatpush2.bf16.msra.mxu0 0
        %2029 = vmatprep.subr.bf16.mxu0 0
        %2030 = vmatpush2.bf16.msra.mxu0 0
        %2031 = vmatprep.subr.bf16.mxu0 0
        %2032 = vmatpush2.bf16.msra.mxu0 0
        %2033 = vmatprep.subr.bf16.mxu0 0
        %2034 = vmatpush2.bf16.msra.mxu0 0
        %2035 = vmatprep.subr.bf16.mxu0 0
        %2036 = vmatpush2.bf16.msra.mxu0 0
        %2037 = vmatprep.mubr.bf16.mxu0 0
        %2038 = vmatmul.mubr.bf16.gmra.mxu0 %v1955
        %v2039 = vpop.f32.mrf.mxu0
        %v2040 = vadd.f32 0.0, %v2039
        %v2041 = vpop.f32.mrf.mxu0
        %v2042 = vpop.f32.mrf.mxu0
        %v2043 = vadd.f32 0.0, %v2042
        %v2044 = vpop.f32.mrf.mxu0
        %2045 = vmatprep.mubr.bf16.mxu0 0
        %2046 = vmatmul.mubr.bf16.gmra.mxu0 %v1956
        %v2047 = vpop.f32.mrf.mxu0
        %v2048 = vadd.f32 0.0, %v2047
        %v2049 = vpop.f32.mrf.mxu0
        %v2050 = vpop.f32.mrf.mxu0
        %v2051 = vadd.f32 0.0, %v2050
        %v2052 = vpop.f32.mrf.mxu0
        %2053 = vdwg.mxu0
        %2056 = vrot.lane.b32.xlu0 %v1761, 96
        %v2057 = vpop.permute.xlu0 %2056
        %2058 = vrot.lane.b32.xlu0 %v1762, 96
        %v2059 = vpop.permute.xlu0 %2058
        %2060 = vrot.lane.b32.xlu0 %v1832, 96
        %v2061 = vpop.permute.xlu0 %2060
        %2062 = vrot.lane.b32.xlu0 %v1833, 96
        %v2063 = vpop.permute.xlu0 %2062
        %2064 = vrot.lane.b32.xlu0 %v1834, 96
        %v2065 = vpop.permute.xlu0 %2064
        %2066 = vrot.lane.b32.xlu0 %v1835, 96
        %v2067 = vpop.permute.xlu0 %2066
        %2068 = vrot.lane.b32.xlu0 %v1836, 96
        %v2069 = vpop.permute.xlu0 %2068
        %2070 = vrot.lane.b32.xlu0 %v1837, 96
        %v2071 = vpop.permute.xlu0 %2070
        %2072 = vrot.lane.b32.xlu0 %v1838, 96
        %v2073 = vpop.permute.xlu0 %2072
        %2074 = vrot.lane.b32.xlu0 %v1839, 96
        %v2075 = vpop.permute.xlu0 %2074
        %v2077 = vsel %vm735, %v2057, 0
        %v2080 = vsel %vm735, %v2059, 0
        %v2083 = vsel %vm735, %v2061, 0
        %v2086 = vsel %vm735, %v2063, 0
        %v2089 = vsel %vm735, %v2065, 0
        %v2092 = vsel %vm735, %v2067, 0
        %v2095 = vsel %vm735, %v2069, 0
        %v2098 = vsel %vm735, %v2071, 0
        %v2101 = vsel %vm735, %v2073, 0
        %v2104 = vsel %vm735, %v2075, 0
        %2106 = vmatprep.subr.bf16.mxu0 0
        %2107 = vmatpush1.bf16.xpose.msra.mxu0 %v2104
        %2108 = vmatprep.subr.bf16.mxu0 0
        %2109 = vmatpush1.bf16.xpose.msra.mxu0 %v2101
        %2110 = vmatprep.subr.bf16.mxu0 0
        %2111 = vmatpush1.bf16.xpose.msra.mxu0 %v2098
        %2112 = vmatprep.subr.bf16.mxu0 0
        %2113 = vmatpush1.bf16.xpose.msra.mxu0 %v2095
        %2114 = vmatprep.subr.bf16.mxu0 0
        %2115 = vmatpush1.bf16.xpose.msra.mxu0 %v2092
        %2116 = vmatprep.subr.bf16.mxu0 0
        %2117 = vmatpush1.bf16.xpose.msra.mxu0 %v2089
        %2118 = vmatprep.subr.bf16.mxu0 0
        %2119 = vmatpush1.bf16.xpose.msra.mxu0 %v2086
        %2120 = vmatprep.subr.bf16.mxu0 0
        %2121 = vmatpush1.bf16.xpose.msra.mxu0 %v2083
        %2122 = vmatprep.subr.bf16.mxu0 0
        %2123 = vmatpush2.bf16.xpose.msra.mxu0 0
        %2124 = vmatprep.subr.bf16.mxu0 0
        %2125 = vmatpush2.bf16.xpose.msra.mxu0 0
        %2126 = vmatprep.subr.bf16.mxu0 0
        %2127 = vmatpush2.bf16.xpose.msra.mxu0 0
        %2128 = vmatprep.subr.bf16.mxu0 0
        %2129 = vmatpush2.bf16.xpose.msra.mxu0 0
        %2130 = vmatprep.subr.bf16.mxu0 0
        %2131 = vmatpush2.bf16.xpose.msra.mxu0 0
        %2132 = vmatprep.subr.bf16.mxu0 0
        %2133 = vmatpush2.bf16.xpose.msra.mxu0 0
        %2134 = vmatprep.subr.bf16.mxu0 0
        %2135 = vmatpush2.bf16.xpose.msra.mxu0 0
        %2136 = vmatprep.subr.bf16.mxu0 0
        %2137 = vmatpush2.bf16.xpose.msra.mxu0 0
        %2138 = vmatprep.mubr.bf16.mxu0 0
        %2139 = vmatmul.mubr.bf16.gmra.mxu0 %v2077
        %v2140 = vpop.f32.mrf.mxu0
        %v2141 = vadd.f32 %v1799, %v2140
        %v2142 = vpop.f32.mrf.mxu0
        %v2143 = vpop.f32.mrf.mxu0
        %v2144 = vadd.f32 %v1799, %v2143
        %v2145 = vpop.f32.mrf.mxu0
        %2146 = vmatprep.mubr.bf16.mxu0 0
        %2147 = vmatmul.mubr.bf16.gmra.mxu0 %v2080
        %v2148 = vpop.f32.mrf.mxu0
        %v2149 = vadd.f32 %v1799, %v2148
        %v2150 = vpop.f32.mrf.mxu0
        %v2151 = vpop.f32.mrf.mxu0
        %v2152 = vadd.f32 %v1799, %v2151
        %v2153 = vpop.f32.mrf.mxu0
        %2154 = vdwg.mxu0
        %2155 = vmax.xlane.f32.xlu0 %v2141
        %v2156 = vpop.xlane.xlu0 %2155
        %2157 = vmax.xlane.f32.xlu0 %v2144
        %v2158 = vpop.xlane.xlu0 %2157
        %2159 = vmax.xlane.f32.xlu0 %v2149
        %v2160 = vpop.xlane.xlu0 %2159
        %2161 = vmax.xlane.f32.xlu0 %v2152
        %v2162 = vpop.xlane.xlu0 %2161
        %v2163 = vsub.f32 %v2141, %v2156
        %v2164 = vsub.f32 %v2144, %v2158
        %v2165 = vsub.f32 %v2149, %v2160
        %v2166 = vsub.f32 %v2152, %v2162
        %v2167 = vmul.f32 %v2163, 1.442695
        %v2168 = vpow.pop %v2167
        %v2169 = vmul.f32 %v2164, 1.442695
        %v2170 = vpow.pop %v2169
        %v2171 = vmul.f32 %v2165, 1.442695
        %v2172 = vpow.pop %v2171
        %v2173 = vmul.f32 %v2166, 1.442695
        %v2174 = vpow.pop %v2173
        %2175 = vadd.xlane.f32.xlu0 %v2168
        %v2176 = vpop.xlane.xlu0 %2175
        %2177 = vadd.xlane.f32.xlu0 %v2170
        %v2178 = vpop.xlane.xlu0 %2177
        %2179 = vadd.xlane.f32.xlu0 %v2172
        %v2180 = vpop.xlane.xlu0 %2179
        %2181 = vadd.xlane.f32.xlu0 %v2174
        %v2182 = vpop.xlane.xlu0 %2181
        %v2183 = vrcp.pop %v2176
        %v2184 = vrcp.pop %v2178
        %v2185 = vrcp.pop %v2180
        %v2186 = vrcp.pop %v2182
        %v2187 = vmul.f32 %v2168, %v2183
        %v2188 = vmul.f32 %v2170, %v2184
        %v2189 = vmul.f32 %v2172, %v2185
        %v2190 = vmul.f32 %v2174, %v2186
        %v2191 = vpack.c.bf16 %v2188, %v2187
        %v2192 = vpack.c.bf16 %v2190, %v2189
        %2193 = vrot.lane.b32.xlu0 %v1989, 96
        %v2194 = vpop.permute.xlu0 %2193
        %2195 = vrot.lane.b32.xlu0 %v1990, 96
        %v2196 = vpop.permute.xlu0 %2195
        %2197 = vrot.lane.b32.xlu0 %v1991, 96
        %v2198 = vpop.permute.xlu0 %2197
        %2199 = vrot.lane.b32.xlu0 %v1992, 96
        %v2200 = vpop.permute.xlu0 %2199
        %2201 = vrot.lane.b32.xlu0 %v1993, 96
        %v2202 = vpop.permute.xlu0 %2201
        %2203 = vrot.lane.b32.xlu0 %v1994, 96
        %v2204 = vpop.permute.xlu0 %2203
        %2205 = vrot.lane.b32.xlu0 %v1995, 96
        %v2206 = vpop.permute.xlu0 %2205
        %2207 = vrot.lane.b32.xlu0 %v1996, 96
        %v2208 = vpop.permute.xlu0 %2207
        %2217 = vmatprep.subr.bf16.mxu0 0
        %2218 = vmatpush1.bf16.msra.mxu0 %v2208
        %2219 = vmatprep.subr.bf16.mxu0 0
        %2220 = vmatpush1.bf16.msra.mxu0 %v2206
        %2221 = vmatprep.subr.bf16.mxu0 0
        %2222 = vmatpush1.bf16.msra.mxu0 %v2204
        %2223 = vmatprep.subr.bf16.mxu0 0
        %2224 = vmatpush1.bf16.msra.mxu0 %v2202
        %2225 = vmatprep.subr.bf16.mxu0 0
        %2226 = vmatpush1.bf16.msra.mxu0 %v2200
        %2227 = vmatprep.subr.bf16.mxu0 0
        %2228 = vmatpush1.bf16.msra.mxu0 %v2198
        %2229 = vmatprep.subr.bf16.mxu0 0
        %2230 = vmatpush1.bf16.msra.mxu0 %v2196
        %2231 = vmatprep.subr.bf16.mxu0 0
        %2232 = vmatpush1.bf16.msra.mxu0 %v2194
        %2233 = vmatprep.subr.bf16.mxu0 0
        %2234 = vmatpush2.bf16.msra.mxu0 0
        %2235 = vmatprep.subr.bf16.mxu0 0
        %2236 = vmatpush2.bf16.msra.mxu0 0
        %2237 = vmatprep.subr.bf16.mxu0 0
        %2238 = vmatpush2.bf16.msra.mxu0 0
        %2239 = vmatprep.subr.bf16.mxu0 0
        %2240 = vmatpush2.bf16.msra.mxu0 0
        %2241 = vmatprep.subr.bf16.mxu0 0
        %2242 = vmatpush2.bf16.msra.mxu0 0
        %2243 = vmatprep.subr.bf16.mxu0 0
        %2244 = vmatpush2.bf16.msra.mxu0 0
        %2245 = vmatprep.subr.bf16.mxu0 0
        %2246 = vmatpush2.bf16.msra.mxu0 0
        %2247 = vmatprep.subr.bf16.mxu0 0
        %2248 = vmatpush2.bf16.msra.mxu0 0
        %2249 = vmatprep.mubr.bf16.mxu0 0
        %2250 = vmatmul.mubr.bf16.gmra.mxu0 %v2191
        %v2251 = vpop.f32.mrf.mxu0
        %v2252 = vadd.f32 0.0, %v2251
        %v2253 = vpop.f32.mrf.mxu0
        %v2254 = vpop.f32.mrf.mxu0
        %v2255 = vadd.f32 0.0, %v2254
        %v2256 = vpop.f32.mrf.mxu0
        %2257 = vmatprep.mubr.bf16.mxu0 0
        %2258 = vmatmul.mubr.bf16.gmra.mxu0 %v2192
        %v2259 = vpop.f32.mrf.mxu0
        %v2260 = vadd.f32 0.0, %v2259
        %v2261 = vpop.f32.mrf.mxu0
        %v2262 = vpop.f32.mrf.mxu0
        %v2263 = vadd.f32 0.0, %v2262
        %v2264 = vpop.f32.mrf.mxu0
        %2265 = vdwg.mxu0
        %2266 = vrot.lane.b32.xlu0 %v1761, 64
        %v2267 = vpop.permute.xlu0 %2266
        %2268 = vrot.lane.b32.xlu0 %v1762, 64
        %v2269 = vpop.permute.xlu0 %2268
        %2270 = vrot.lane.b32.xlu0 %v1832, 64
        %v2271 = vpop.permute.xlu0 %2270
        %2272 = vrot.lane.b32.xlu0 %v1833, 64
        %v2273 = vpop.permute.xlu0 %2272
        %2274 = vrot.lane.b32.xlu0 %v1834, 64
        %v2275 = vpop.permute.xlu0 %2274
        %2276 = vrot.lane.b32.xlu0 %v1835, 64
        %v2277 = vpop.permute.xlu0 %2276
        %2278 = vrot.lane.b32.xlu0 %v1836, 64
        %v2279 = vpop.permute.xlu0 %2278
        %2280 = vrot.lane.b32.xlu0 %v1837, 64
        %v2281 = vpop.permute.xlu0 %2280
        %2282 = vrot.lane.b32.xlu0 %v1838, 64
        %v2283 = vpop.permute.xlu0 %2282
        %2284 = vrot.lane.b32.xlu0 %v1839, 64
        %v2285 = vpop.permute.xlu0 %2284
        %v2287 = vsel %vm735, %v2267, 0
        %v2290 = vsel %vm735, %v2269, 0
        %v2293 = vsel %vm735, %v2271, 0
        %v2296 = vsel %vm735, %v2273, 0
        %v2299 = vsel %vm735, %v2275, 0
        %v2302 = vsel %vm735, %v2277, 0
        %v2305 = vsel %vm735, %v2279, 0
        %v2308 = vsel %vm735, %v2281, 0
        %v2311 = vsel %vm735, %v2283, 0
        %v2314 = vsel %vm735, %v2285, 0
        %2316 = vmatprep.subr.bf16.mxu0 0
        %2317 = vmatpush1.bf16.xpose.msra.mxu0 %v2314
        %2318 = vmatprep.subr.bf16.mxu0 0
        %2319 = vmatpush1.bf16.xpose.msra.mxu0 %v2311
        %2320 = vmatprep.subr.bf16.mxu0 0
        %2321 = vmatpush1.bf16.xpose.msra.mxu0 %v2308
        %2322 = vmatprep.subr.bf16.mxu0 0
        %2323 = vmatpush1.bf16.xpose.msra.mxu0 %v2305
        %2324 = vmatprep.subr.bf16.mxu0 0
        %2325 = vmatpush1.bf16.xpose.msra.mxu0 %v2302
        %2326 = vmatprep.subr.bf16.mxu0 0
        %2327 = vmatpush1.bf16.xpose.msra.mxu0 %v2299
        %2328 = vmatprep.subr.bf16.mxu0 0
        %2329 = vmatpush1.bf16.xpose.msra.mxu0 %v2296
        %2330 = vmatprep.subr.bf16.mxu0 0
        %2331 = vmatpush1.bf16.xpose.msra.mxu0 %v2293
        %2332 = vmatprep.subr.bf16.mxu0 0
        %2333 = vmatpush2.bf16.xpose.msra.mxu0 0
        %2334 = vmatprep.subr.bf16.mxu0 0
        %2335 = vmatpush2.bf16.xpose.msra.mxu0 0
        %2336 = vmatprep.subr.bf16.mxu0 0
        %2337 = vmatpush2.bf16.xpose.msra.mxu0 0
        %2338 = vmatprep.subr.bf16.mxu0 0
        %2339 = vmatpush2.bf16.xpose.msra.mxu0 0
        %2340 = vmatprep.subr.bf16.mxu0 0
        %2341 = vmatpush2.bf16.xpose.msra.mxu0 0
        %2342 = vmatprep.subr.bf16.mxu0 0
        %2343 = vmatpush2.bf16.xpose.msra.mxu0 0
        %2344 = vmatprep.subr.bf16.mxu0 0
        %2345 = vmatpush2.bf16.xpose.msra.mxu0 0
        %2346 = vmatprep.subr.bf16.mxu0 0
        %2347 = vmatpush2.bf16.xpose.msra.mxu0 0
        %2348 = vmatprep.mubr.bf16.mxu0 0
        %2349 = vmatmul.mubr.bf16.gmra.mxu0 %v2287
        %v2350 = vpop.f32.mrf.mxu0
        %v2351 = vadd.f32 %v1799, %v2350
        %v2352 = vpop.f32.mrf.mxu0
        %v2353 = vpop.f32.mrf.mxu0
        %v2354 = vadd.f32 %v1799, %v2353
        %v2355 = vpop.f32.mrf.mxu0
        %2356 = vmatprep.mubr.bf16.mxu0 0
        %2357 = vmatmul.mubr.bf16.gmra.mxu0 %v2290
        %v2358 = vpop.f32.mrf.mxu0
        %v2359 = vadd.f32 %v1799, %v2358
        %v2360 = vpop.f32.mrf.mxu0
        %v2361 = vpop.f32.mrf.mxu0
        %v2362 = vadd.f32 %v1799, %v2361
        %v2363 = vpop.f32.mrf.mxu0
        %2364 = vdwg.mxu0
        %2365 = vmax.xlane.f32.xlu0 %v2351
        %v2366 = vpop.xlane.xlu0 %2365
        %2367 = vmax.xlane.f32.xlu0 %v2354
        %v2368 = vpop.xlane.xlu0 %2367
        %2369 = vmax.xlane.f32.xlu0 %v2359
        %v2370 = vpop.xlane.xlu0 %2369
        %2371 = vmax.xlane.f32.xlu0 %v2362
        %v2372 = vpop.xlane.xlu0 %2371
        %v2373 = vsub.f32 %v2351, %v2366
        %v2374 = vsub.f32 %v2354, %v2368
        %v2375 = vsub.f32 %v2359, %v2370
        %v2376 = vsub.f32 %v2362, %v2372
        %v2377 = vmul.f32 %v2373, 1.442695
        %v2378 = vpow.pop %v2377
        %v2379 = vmul.f32 %v2374, 1.442695
        %v2380 = vpow.pop %v2379
        %v2381 = vmul.f32 %v2375, 1.442695
        %v2382 = vpow.pop %v2381
        %v2383 = vmul.f32 %v2376, 1.442695
        %v2384 = vpow.pop %v2383
        %2385 = vadd.xlane.f32.xlu0 %v2378
        %v2386 = vpop.xlane.xlu0 %2385
        %2387 = vadd.xlane.f32.xlu0 %v2380
        %v2388 = vpop.xlane.xlu0 %2387
        %2389 = vadd.xlane.f32.xlu0 %v2382
        %v2390 = vpop.xlane.xlu0 %2389
        %2391 = vadd.xlane.f32.xlu0 %v2384
        %v2392 = vpop.xlane.xlu0 %2391
        %v2393 = vrcp.pop %v2386
        %v2394 = vrcp.pop %v2388
        %v2395 = vrcp.pop %v2390
        %v2396 = vrcp.pop %v2392
        %v2397 = vmul.f32 %v2378, %v2393
        %v2398 = vmul.f32 %v2380, %v2394
        %v2399 = vmul.f32 %v2382, %v2395
        %v2400 = vmul.f32 %v2384, %v2396
        %v2401 = vpack.c.bf16 %v2398, %v2397
        %v2402 = vpack.c.bf16 %v2400, %v2399
        %2403 = vrot.lane.b32.xlu0 %v1989, 64
        %v2404 = vpop.permute.xlu0 %2403
        %2405 = vrot.lane.b32.xlu0 %v1990, 64
        %v2406 = vpop.permute.xlu0 %2405
        %2407 = vrot.lane.b32.xlu0 %v1991, 64
        %v2408 = vpop.permute.xlu0 %2407
        %2409 = vrot.lane.b32.xlu0 %v1992, 64
        %v2410 = vpop.permute.xlu0 %2409
        %2411 = vrot.lane.b32.xlu0 %v1993, 64
        %v2412 = vpop.permute.xlu0 %2411
        %2413 = vrot.lane.b32.xlu0 %v1994, 64
        %v2414 = vpop.permute.xlu0 %2413
        %2415 = vrot.lane.b32.xlu0 %v1995, 64
        %v2416 = vpop.permute.xlu0 %2415
        %2417 = vrot.lane.b32.xlu0 %v1996, 64
        %v2418 = vpop.permute.xlu0 %2417
        %2427 = vmatprep.subr.bf16.mxu0 0
        %2428 = vmatpush1.bf16.msra.mxu0 %v2418
        %2429 = vmatprep.subr.bf16.mxu0 0
        %2430 = vmatpush1.bf16.msra.mxu0 %v2416
        %2431 = vmatprep.subr.bf16.mxu0 0
        %2432 = vmatpush1.bf16.msra.mxu0 %v2414
        %2433 = vmatprep.subr.bf16.mxu0 0
        %2434 = vmatpush1.bf16.msra.mxu0 %v2412
        %2435 = vmatprep.subr.bf16.mxu0 0
        %2436 = vmatpush1.bf16.msra.mxu0 %v2410
        %2437 = vmatprep.subr.bf16.mxu0 0
        %2438 = vmatpush1.bf16.msra.mxu0 %v2408
        %2439 = vmatprep.subr.bf16.mxu0 0
        %2440 = vmatpush1.bf16.msra.mxu0 %v2406
        %2441 = vmatprep.subr.bf16.mxu0 0
        %2442 = vmatpush1.bf16.msra.mxu0 %v2404
        %2443 = vmatprep.subr.bf16.mxu0 0
        %2444 = vmatpush2.bf16.msra.mxu0 0
        %2445 = vmatprep.subr.bf16.mxu0 0
        %2446 = vmatpush2.bf16.msra.mxu0 0
        %2447 = vmatprep.subr.bf16.mxu0 0
        %2448 = vmatpush2.bf16.msra.mxu0 0
        %2449 = vmatprep.subr.bf16.mxu0 0
        %2450 = vmatpush2.bf16.msra.mxu0 0
        %2451 = vmatprep.subr.bf16.mxu0 0
        %2452 = vmatpush2.bf16.msra.mxu0 0
        %2453 = vmatprep.subr.bf16.mxu0 0
        %2454 = vmatpush2.bf16.msra.mxu0 0
        %2455 = vmatprep.subr.bf16.mxu0 0
        %2456 = vmatpush2.bf16.msra.mxu0 0
        %2457 = vmatprep.subr.bf16.mxu0 0
        %2458 = vmatpush2.bf16.msra.mxu0 0
        %2459 = vmatprep.mubr.bf16.mxu0 0
        %2460 = vmatmul.mubr.bf16.gmra.mxu0 %v2401
        %v2461 = vpop.f32.mrf.mxu0
        %v2462 = vadd.f32 0.0, %v2461
        %v2463 = vpop.f32.mrf.mxu0
        %v2464 = vpop.f32.mrf.mxu0
        %v2465 = vadd.f32 0.0, %v2464
        %v2466 = vpop.f32.mrf.mxu0
        %2467 = vmatprep.mubr.bf16.mxu0 0
        %2468 = vmatmul.mubr.bf16.gmra.mxu0 %v2402
        %v2469 = vpop.f32.mrf.mxu0
        %v2470 = vadd.f32 0.0, %v2469
        %v2471 = vpop.f32.mrf.mxu0
        %v2472 = vpop.f32.mrf.mxu0
        %v2473 = vadd.f32 0.0, %v2472
        %v2474 = vpop.f32.mrf.mxu0
        %2475 = vdwg.mxu0
        %2476 = vrot.lane.b32.xlu0 %v1761, 32
        %v2477 = vpop.permute.xlu0 %2476
        %2478 = vrot.lane.b32.xlu0 %v1762, 32
        %v2479 = vpop.permute.xlu0 %2478
        %2480 = vrot.lane.b32.xlu0 %v1832, 32
        %v2481 = vpop.permute.xlu0 %2480
        %2482 = vrot.lane.b32.xlu0 %v1833, 32
        %v2483 = vpop.permute.xlu0 %2482
        %2484 = vrot.lane.b32.xlu0 %v1834, 32
        %v2485 = vpop.permute.xlu0 %2484
        %2486 = vrot.lane.b32.xlu0 %v1835, 32
        %v2487 = vpop.permute.xlu0 %2486
        %2488 = vrot.lane.b32.xlu0 %v1836, 32
        %v2489 = vpop.permute.xlu0 %2488
        %2490 = vrot.lane.b32.xlu0 %v1837, 32
        %v2491 = vpop.permute.xlu0 %2490
        %2492 = vrot.lane.b32.xlu0 %v1838, 32
        %v2493 = vpop.permute.xlu0 %2492
        %2494 = vrot.lane.b32.xlu0 %v1839, 32
        %v2495 = vpop.permute.xlu0 %2494
        %v2497 = vsel %vm735, %v2477, 0
        %v2500 = vsel %vm735, %v2479, 0
        %v2503 = vsel %vm735, %v2481, 0
        %v2506 = vsel %vm735, %v2483, 0
        %v2509 = vsel %vm735, %v2485, 0
        %v2512 = vsel %vm735, %v2487, 0
        %v2515 = vsel %vm735, %v2489, 0
        %v2518 = vsel %vm735, %v2491, 0
        %v2521 = vsel %vm735, %v2493, 0
        %v2524 = vsel %vm735, %v2495, 0
        %2526 = vmatprep.subr.bf16.mxu0 0
        %2527 = vmatpush1.bf16.xpose.msra.mxu0 %v2524
        %2528 = vmatprep.subr.bf16.mxu0 0
        %2529 = vmatpush1.bf16.xpose.msra.mxu0 %v2521
        %2530 = vmatprep.subr.bf16.mxu0 0
        %2531 = vmatpush1.bf16.xpose.msra.mxu0 %v2518
        %2532 = vmatprep.subr.bf16.mxu0 0
        %2533 = vmatpush1.bf16.xpose.msra.mxu0 %v2515
        %2534 = vmatprep.subr.bf16.mxu0 0
        %2535 = vmatpush1.bf16.xpose.msra.mxu0 %v2512
        %2536 = vmatprep.subr.bf16.mxu0 0
        %2537 = vmatpush1.bf16.xpose.msra.mxu0 %v2509
        %2538 = vmatprep.subr.bf16.mxu0 0
        %2539 = vmatpush1.bf16.xpose.msra.mxu0 %v2506
        %2540 = vmatprep.subr.bf16.mxu0 0
        %2541 = vmatpush1.bf16.xpose.msra.mxu0 %v2503
        %2542 = vmatprep.subr.bf16.mxu0 0
        %2543 = vmatpush2.bf16.xpose.msra.mxu0 0
        %2544 = vmatprep.subr.bf16.mxu0 0
        %2545 = vmatpush2.bf16.xpose.msra.mxu0 0
        %2546 = vmatprep.subr.bf16.mxu0 0
        %2547 = vmatpush2.bf16.xpose.msra.mxu0 0
        %2548 = vmatprep.subr.bf16.mxu0 0
        %2549 = vmatpush2.bf16.xpose.msra.mxu0 0
        %2550 = vmatprep.subr.bf16.mxu0 0
        %2551 = vmatpush2.bf16.xpose.msra.mxu0 0
        %2552 = vmatprep.subr.bf16.mxu0 0
        %2553 = vmatpush2.bf16.xpose.msra.mxu0 0
        %2554 = vmatprep.subr.bf16.mxu0 0
        %2555 = vmatpush2.bf16.xpose.msra.mxu0 0
        %2556 = vmatprep.subr.bf16.mxu0 0
        %2557 = vmatpush2.bf16.xpose.msra.mxu0 0
        %2558 = vmatprep.mubr.bf16.mxu0 0
        %2559 = vmatmul.mubr.bf16.gmra.mxu0 %v2497
        %v2560 = vpop.f32.mrf.mxu0
        %v2561 = vadd.f32 %v1799, %v2560
        %v2562 = vpop.f32.mrf.mxu0
        %v2563 = vpop.f32.mrf.mxu0
        %v2564 = vadd.f32 %v1799, %v2563
        %v2565 = vpop.f32.mrf.mxu0
        %2566 = vmatprep.mubr.bf16.mxu0 0
        %2567 = vmatmul.mubr.bf16.gmra.mxu0 %v2500
        %v2568 = vpop.f32.mrf.mxu0
        %v2569 = vadd.f32 %v1799, %v2568
        %v2570 = vpop.f32.mrf.mxu0
        %v2571 = vpop.f32.mrf.mxu0
        %v2572 = vadd.f32 %v1799, %v2571
        %v2573 = vpop.f32.mrf.mxu0
        %2574 = vdwg.mxu0
        %2575 = vmax.xlane.f32.xlu0 %v2561
        %v2576 = vpop.xlane.xlu0 %2575
        %2577 = vmax.xlane.f32.xlu0 %v2564
        %v2578 = vpop.xlane.xlu0 %2577
        %2579 = vmax.xlane.f32.xlu0 %v2569
        %v2580 = vpop.xlane.xlu0 %2579
        %2581 = vmax.xlane.f32.xlu0 %v2572
        %v2582 = vpop.xlane.xlu0 %2581
        %v2583 = vsub.f32 %v2561, %v2576
        %v2584 = vsub.f32 %v2564, %v2578
        %v2585 = vsub.f32 %v2569, %v2580
        %v2586 = vsub.f32 %v2572, %v2582
        %v2587 = vmul.f32 %v2583, 1.442695
        %v2588 = vpow.pop %v2587
        %v2589 = vmul.f32 %v2584, 1.442695
        %v2590 = vpow.pop %v2589
        %v2591 = vmul.f32 %v2585, 1.442695
        %v2592 = vpow.pop %v2591
        %v2593 = vmul.f32 %v2586, 1.442695
        %v2594 = vpow.pop %v2593
        %2595 = vadd.xlane.f32.xlu0 %v2588
        %v2596 = vpop.xlane.xlu0 %2595
        %2597 = vadd.xlane.f32.xlu0 %v2590
        %v2598 = vpop.xlane.xlu0 %2597
        %2599 = vadd.xlane.f32.xlu0 %v2592
        %v2600 = vpop.xlane.xlu0 %2599
        %2601 = vadd.xlane.f32.xlu0 %v2594
        %v2602 = vpop.xlane.xlu0 %2601
        %v2603 = vrcp.pop %v2596
        %v2604 = vrcp.pop %v2598
        %v2605 = vrcp.pop %v2600
        %v2606 = vrcp.pop %v2602
        %v2607 = vmul.f32 %v2588, %v2603
        %v2608 = vmul.f32 %v2590, %v2604
        %v2609 = vmul.f32 %v2592, %v2605
        %v2610 = vmul.f32 %v2594, %v2606
        %v2611 = vpack.c.bf16 %v2608, %v2607
        %v2612 = vpack.c.bf16 %v2610, %v2609
        %2613 = vrot.lane.b32.xlu0 %v1989, 32
        %v2614 = vpop.permute.xlu0 %2613
        %2615 = vrot.lane.b32.xlu0 %v1990, 32
        %v2616 = vpop.permute.xlu0 %2615
        %2617 = vrot.lane.b32.xlu0 %v1991, 32
        %v2618 = vpop.permute.xlu0 %2617
        %2619 = vrot.lane.b32.xlu0 %v1992, 32
        %v2620 = vpop.permute.xlu0 %2619
        %2621 = vrot.lane.b32.xlu0 %v1993, 32
        %v2622 = vpop.permute.xlu0 %2621
        %2623 = vrot.lane.b32.xlu0 %v1994, 32
        %v2624 = vpop.permute.xlu0 %2623
        %2625 = vrot.lane.b32.xlu0 %v1995, 32
        %v2626 = vpop.permute.xlu0 %2625
        %2627 = vrot.lane.b32.xlu0 %v1996, 32
        %v2628 = vpop.permute.xlu0 %2627
        %2637 = vmatprep.subr.bf16.mxu0 0
        %2638 = vmatpush1.bf16.msra.mxu0 %v2628
        %2639 = vmatprep.subr.bf16.mxu0 0
        %2640 = vmatpush1.bf16.msra.mxu0 %v2626
        %2641 = vmatprep.subr.bf16.mxu0 0
        %2642 = vmatpush1.bf16.msra.mxu0 %v2624
        %2643 = vmatprep.subr.bf16.mxu0 0
        %2644 = vmatpush1.bf16.msra.mxu0 %v2622
        %2645 = vmatprep.subr.bf16.mxu0 0
        %2646 = vmatpush1.bf16.msra.mxu0 %v2620
        %2647 = vmatprep.subr.bf16.mxu0 0
        %2648 = vmatpush1.bf16.msra.mxu0 %v2618
        %2649 = vmatprep.subr.bf16.mxu0 0
        %2650 = vmatpush1.bf16.msra.mxu0 %v2616
        %2651 = vmatprep.subr.bf16.mxu0 0
        %2652 = vmatpush1.bf16.msra.mxu0 %v2614
        %2653 = vmatprep.subr.bf16.mxu0 0
        %2654 = vmatpush2.bf16.msra.mxu0 0
        %2655 = vmatprep.subr.bf16.mxu0 0
        %2656 = vmatpush2.bf16.msra.mxu0 0
        %2657 = vmatprep.subr.bf16.mxu0 0
        %2658 = vmatpush2.bf16.msra.mxu0 0
        %2659 = vmatprep.subr.bf16.mxu0 0
        %2660 = vmatpush2.bf16.msra.mxu0 0
        %2661 = vmatprep.subr.bf16.mxu0 0
        %2662 = vmatpush2.bf16.msra.mxu0 0
        %2663 = vmatprep.subr.bf16.mxu0 0
        %2664 = vmatpush2.bf16.msra.mxu0 0
        %2665 = vmatprep.subr.bf16.mxu0 0
        %2666 = vmatpush2.bf16.msra.mxu0 0
        %2667 = vmatprep.subr.bf16.mxu0 0
        %2668 = vmatpush2.bf16.msra.mxu0 0
        %2669 = vmatprep.mubr.bf16.mxu0 0
        %2670 = vmatmul.mubr.bf16.gmra.mxu0 %v2611
        %v2671 = vpop.f32.mrf.mxu0
        %v2672 = vadd.f32 0.0, %v2671
        %v2673 = vpop.f32.mrf.mxu0
        %v2674 = vpop.f32.mrf.mxu0
        %v2675 = vadd.f32 0.0, %v2674
        %v2676 = vpop.f32.mrf.mxu0
        %2677 = vmatprep.mubr.bf16.mxu0 0
        %2678 = vmatmul.mubr.bf16.gmra.mxu0 %v2612
        %v2679 = vpop.f32.mrf.mxu0
        %v2680 = vadd.f32 0.0, %v2679
        %v2681 = vpop.f32.mrf.mxu0
        %v2682 = vpop.f32.mrf.mxu0
        %v2683 = vadd.f32 0.0, %v2682
        %v2684 = vpop.f32.mrf.mxu0
        %2685 = vdwg.mxu0
        %2690 = vrot.lane.b32.xlu0 %v2252, 32
        %v2691 = vpop.permute.xlu0 %2690
        %2692 = vrot.lane.b32.xlu0 %v2255, 32
        %v2693 = vpop.permute.xlu0 %2692
        %2694 = vrot.lane.b32.xlu0 %v2260, 32
        %v2695 = vpop.permute.xlu0 %2694
        %2696 = vrot.lane.b32.xlu0 %v2263, 32
        %v2697 = vpop.permute.xlu0 %2696
        %2706 = vrot.lane.b32.xlu0 %v2462, 64
        %v2707 = vpop.permute.xlu0 %2706
        %2708 = vrot.lane.b32.xlu0 %v2465, 64
        %v2709 = vpop.permute.xlu0 %2708
        %2710 = vrot.lane.b32.xlu0 %v2470, 64
        %v2711 = vpop.permute.xlu0 %2710
        %2712 = vrot.lane.b32.xlu0 %v2473, 64
        %v2713 = vpop.permute.xlu0 %2712
        %2722 = vrot.lane.b32.xlu0 %v2672, 96
        %v2723 = vpop.permute.xlu0 %2722
        %2724 = vrot.lane.b32.xlu0 %v2675, 96
        %v2725 = vpop.permute.xlu0 %2724
        %2726 = vrot.lane.b32.xlu0 %v2680, 96
        %v2727 = vpop.permute.xlu0 %2726
        %2728 = vrot.lane.b32.xlu0 %v2683, 96
        %v2729 = vpop.permute.xlu0 %2728
        %v2734 = vsel %vm735, %v2040, %v2691
        %v2735 = vsel %vm735, %v2043, %v2693
        %v2736 = vsel %vm735, %v2048, %v2695
        %v2737 = vsel %vm735, %v2051, %v2697
        %v2738 = vsel %vm1634, %v2734, %v2707
        %v2739 = vsel %vm1634, %v2735, %v2709
        %v2740 = vsel %vm1634, %v2736, %v2711
        %v2741 = vsel %vm1634, %v2737, %v2713
        %v2742 = vsel %vm1639, %v2738, %v2723
        %v2743 = vsel %vm1639, %v2739, %v2725
        %v2744 = vsel %vm1639, %v2740, %v2727
        %v2745 = vsel %vm1639, %v2741, %v2729
        %v2746 = vpack.c.bf16 %v2743, %v2742
        %v2747 = vpack.c.bf16 %v2745, %v2744
        %2748 = vmatprep.subr.bf16.mxu0 0
        %2749 = vmatpush1.bf16.msra.mxu0 %v1691
        %2750 = vmatprep.subr.bf16.mxu0 0
        %2751 = vmatpush1.bf16.msra.mxu0 %v1690
        %2752 = vmatprep.subr.bf16.mxu0 0
        %2753 = vmatpush1.bf16.msra.mxu0 %v1689
        %2754 = vmatprep.subr.bf16.mxu0 0
        %2755 = vmatpush1.bf16.msra.mxu0 %v1688
        %2756 = vmatprep.subr.bf16.mxu0 0
        %2757 = vmatpush1.bf16.msra.mxu0 %v1687
        %2758 = vmatprep.subr.bf16.mxu0 0
        %2759 = vmatpush1.bf16.msra.mxu0 %v1686
        %2760 = vmatprep.subr.bf16.mxu0 0
        %2761 = vmatpush1.bf16.msra.mxu0 %v1685
        %2762 = vmatprep.subr.bf16.mxu0 0
        %2763 = vmatpush1.bf16.msra.mxu0 %v1684
        %2764 = vmatprep.subr.bf16.mxu0 0
        %2765 = vmatpush2.bf16.msra.mxu0 0
        %2766 = vmatprep.subr.bf16.mxu0 0
        %2767 = vmatpush2.bf16.msra.mxu0 0
        %2768 = vmatprep.subr.bf16.mxu0 0
        %2769 = vmatpush2.bf16.msra.mxu0 0
        %2770 = vmatprep.subr.bf16.mxu0 0
        %2771 = vmatpush2.bf16.msra.mxu0 0
        %2772 = vmatprep.subr.bf16.mxu0 0
        %2773 = vmatpush2.bf16.msra.mxu0 0
        %2774 = vmatprep.subr.bf16.mxu0 0
        %2775 = vmatpush2.bf16.msra.mxu0 0
        %2776 = vmatprep.subr.bf16.mxu0 0
        %2777 = vmatpush2.bf16.msra.mxu0 0
        %2778 = vmatprep.subr.bf16.mxu0 0
        %2779 = vmatpush2.bf16.msra.mxu0 0
        %2780 = vmatprep.mubr.bf16.mxu0 0
        %2781 = vmatmul.mubr.bf16.gmra.mxu0 %v2746
        %v2782 = vpop.f32.mrf.mxu0
        %v2783 = vadd.f32 %v1650, %v2782
        %v2784 = vpop.f32.mrf.mxu0
        %v2785 = vpop.f32.mrf.mxu0
        %v2786 = vadd.f32 %v1650, %v2785
        %v2787 = vpop.f32.mrf.mxu0
        %2788 = vmatprep.mubr.bf16.mxu0 0
        %2789 = vmatmul.mubr.bf16.gmra.mxu0 %v2747
        %v2790 = vpop.f32.mrf.mxu0
        %v2791 = vadd.f32 %v1650, %v2790
        %v2792 = vpop.f32.mrf.mxu0
        %v2793 = vpop.f32.mrf.mxu0
        %v2794 = vadd.f32 %v1650, %v2793
        %v2795 = vpop.f32.mrf.mxu0
        %2796 = vdwg.mxu0
        %v2797 = vunpack.c.l.bf16 %v501
        %v2798 = vunpack.c.l.bf16 %v502
        %v2799 = vunpack.c.l.bf16 %v503
        %v2800 = vunpack.c.l.bf16 %v504
        %v2801 = vmul.f32 %v2797, %v2783
        %v2802 = vmul.f32 %v2798, %v2786
        %v2803 = vmul.f32 %v2799, %v2791
        %v2804 = vmul.f32 %v2800, %v2794
        %2805 = vst [vmem:[%s450 + $0x8] sm:$0xff] %v2801
        %2806 = vst [vmem:[%s450 + $0x18] sm:$0xff] %v2802
        %2807 = vst [vmem:[%s450 + $0x28] sm:$0xff] %v2803
        %2808 = vst [vmem:[%s450 + $0x38] sm:$0xff] %v2804
        %s2809 = sand.u32 %s238, 1
        %s2810 = scalar_lea.sflag [#allocation4], %s2809
        %s2811 = sand.u32 %s238, 1
        %s2812 = smul.addr %s2811, 64
        %s2813 = scalar_lea.vmem [#allocation13], %s2812
        // Predicated region
        $region81: #{tpu_custom_call.1} parent=55 // pred_check
          %p2814 = pneg %p248
        $region82: #{tpu_custom_call.1} parent=55 // pred_check_branch
          %2816 = sbr.rel (%p2814) target = $region84
        $region83: #{tpu_custom_call.1} parent=55 // pred_region
          %s2817 = smul.u32 4, %s31
          %s2819 = ssub.s32 1024, 1024
          %2820 = vsyncadd %s2810, %s2819
          %s2821 = smul.addr %s2817, 2
          %s2822 = smul.addr %s2821, 128
          %s2823 = scalar_lea.hbm %s9, %s2822
          %s2824 = sshll.u32 %s2813, 4
          %s2825 = int_to_ptr.vmem [resolvable:$true] %s2824
          %2830 = dma.vmem_to_hbm [thread:$0]  %s2825, 1024, %s2823, %s2810, 256, 256, 16
        $region84: #{tpu_custom_call.1} parent=55 // pred_fallthru
          _
      $region56: #{tpu_custom_call.1} parent=5 // pred_fallthru
        _
      %p2831 = scmp.le.s32.totalorder 2, %s26
      // Predicated region
      $region85: #{tpu_custom_call.1} parent=5 // pred_check
        %p2832 = pneg %p2831
      $region86: #{tpu_custom_call.1} parent=5 // pred_check_branch
        %2834 = sbr.rel (%p2832) target = $region88
      $region87: #{tpu_custom_call.1} parent=5 // pred_region
        %s2835 = ssub.s32 %s26, 2
        // Predicated region
        $region89: #{tpu_custom_call.1} parent=87 // pred_check
          %p2836 = pneg %p254
        $region90: #{tpu_custom_call.1} parent=87 // pred_check_branch
          %2838 = sbr.rel (%p2836) target = $region92
        $region91: #{tpu_custom_call.1} parent=87 // pred_region
          %s2839 = sand.u32 %s239, 1
          %s2840 = scalar_lea.sflag [#allocation4], %s2839
          %s2841 = sand.u32 %s239, 1
          %s2842 = smul.addr %s2841, 64
          %s2843 = scalar_lea.vmem [#allocation13], %s2842
          %2844 = dma.done %s2840, 1024
        $region92: #{tpu_custom_call.1} parent=87 // pred_fallthru
          _
      $region88: #{tpu_custom_call.1} parent=5 // pred_fallthru
        _
    $region6: #{tpu_custom_call.1} parent=1 // loop_footer
      %s30 = sadd.s32 1, %s26
    $region7: #{tpu_custom_call.1} parent=1 // loop_footer_branch
      %25 = sbr.rel target = $region3
    $region8: #{tpu_custom_call.1} parent=1 // loop_exit
      _
    %2845 = vsyncpa [#allocation3], 1
    %s2846 = scalar_lea.sflag [#allocation3], 1
    %2847 = vsyncpa %s2846, 1
    %2848 = vsyncpa [#allocation6], 1
    %s2849 = scalar_lea.sflag [#allocation6], 1
    %2850 = vsyncpa %s2849, 1
    %2851 = vsyncpa [#allocation9], 1
    %2852 = vsyncpa [#allocation12], 1
    %2853 = vsyncpa [#allocation4], 1
    %s2854 = scalar_lea.sflag [#allocation4], 1
    %2855 = vsyncpa %s2854, 1

</llo_original>
